<compile_context>
chip_gen: v5e
topology: v5e:2x2
jax: 0.10.0
libtpu: 0.0.40
codegen_flags: <defaults>
</compile_context>

<pallas_src>
import functools

import jax
import jax.numpy as jnp
from jax import lax
from jax.experimental import pallas as pl
from jax.experimental.pallas import tpu as pltpu

LANES = 128   # channel axis is zero-padded to the TPU lane width
SUB = 8       # sublane tile; interior of the padded scratch starts here
EPS = 1e-5


def _roundup(a, b):
    return (a + b - 1) // b * b


# ----------------------------------------------------------------------------
# In-kernel helpers
# ----------------------------------------------------------------------------
def _accum_conv3x3(tap_fn, w_ref, M):
    """3x3 conv as 9 accumulating (M,128)x(128,128) MXU matmuls (no im2col)."""
    acc = None
    for t in range(9):
        dy, dx = divmod(t, 3)
        tap = tap_fn(dy, dx).reshape(M, LANES)
        part = jnp.dot(tap, w_ref[t * LANES:(t + 1) * LANES, :],
                       preferred_element_type=jnp.float32)
        acc = part if acc is None else acc + part
    return acc


def _store_conv_and_stats(acc, y_ref, st_ref, Ho, Wo):
    """Store the raw conv output and its per-tile (sum, sum-of-squares)."""
    M = Ho * Wo
    ones = jnp.ones((1, M), jnp.float32)
    # Cross-sublane reductions on the MXU; VALU/XLU stay free for the rest.
    st_ref[0, 0:1, :] = jnp.dot(ones, acc, preferred_element_type=jnp.float32)
    st_ref[0, 1:2, :] = jnp.dot(ones, acc * acc,
                                preferred_element_type=jnp.float32)
    y_ref[0] = acc.reshape(Ho, Wo, LANES)


def _build_halo(pad_ref, interior, H, W):
    """Write interior (H,W,128) once; zero ONLY the halo rows/cols that get read."""
    Wp = pad_ref.shape[1]
    zrow = jnp.zeros((1, Wp, LANES), jnp.float32)
    zcol = jnp.zeros((H, 1, LANES), jnp.float32)
    pad_ref[0:1, :, :] = zrow                          # top halo row
    pad_ref[H + 1:H + 2, :, :] = zrow                  # bottom halo row
    pad_ref[1:H + 1, SUB - 1:SUB, :] = zcol            # left halo column
    pad_ref[1:H + 1, SUB + W:SUB + W + 1, :] = zcol    # right halo column
    pad_ref[1:H + 1, SUB:SUB + W, :] = interior        # interior, written once


# ----------------------------------------------------------------------------
# Kernels (each grid step handles ONE image; grid axis is "parallel")
# ----------------------------------------------------------------------------
def _conv1_s1_kernel(x_ref, w_ref, y_ref, st_ref, xpad):
    # x_ref: (1,H,W,128) image block; w_ref: (9*128,128) resident weights.
    _, H, W, _ = x_ref.shape
    _build_halo(xpad, x_ref[0], H, W)
    tap = lambda dy, dx: xpad[dy:dy + H, SUB - 1 + dx:SUB - 1 + dx + W, :]
    acc = _accum_conv3x3(tap, w_ref, H * W)
    _store_conv_and_stats(acc, y_ref, st_ref, H, W)


def _conv1_phases_kernel(xph_ref, w_ref, y_ref, st_ref, *, s, Ho, Wo):
    # xph_ref: (1, s*s, Ho+1, Wp, 128) polyphase split of the zero-padded input.
    # Every tap (dy,dx) is a contiguous slice of phase (dy%s, dx%s).
    def tap(dy, dx):
        ph = (dy % s) * s + (dx % s)
        return xph_ref[0, ph, dy // s:dy // s + Ho, dx // s:dx // s + Wo, :]
    acc = _accum_conv3x3(tap, w_ref, Ho * Wo)
    _store_conv_and_stats(acc, y_ref, st_ref, Ho, Wo)


def _conv2_kernel(y1_ref, w_ref, sc_ref, sh_ref, y2_ref, st_ref, ypad):
    # BN1 (per-channel scale/shift precomputed in the wrapper) + ReLU fused with
    # the halo build, then conv2 (stride 1) + BN2 partial statistics.
    _, Ho, Wo, _ = y1_ref.shape
    scale = sc_ref[...].reshape(1, 1, LANES)
    shift = sh_ref[...].reshape(1, 1, LANES)
    y1n = jnp.maximum(y1_ref[0] * scale + shift, 0.0)
    _build_halo(ypad, y1n, Ho, Wo)
    tap = lambda dy, dx: ypad[dy:dy + Ho, SUB - 1 + dx:SUB - 1 + dx + Wo, :]
    acc = _accum_conv3x3(tap, w_ref, Ho * Wo)
    _store_conv_and_stats(acc, y2_ref, st_ref, Ho, Wo)


def _finish_kernel(*refs, use_1x1conv):
    # BN2 normalize + shortcut (identity or 1x1 projection) + add + ReLU.
    if use_1x1conv:
        y2_ref, xs_ref, w3_ref, b3_ref, sc_ref, sh_ref, o_ref = refs
    else:
        y2_ref, xs_ref, sc_ref, sh_ref, o_ref = refs
    _, Ho, Wo, _ = y2_ref.shape
    M = Ho * Wo
    y2 = y2_ref[0].reshape(M, LANES) * sc_ref[...] + sh_ref[...]
    xs = xs_ref[0].reshape(M, LANES)
    if use_1x1conv:
        res = jnp.dot(xs, w3_ref[...],
                      preferred_element_type=jnp.float32) + b3_ref[...]
    else:
        res = xs
    o_ref[0] = jnp.maximum(y2 + res, 0.0).reshape(Ho, Wo, LANES)


# ----------------------------------------------------------------------------
# Wrapper
# ----------------------------------------------------------------------------
def _pad_to(a, shape):
    z = jnp.zeros(shape, jnp.float32)
    return z.at[tuple(slice(0, d) for d in a.shape)].set(a.astype(jnp.float32))


def prepare_residual_params(params, use_1x1conv=False):
    """Lane-pad & reshape parameters ONCE (outside the per-call jit path).

    conv biases b1/b2 are intentionally dropped: conv -> BN subtracts the batch
    mean, so they cancel exactly (numerically identical to PyTorch).
    """
    CP = LANES
    prepped = {
        "w1f": _pad_to(params["w1"], (3, 3, CP, CP)).reshape(9 * CP, CP),
        "w2f": _pad_to(params["w2"], (3, 3, CP, CP)).reshape(9 * CP, CP),
        "g1": _pad_to(params["bn1_g"], (1, CP)),
        "be1": _pad_to(params["bn1_b"], (1, CP)),
        "g2": _pad_to(params["bn2_g"], (1, CP)),
        "be2": _pad_to(params["bn2_b"], (1, CP)),
    }
    if use_1x1conv:
        prepped["w3"] = _pad_to(params["w3"], (CP, CP))
        prepped["b3"] = _pad_to(params["b3"], (1, CP))
    return prepped


def _bn_scale_shift(st, gamma, beta, count):
    """Combine per-tile (sum, sumsq) partials -> per-channel scale/shift."""
    tot = jnp.sum(st, axis=0)                     # (2, 128) -- tiny XLA op
    mean = tot[0:1] / count
    # NOTE: one-pass E[y^2]-mean^2 variance; fine at these activation scales.
    var = tot[1:2] / count - mean * mean          # biased batch variance
    scale = gamma * lax.rsqrt(var + EPS)
    return scale, beta - mean * scale


@functools.partial(jax.jit, static_argnames=("cout", "use_1x1conv", "strides"))
def residual_forward(x_nchw, prepped, *, cout, use_1x1conv=False, strides=1):
    N, Cin, H, W = x_nchw.shape
    CP = LANES
    s = int(strides)
    assert Cin <= CP and cout <= CP, "single lane-slab kernel needs C <= 128"
    if not use_1x1conv:
        assert Cin == cout and s == 1, "identity shortcut needs matching shapes"
    Ho = (H - 1) // s + 1
    Wo = (W - 1) // s + 1
    count = float(N * Ho * Wo)

    # NCHW -> NHWC, channels zero-padded to the 128-lane axis.
    # TODO(synk): in a channels-last pipeline keep activations NHWC/lane-padded
    #             end-to-end and drop these boundary transposes/pads.
    x = jnp.transpose(x_nchw, (0, 2, 3, 1)).astype(jnp.float32)
    x = jnp.pad(x, ((0, 0), (0, 0), (0, 0), (0, CP - Cin)))

    par = pltpu.CompilerParams(dimension_semantics=("parallel",))
    conv_out_shape = (jax.ShapeDtypeStruct((N, Ho, Wo, CP), jnp.float32),
                      jax.ShapeDtypeStruct((N, 2, CP), jnp.float32))
    y_spec = pl.BlockSpec((1, Ho, Wo, CP), lambda n: (n, 0, 0, 0))
    st_spec = pl.BlockSpec((1, 2, CP), lambda n: (n, 0, 0))
    w9_spec = pl.BlockSpec((9 * CP, CP), lambda n: (0, 0))     # resident
    vec_spec = pl.BlockSpec((1, CP), lambda n: (0, 0))         # resident

    # ---- pass 1: conv1 (raw) + per-image BN1 partial statistics ------------
    if s == 1:
        Wp = _roundup(SUB + W + 1, SUB)
        y1, st1 = pl.pallas_call(
            _conv1_s1_kernel,
            grid=(N,),
            in_specs=[pl.BlockSpec((1, H, W, CP), lambda n: (n, 0, 0, 0)),
                      w9_spec],
            out_specs=(y_spec, st_spec),
            out_shape=conv_out_shape,
            scratch_shapes=[pltpu.VMEM((H + 2, Wp, CP), jnp.float32)],
            compiler_params=par,
        )(x, prepped["w1f"])
    else:
        # Polyphase split so all in-kernel taps are contiguous slices.
        Wpph = _roundup(Wo + 1, SUB)
        xp = jnp.pad(x, ((0, 0), (1, s * (Ho + 1) - H - 1),
                         (1, s * Wpph - W - 1), (0, 0)))
        phases = jnp.stack([xp[:, p::s, q::s, :]
                            for p in range(s) for q in range(s)], axis=1)
        y1, st1 = pl.pallas_call(
            functools.partial(_conv1_phases_kernel, s=s, Ho=Ho, Wo=Wo),
            grid=(N,),
            in_specs=[pl.BlockSpec((1, s * s, Ho + 1, Wpph, CP),
                                   lambda n: (n, 0, 0, 0, 0)),
                      w9_spec],
            out_specs=(y_spec, st_spec),
            out_shape=conv_out_shape,
            compiler_params=par,
        )(phases, prepped["w1f"])

    sc1, sh1 = _bn_scale_shift(st1, prepped["g1"], prepped["be1"], count)

    # ---- pass 2: BN1 + ReLU + conv2 (raw) + per-image BN2 statistics --------
    Wp2 = _roundup(SUB + Wo + 1, SUB)
    y2, st2 = pl.pallas_call(
        _conv2_kernel,
        grid=(N,),
        in_specs=[y_spec, w9_spec, vec_spec, vec_spec],
        out_specs=(y_spec, st_spec),
        out_shape=conv_out_shape,
        scratch_shapes=[pltpu.VMEM((Ho + 2, Wp2, CP), jnp.float32)],
        compiler_params=par,
    )(y1, prepped["w2f"], sc1, sh1)

    sc2, sh2 = _bn_scale_shift(st2, prepped["g2"], prepped["be2"], count)

    # ---- pass 3: BN2 + shortcut + add + ReLU --------------------------------
    x_sc = x if s == 1 else x[:, ::s, ::s, :]
    if use_1x1conv:
        ins = (y2, x_sc, prepped["w3"], prepped["b3"], sc2, sh2)
        in_specs = [y_spec, y_spec,
                    pl.BlockSpec((CP, CP), lambda n: (0, 0)),
                    vec_spec, vec_spec, vec_spec]
    else:
        ins = (y2, x_sc, sc2, sh2)
        in_specs = [y_spec, y_spec, vec_spec, vec_spec]
    out = pl.pallas_call(
        functools.partial(_finish_kernel, use_1x1conv=use_1x1conv),
        grid=(N,),
        in_specs=in_specs,
        out_specs=y_spec,
        out_shape=jax.ShapeDtypeStruct((N, Ho, Wo, CP), jnp.float32),
        compiler_params=par,
    )(*ins)

    out = out[:, :, :, :cout]                    # crop lane padding first
    return jnp.transpose(out, (0, 3, 1, 2))      # NHWC -> NCHW (spec parity)


# ----------------------------------------------------------------------------
# Pure-JAX reference (PyTorch semantics, incl. conv biases)
# ----------------------------------------------------------------------------
def _ref_conv(x_nhwc, w_hwio, b, stride, pad):
    y = lax.conv_general_dilated(
        x_nhwc, w_hwio, window_strides=(stride, stride),
        padding=[(pad, pad), (pad, pad)],
        dimension_numbers=("NHWC", "HWIO", "NHWC"))
    return y + b.reshape(1, 1, 1, -1)


def _ref_bn(y, g, b):
    mean = jnp.mean(y, axis=(0, 1, 2), keepdims=True)
    var = jnp.mean((y - mean) ** 2, axis=(0, 1, 2), keepdims=True)
    return (y - mean) * lax.rsqrt(var + EPS) * g.reshape(1, 1, 1, -1) \
        + b.reshape(1, 1, 1, -1)


def residual_reference(x_nchw, params, use_1x1conv=False, strides=1):
    x = jnp.transpose(x_nchw, (0, 2, 3, 1)).astype(jnp.float32)
    y = jnp.maximum(_ref_bn(_ref_conv(x, params["w1"], params["b1"], strides, 1),
                            params["bn1_g"], params["bn1_b"]), 0.0)
    y = _ref_bn(_ref_conv(y, params["w2"], params["b2"], 1, 1),
                params["bn2_g"], params["bn2_b"])
    res = x
    if use_1x1conv:
        cin, cout = params["w3"].shape
        res = _ref_conv(x, params["w3"].reshape(1, 1, cin, cout),
                        params["b3"], strides, 0)
    out = jnp.maximum(y + res, 0.0)
    return jnp.transpose(out, (0, 3, 1, 2))


# ----------------------------------------------------------------------------
# Main
# ----------------------------------------------------------------------------
if __name__ == "__main__":
    key = jax.random.PRNGKey(0)

    def make_params(k, cin, cout):
        ks = jax.random.split(k, 10)
        return {
            "w1": 0.1 * jax.random.normal(ks[0], (3, 3, cin, cout), jnp.float32),
            "b1": 0.1 * jax.random.normal(ks[1], (1, cout), jnp.float32),
            "w2": 0.1 * jax.random.normal(ks[2], (3, 3, cout, cout), jnp.float32),
            "b2": 0.1 * jax.random.normal(ks[3], (1, cout), jnp.float32),
            "w3": 0.1 * jax.random.normal(ks[4], (cin, cout), jnp.float32),
            "b3": 0.1 * jax.random.normal(ks[5], (1, cout), jnp.float32),
            "bn1_g": 1.0 + 0.1 * jax.random.normal(ks[6], (1, cout), jnp.float32),
            "bn1_b": 0.1 * jax.random.normal(ks[7], (1, cout), jnp.float32),
            "bn2_g": 1.0 + 0.1 * jax.random.normal(ks[8], (1, cout), jnp.float32),
            "bn2_b": 0.1 * jax.random.normal(ks[9], (1, cout), jnp.float32),
        }

    N, H, W = 2, 16, 16
    k1, k2, kx1, kx2 = jax.random.split(key, 4)

    # Case 1: Residual(4, 4) -- identity shortcut, stride 1.
    p1 = make_params(k1, 4, 4)
    pp1 = prepare_residual_params(p1, use_1x1conv=False)
    x1 = jax.random.normal(kx1, (N, 4, H, W), jnp.float32)
    out1 = jax.block_until_ready(
        residual_forward(x1, pp1, cout=4, use_1x1conv=False, strides=1))
    ref1 = residual_reference(x1, p1, use_1x1conv=False, strides=1)
    assert out1.shape == (N, 4, H, W)
    assert jnp.allclose(out1, ref1, rtol=1e-4, atol=1e-4), "case1 mismatch"

    # Case 2: Residual(4, 8, use_1x1conv=True) -- projection shortcut, stride 1.
    p2 = make_params(k2, 4, 8)
    pp2 = prepare_residual_params(p2, use_1x1conv=True)
    x2 = jax.random.normal(kx2, (N, 4, H, W), jnp.float32)
    out2 = jax.block_until_ready(
        residual_forward(x2, pp2, cout=8, use_1x1conv=True, strides=1))
    ref2 = residual_reference(x2, p2, use_1x1conv=True, strides=1)
    assert out2.shape == (N, 8, H, W)
    assert jnp.allclose(out2, ref2, rtol=1e-4, atol=1e-4), "case2 mismatch"

    # Case 3: Residual(4, 8, use_1x1conv=True, strides=2) -- downsampling block
    # (exercises the polyphase strided-conv path and strided shortcut).
    out3 = jax.block_until_ready(
        residual_forward(x2, pp2, cout=8, use_1x1conv=True, strides=2))
    ref3 = residual_reference(x2, p2, use_1x1conv=True, strides=2)
    assert out3.shape == (N, 8, H // 2, W // 2)
    assert jnp.allclose(out3, ref3, rtol=1e-4, atol=1e-4), "case3 mismatch"

    print("KERNEL_OK")
</pallas_src>

<mosaic_0001>
module attributes {stable_mosaic.version = 11 : i64} {
  func.func @_conv1_s1_kernel(%arg0: i32, %arg1: memref<1x16x16x128xf32, #tpu.memory_space<vmem>>, %arg2: memref<1152x128xf32, #tpu.memory_space<vmem>>, %arg3: memref<1x16x16x128xf32, #tpu.memory_space<vmem>>, %arg4: memref<1x2x128xf32, #tpu.memory_space<vmem>>, %arg5: memref<18x32x128xf32, #tpu.memory_space<vmem>>) attributes {dimension_semantics = [#tpu.dimension_semantics<parallel>], iteration_bounds = array<i64: 2>, scalar_prefetch = 0 : i64, scratch_operands = 1 : i64, tpu.core_type = #tpu.core_type<tc>, window_params = [{transform_indices = @transform_0, window_bounds = array<i64: 1, 16, 16, 128>}, {pipeline_mode = #tpu.pipeline_mode<synchronous>, transform_indices = @transform_1, window_bounds = array<i64: 1152, 128>}, {transform_indices = @transform_2, window_bounds = array<i64: 1, 16, 16, 128>}, {transform_indices = @transform_3, window_bounds = array<i64: 1, 2, 128>}]} {
    %c0 = arith.constant 0 : index
    %c0_0 = arith.constant 0 : index
    %c0_1 = arith.constant 0 : index
    %c0_2 = arith.constant 0 : index
    %0 = vector.load %arg1[%c0, %c0_0, %c0_1, %c0_2] : memref<1x16x16x128xf32, #tpu.memory_space<vmem>>, vector<1x16x16x128xf32>
    %1 = vector.shape_cast %0 : vector<1x16x16x128xf32> to vector<16x16x128xf32>
    %cst = arith.constant 0.000000e+00 : f32
    %2 = vector.broadcast %cst : f32 to vector<1x32x128xf32>
    %cst_3 = arith.constant 0.000000e+00 : f32
    %3 = vector.broadcast %cst_3 : f32 to vector<16x1x128xf32>
    %c0_4 = arith.constant 0 : index
    %c0_5 = arith.constant 0 : index
    %c0_6 = arith.constant 0 : index
    %4 = vector.load %arg5[%c0_4, %c0_5, %c0_6] : memref<18x32x128xf32, #tpu.memory_space<vmem>>, vector<1x32x128xf32>
    tpu.vector_store %arg5[%c0_4, %c0_5, %c0_6], %2 {strides = array<i32>} : memref<18x32x128xf32, #tpu.memory_space<vmem>>, vector<1x32x128xf32>,
    %c17 = arith.constant 17 : index
    %c0_7 = arith.constant 0 : index
    %c0_8 = arith.constant 0 : index
    %5 = vector.load %arg5[%c17, %c0_7, %c0_8] : memref<18x32x128xf32, #tpu.memory_space<vmem>>, vector<1x32x128xf32>
    tpu.vector_store %arg5[%c17, %c0_7, %c0_8], %2 {strides = array<i32>} : memref<18x32x128xf32, #tpu.memory_space<vmem>>, vector<1x32x128xf32>,
    %c1 = arith.constant 1 : index
    %c7 = arith.constant 7 : index
    %c0_9 = arith.constant 0 : index
    %6 = vector.load %arg5[%c1, %c7, %c0_9] : memref<18x32x128xf32, #tpu.memory_space<vmem>>, vector<16x1x128xf32>
    tpu.vector_store %arg5[%c1, %c7, %c0_9], %3 {strides = array<i32>} : memref<18x32x128xf32, #tpu.memory_space<vmem>>, vector<16x1x128xf32>,
    %c1_10 = arith.constant 1 : index
    %c24 = arith.constant 24 : index
    %c0_11 = arith.constant 0 : index
    %7 = vector.load %arg5[%c1_10, %c24, %c0_11] : memref<18x32x128xf32, #tpu.memory_space<vmem>>, vector<16x1x128xf32>
    tpu.vector_store %arg5[%c1_10, %c24, %c0_11], %3 {strides = array<i32>} : memref<18x32x128xf32, #tpu.memory_space<vmem>>, vector<16x1x128xf32>,
    %c1_12 = arith.constant 1 : index
    %c8 = arith.constant 8 : index
    %c0_13 = arith.constant 0 : index
    %8 = vector.load %arg5[%c1_12, %c8, %c0_13] : memref<18x32x128xf32, #tpu.memory_space<vmem>>, vector<16x16x128xf32>
    tpu.vector_store %arg5[%c1_12, %c8, %c0_13], %1 {strides = array<i32>} : memref<18x32x128xf32, #tpu.memory_space<vmem>>, vector<16x16x128xf32>,
    %c0_14 = arith.constant 0 : index
    %c7_15 = arith.constant 7 : index
    %c0_16 = arith.constant 0 : index
    %9 = vector.load %arg5[%c0_14, %c7_15, %c0_16] : memref<18x32x128xf32, #tpu.memory_space<vmem>>, vector<16x16x128xf32>
    %10 = vector.shape_cast %9 : vector<16x16x128xf32> to vector<256x128xf32>
    %c0_17 = arith.constant 0 : index
    %c0_18 = arith.constant 0 : index
    %11 = vector.load %arg2[%c0_17, %c0_18] : memref<1152x128xf32, #tpu.memory_space<vmem>>, vector<128x128xf32>
    %cst_19 = arith.constant dense<0.000000e+00> : vector<256x128xf32>
    %12 = tpu.matmul %10, %11, %cst_19 {dimension_numbers = #tpu.dot_dimension_numbers<[1], [0], [0], [1], [0, 0, 1, 1], [], []>} : vector<256x128xf32>, vector<128x128xf32>, vector<256x128xf32> -> vector<256x128xf32>
    %c0_20 = arith.constant 0 : index
    %c8_21 = arith.constant 8 : index
    %c0_22 = arith.constant 0 : index
    %13 = vector.load %arg5[%c0_20, %c8_21, %c0_22] : memref<18x32x128xf32, #tpu.memory_space<vmem>>, vector<16x16x128xf32>
    %14 = vector.shape_cast %13 : vector<16x16x128xf32> to vector<256x128xf32>
    %c128 = arith.constant 128 : index
    %c0_23 = arith.constant 0 : index
    %15 = vector.load %arg2[%c128, %c0_23] : memref<1152x128xf32, #tpu.memory_space<vmem>>, vector<128x128xf32>
    %cst_24 = arith.constant dense<0.000000e+00> : vector<256x128xf32>
    %16 = tpu.matmul %14, %15, %cst_24 {dimension_numbers = #tpu.dot_dimension_numbers<[1], [0], [0], [1], [0, 0, 1, 1], [], []>} : vector<256x128xf32>, vector<128x128xf32>, vector<256x128xf32> -> vector<256x128xf32>
    %17 = arith.addf %12, %16 : vector<256x128xf32>
    %c0_25 = arith.constant 0 : index
    %c9 = arith.constant 9 : index
    %c0_26 = arith.constant 0 : index
    %18 = vector.load %arg5[%c0_25, %c9, %c0_26] : memref<18x32x128xf32, #tpu.memory_space<vmem>>, vector<16x16x128xf32>
    %19 = vector.shape_cast %18 : vector<16x16x128xf32> to vector<256x128xf32>
    %c256 = arith.constant 256 : index
    %c0_27 = arith.constant 0 : index
    %20 = vector.load %arg2[%c256, %c0_27] : memref<1152x128xf32, #tpu.memory_space<vmem>>, vector<128x128xf32>
    %cst_28 = arith.constant dense<0.000000e+00> : vector<256x128xf32>
    %21 = tpu.matmul %19, %20, %cst_28 {dimension_numbers = #tpu.dot_dimension_numbers<[1], [0], [0], [1], [0, 0, 1, 1], [], []>} : vector<256x128xf32>, vector<128x128xf32>, vector<256x128xf32> -> vector<256x128xf32>
    %22 = arith.addf %17, %21 : vector<256x128xf32>
    %c1_29 = arith.constant 1 : index
    %c7_30 = arith.constant 7 : index
    %c0_31 = arith.constant 0 : index
    %23 = vector.load %arg5[%c1_29, %c7_30, %c0_31] : memref<18x32x128xf32, #tpu.memory_space<vmem>>, vector<16x16x128xf32>
    %24 = vector.shape_cast %23 : vector<16x16x128xf32> to vector<256x128xf32>
    %c384 = arith.constant 384 : index
    %c0_32 = arith.constant 0 : index
    %25 = vector.load %arg2[%c384, %c0_32] : memref<1152x128xf32, #tpu.memory_space<vmem>>, vector<128x128xf32>
    %cst_33 = arith.constant dense<0.000000e+00> : vector<256x128xf32>
    %26 = tpu.matmul %24, %25, %cst_33 {dimension_numbers = #tpu.dot_dimension_numbers<[1], [0], [0], [1], [0, 0, 1, 1], [], []>} : vector<256x128xf32>, vector<128x128xf32>, vector<256x128xf32> -> vector<256x128xf32>
    %27 = arith.addf %22, %26 : vector<256x128xf32>
    %c1_34 = arith.constant 1 : index
    %c8_35 = arith.constant 8 : index
    %c0_36 = arith.constant 0 : index
    %28 = vector.load %arg5[%c1_34, %c8_35, %c0_36] : memref<18x32x128xf32, #tpu.memory_space<vmem>>, vector<16x16x128xf32>
    %29 = vector.shape_cast %28 : vector<16x16x128xf32> to vector<256x128xf32>
    %c512 = arith.constant 512 : index
    %c0_37 = arith.constant 0 : index
    %30 = vector.load %arg2[%c512, %c0_37] : memref<1152x128xf32, #tpu.memory_space<vmem>>, vector<128x128xf32>
    %cst_38 = arith.constant dense<0.000000e+00> : vector<256x128xf32>
    %31 = tpu.matmul %29, %30, %cst_38 {dimension_numbers = #tpu.dot_dimension_numbers<[1], [0], [0], [1], [0, 0, 1, 1], [], []>} : vector<256x128xf32>, vector<128x128xf32>, vector<256x128xf32> -> vector<256x128xf32>
    %32 = arith.addf %27, %31 : vector<256x128xf32>
    %c1_39 = arith.constant 1 : index
    %c9_40 = arith.constant 9 : index
    %c0_41 = arith.constant 0 : index
    %33 = vector.load %arg5[%c1_39, %c9_40, %c0_41] : memref<18x32x128xf32, #tpu.memory_space<vmem>>, vector<16x16x128xf32>
    %34 = vector.shape_cast %33 : vector<16x16x128xf32> to vector<256x128xf32>
    %c640 = arith.constant 640 : index
    %c0_42 = arith.constant 0 : index
    %35 = vector.load %arg2[%c640, %c0_42] : memref<1152x128xf32, #tpu.memory_space<vmem>>, vector<128x128xf32>
    %cst_43 = arith.constant dense<0.000000e+00> : vector<256x128xf32>
    %36 = tpu.matmul %34, %35, %cst_43 {dimension_numbers = #tpu.dot_dimension_numbers<[1], [0], [0], [1], [0, 0, 1, 1], [], []>} : vector<256x128xf32>, vector<128x128xf32>, vector<256x128xf32> -> vector<256x128xf32>
    %37 = arith.addf %32, %36 : vector<256x128xf32>
    %c2 = arith.constant 2 : index
    %c7_44 = arith.constant 7 : index
    %c0_45 = arith.constant 0 : index
    %38 = vector.load %arg5[%c2, %c7_44, %c0_45] : memref<18x32x128xf32, #tpu.memory_space<vmem>>, vector<16x16x128xf32>
    %39 = vector.shape_cast %38 : vector<16x16x128xf32> to vector<256x128xf32>
    %c768 = arith.constant 768 : index
    %c0_46 = arith.constant 0 : index
    %40 = vector.load %arg2[%c768, %c0_46] : memref<1152x128xf32, #tpu.memory_space<vmem>>, vector<128x128xf32>
    %cst_47 = arith.constant dense<0.000000e+00> : vector<256x128xf32>
    %41 = tpu.matmul %39, %40, %cst_47 {dimension_numbers = #tpu.dot_dimension_numbers<[1], [0], [0], [1], [0, 0, 1, 1], [], []>} : vector<256x128xf32>, vector<128x128xf32>, vector<256x128xf32> -> vector<256x128xf32>
    %42 = arith.addf %37, %41 : vector<256x128xf32>
    %c2_48 = arith.constant 2 : index
    %c8_49 = arith.constant 8 : index
    %c0_50 = arith.constant 0 : index
    %43 = vector.load %arg5[%c2_48, %c8_49, %c0_50] : memref<18x32x128xf32, #tpu.memory_space<vmem>>, vector<16x16x128xf32>
    %44 = vector.shape_cast %43 : vector<16x16x128xf32> to vector<256x128xf32>
    %c896 = arith.constant 896 : index
    %c0_51 = arith.constant 0 : index
    %45 = vector.load %arg2[%c896, %c0_51] : memref<1152x128xf32, #tpu.memory_space<vmem>>, vector<128x128xf32>
    %cst_52 = arith.constant dense<0.000000e+00> : vector<256x128xf32>
    %46 = tpu.matmul %44, %45, %cst_52 {dimension_numbers = #tpu.dot_dimension_numbers<[1], [0], [0], [1], [0, 0, 1, 1], [], []>} : vector<256x128xf32>, vector<128x128xf32>, vector<256x128xf32> -> vector<256x128xf32>
    %47 = arith.addf %42, %46 : vector<256x128xf32>
    %c2_53 = arith.constant 2 : index
    %c9_54 = arith.constant 9 : index
    %c0_55 = arith.constant 0 : index
    %48 = vector.load %arg5[%c2_53, %c9_54, %c0_55] : memref<18x32x128xf32, #tpu.memory_space<vmem>>, vector<16x16x128xf32>
    %49 = vector.shape_cast %48 : vector<16x16x128xf32> to vector<256x128xf32>
    %c1024 = arith.constant 1024 : index
    %c0_56 = arith.constant 0 : index
    %50 = vector.load %arg2[%c1024, %c0_56] : memref<1152x128xf32, #tpu.memory_space<vmem>>, vector<128x128xf32>
    %cst_57 = arith.constant dense<0.000000e+00> : vector<256x128xf32>
    %51 = tpu.matmul %49, %50, %cst_57 {dimension_numbers = #tpu.dot_dimension_numbers<[1], [0], [0], [1], [0, 0, 1, 1], [], []>} : vector<256x128xf32>, vector<128x128xf32>, vector<256x128xf32> -> vector<256x128xf32>
    %52 = arith.addf %47, %51 : vector<256x128xf32>
    %cst_58 = arith.constant 1.000000e+00 : f32
    %53 = vector.broadcast %cst_58 : f32 to vector<1x256xf32>
    %cst_59 = arith.constant dense<0.000000e+00> : vector<1x128xf32>
    %54 = tpu.matmul %53, %52, %cst_59 {dimension_numbers = #tpu.dot_dimension_numbers<[1], [0], [0], [1], [0, 0, 1, 1], [], []>} : vector<1x256xf32>, vector<256x128xf32>, vector<1x128xf32> -> vector<1x128xf32>
    %c0_60 = arith.constant 0 : index
    %c0_61 = arith.constant 0 : index
    %c0_62 = arith.constant 0 : index
    %55 = vector.load %arg4[%c0_60, %c0_61, %c0_62] : memref<1x2x128xf32, #tpu.memory_space<vmem>>, vector<1x1x128xf32>
    %56 = vector.shape_cast %55 : vector<1x1x128xf32> to vector<1x128xf32>
    %57 = vector.shape_cast %54 : vector<1x128xf32> to vector<1x1x128xf32>
    tpu.vector_store %arg4[%c0_60, %c0_61, %c0_62], %57 {strides = array<i32>} : memref<1x2x128xf32, #tpu.memory_space<vmem>>, vector<1x1x128xf32>,
    %58 = arith.mulf %52, %52 : vector<256x128xf32>
    %cst_63 = arith.constant dense<0.000000e+00> : vector<1x128xf32>
    %59 = tpu.matmul %53, %58, %cst_63 {dimension_numbers = #tpu.dot_dimension_numbers<[1], [0], [0], [1], [0, 0, 1, 1], [], []>} : vector<1x256xf32>, vector<256x128xf32>, vector<1x128xf32> -> vector<1x128xf32>
    %c0_64 = arith.constant 0 : index
    %c1_65 = arith.constant 1 : index
    %c0_66 = arith.constant 0 : index
    %60 = vector.load %arg4[%c0_64, %c1_65, %c0_66] : memref<1x2x128xf32, #tpu.memory_space<vmem>>, vector<1x1x128xf32>
    %61 = vector.shape_cast %60 : vector<1x1x128xf32> to vector<1x128xf32>
    %62 = vector.shape_cast %59 : vector<1x128xf32> to vector<1x1x128xf32>
    tpu.vector_store %arg4[%c0_64, %c1_65, %c0_66], %62 {strides = array<i32>} : memref<1x2x128xf32, #tpu.memory_space<vmem>>, vector<1x1x128xf32>,
    %63 = vector.shape_cast %52 : vector<256x128xf32> to vector<16x16x128xf32>
    %c0_67 = arith.constant 0 : index
    %c0_68 = arith.constant 0 : index
    %c0_69 = arith.constant 0 : index
    %c0_70 = arith.constant 0 : index
    %64 = vector.load %arg3[%c0_67, %c0_68, %c0_69, %c0_70] : memref<1x16x16x128xf32, #tpu.memory_space<vmem>>, vector<1x16x16x128xf32>
    %65 = vector.shape_cast %64 : vector<1x16x16x128xf32> to vector<16x16x128xf32>
    %66 = vector.shape_cast %63 : vector<16x16x128xf32> to vector<1x16x16x128xf32>
    tpu.vector_store %arg3[%c0_67, %c0_68, %c0_69, %c0_70], %66 {strides = array<i32>} : memref<1x16x16x128xf32, #tpu.memory_space<vmem>>, vector<1x16x16x128xf32>,
    return
  }
  func.func @transform_0(%arg0: i32) -> (i32, i32, i32, i32) {
    %c0_i32 = arith.constant 0 : i32
    %c0_i32_0 = arith.constant 0 : i32
    %c0_i32_1 = arith.constant 0 : i32
    %c0_i32_2 = arith.constant 0 : i32
    return %arg0, %c0_i32, %c0_i32_0, %c0_i32_1 : i32, i32, i32, i32
  }
  func.func @transform_1(%arg0: i32) -> (i32, i32) {
    %c0_i32 = arith.constant 0 : i32
    %c0_i32_0 = arith.constant 0 : i32
    %c0_i32_1 = arith.constant 0 : i32
    return %c0_i32, %c0_i32_0 : i32, i32
  }
  func.func @transform_2(%arg0: i32) -> (i32, i32, i32, i32) {
    %c0_i32 = arith.constant 0 : i32
    %c0_i32_0 = arith.constant 0 : i32
    %c0_i32_1 = arith.constant 0 : i32
    %c0_i32_2 = arith.constant 0 : i32
    return %arg0, %c0_i32, %c0_i32_0, %c0_i32_1 : i32, i32, i32, i32
  }
  func.func @transform_3(%arg0: i32) -> (i32, i32, i32) {
    %c0_i32 = arith.constant 0 : i32
    %c0_i32_0 = arith.constant 0 : i32
    %c0_i32_1 = arith.constant 0 : i32
    return %arg0, %c0_i32, %c0_i32_0 : i32, i32, i32
  }
}

module attributes {stable_mosaic.version = 11 : i64} {
  func.func @_finish_kernel(%arg0: i32, %arg1: memref<1x16x16x128xf32, #tpu.memory_space<vmem>>, %arg2: memref<1x16x16x128xf32, #tpu.memory_space<vmem>>, %arg3: memref<1x128xf32, #tpu.memory_space<vmem>>, %arg4: memref<1x128xf32, #tpu.memory_space<vmem>>, %arg5: memref<1x16x16x128xf32, #tpu.memory_space<vmem>>) attributes {dimension_semantics = [#tpu.dimension_semantics<parallel>], iteration_bounds = array<i64: 2>, scalar_prefetch = 0 : i64, scratch_operands = 0 : i64, tpu.core_type = #tpu.core_type<tc>, window_params = [{transform_indices = @transform_0, window_bounds = array<i64: 1, 16, 16, 128>}, {transform_indices = @transform_1, window_bounds = array<i64: 1, 16, 16, 128>}, {pipeline_mode = #tpu.pipeline_mode<synchronous>, transform_indices = @transform_2, window_bounds = array<i64: 1, 128>}, {pipeline_mode = #tpu.pipeline_mode<synchronous>, transform_indices = @transform_3, window_bounds = array<i64: 1, 128>}, {transform_indices = @transform_4, window_bounds = array<i64: 1, 16, 16, 128>}]} {
    %c0 = arith.constant 0 : index
    %c0_0 = arith.constant 0 : index
    %c0_1 = arith.constant 0 : index
    %c0_2 = arith.constant 0 : index
    %0 = vector.load %arg1[%c0, %c0_0, %c0_1, %c0_2] : memref<1x16x16x128xf32, #tpu.memory_space<vmem>>, vector<1x16x16x128xf32>
    %1 = vector.shape_cast %0 : vector<1x16x16x128xf32> to vector<16x16x128xf32>
    %2 = vector.shape_cast %1 : vector<16x16x128xf32> to vector<256x128xf32>
    %c0_3 = arith.constant 0 : index
    %c0_4 = arith.constant 0 : index
    %3 = vector.load %arg3[%c0_3, %c0_4] : memref<1x128xf32, #tpu.memory_space<vmem>>, vector<1x128xf32>
    %4 = vector.broadcast %3 : vector<1x128xf32> to vector<256x128xf32>
    %5 = arith.mulf %2, %4 : vector<256x128xf32>
    %c0_5 = arith.constant 0 : index
    %c0_6 = arith.constant 0 : index
    %6 = vector.load %arg4[%c0_5, %c0_6] : memref<1x128xf32, #tpu.memory_space<vmem>>, vector<1x128xf32>
    %7 = vector.broadcast %6 : vector<1x128xf32> to vector<256x128xf32>
    %8 = arith.addf %5, %7 : vector<256x128xf32>
    %c0_7 = arith.constant 0 : index
    %c0_8 = arith.constant 0 : index
    %c0_9 = arith.constant 0 : index
    %c0_10 = arith.constant 0 : index
    %9 = vector.load %arg2[%c0_7, %c0_8, %c0_9, %c0_10] : memref<1x16x16x128xf32, #tpu.memory_space<vmem>>, vector<1x16x16x128xf32>
    %10 = vector.shape_cast %9 : vector<1x16x16x128xf32> to vector<16x16x128xf32>
    %11 = vector.shape_cast %10 : vector<16x16x128xf32> to vector<256x128xf32>
    %12 = arith.addf %8, %11 : vector<256x128xf32>
    %cst = arith.constant 0.000000e+00 : f32
    %13 = vector.broadcast %cst : f32 to vector<256x128xf32>
    %14 = arith.maximumf %12, %13 : vector<256x128xf32>
    %15 = vector.shape_cast %14 : vector<256x128xf32> to vector<16x16x128xf32>
    %c0_11 = arith.constant 0 : index
    %c0_12 = arith.constant 0 : index
    %c0_13 = arith.constant 0 : index
    %c0_14 = arith.constant 0 : index
    %16 = vector.load %arg5[%c0_11, %c0_12, %c0_13, %c0_14] : memref<1x16x16x128xf32, #tpu.memory_space<vmem>>, vector<1x16x16x128xf32>
    %17 = vector.shape_cast %16 : vector<1x16x16x128xf32> to vector<16x16x128xf32>
    %18 = vector.shape_cast %15 : vector<16x16x128xf32> to vector<1x16x16x128xf32>
    tpu.vector_store %arg5[%c0_11, %c0_12, %c0_13, %c0_14], %18 {strides = array<i32>} : memref<1x16x16x128xf32, #tpu.memory_space<vmem>>, vector<1x16x16x128xf32>,
    return
  }
  func.func @transform_0(%arg0: i32) -> (i32, i32, i32, i32) {
    %c0_i32 = arith.constant 0 : i32
    %c0_i32_0 = arith.constant 0 : i32
    %c0_i32_1 = arith.constant 0 : i32
    %c0_i32_2 = arith.constant 0 : i32
    return %arg0, %c0_i32, %c0_i32_0, %c0_i32_1 : i32, i32, i32, i32
  }
  func.func @transform_1(%arg0: i32) -> (i32, i32, i32, i32) {
    %c0_i32 = arith.constant 0 : i32
    %c0_i32_0 = arith.constant 0 : i32
    %c0_i32_1 = arith.constant 0 : i32
    %c0_i32_2 = arith.constant 0 : i32
    return %arg0, %c0_i32, %c0_i32_0, %c0_i32_1 : i32, i32, i32, i32
  }
  func.func @transform_2(%arg0: i32) -> (i32, i32) {
    %c0_i32 = arith.constant 0 : i32
    %c0_i32_0 = arith.constant 0 : i32
    %c0_i32_1 = arith.constant 0 : i32
    return %c0_i32, %c0_i32_0 : i32, i32
  }
  func.func @transform_3(%arg0: i32) -> (i32, i32) {
    %c0_i32 = arith.constant 0 : i32
    %c0_i32_0 = arith.constant 0 : i32
    %c0_i32_1 = arith.constant 0 : i32
    return %c0_i32, %c0_i32_0 : i32, i32
  }
  func.func @transform_4(%arg0: i32) -> (i32, i32, i32, i32) {
    %c0_i32 = arith.constant 0 : i32
    %c0_i32_0 = arith.constant 0 : i32
    %c0_i32_1 = arith.constant 0 : i32
    %c0_i32_2 = arith.constant 0 : i32
    return %arg0, %c0_i32, %c0_i32_0, %c0_i32_1 : i32, i32, i32, i32
  }
}

module attributes {stable_mosaic.version = 11 : i64} {
  func.func @_conv2_kernel(%arg0: i32, %arg1: memref<1x16x16x128xf32, #tpu.memory_space<vmem>>, %arg2: memref<1152x128xf32, #tpu.memory_space<vmem>>, %arg3: memref<1x128xf32, #tpu.memory_space<vmem>>, %arg4: memref<1x128xf32, #tpu.memory_space<vmem>>, %arg5: memref<1x16x16x128xf32, #tpu.memory_space<vmem>>, %arg6: memref<1x2x128xf32, #tpu.memory_space<vmem>>, %arg7: memref<18x32x128xf32, #tpu.memory_space<vmem>>) attributes {dimension_semantics = [#tpu.dimension_semantics<parallel>], iteration_bounds = array<i64: 2>, scalar_prefetch = 0 : i64, scratch_operands = 1 : i64, tpu.core_type = #tpu.core_type<tc>, window_params = [{transform_indices = @transform_0, window_bounds = array<i64: 1, 16, 16, 128>}, {pipeline_mode = #tpu.pipeline_mode<synchronous>, transform_indices = @transform_1, window_bounds = array<i64: 1152, 128>}, {pipeline_mode = #tpu.pipeline_mode<synchronous>, transform_indices = @transform_2, window_bounds = array<i64: 1, 128>}, {pipeline_mode = #tpu.pipeline_mode<synchronous>, transform_indices = @transform_3, window_bounds = array<i64: 1, 128>}, {transform_indices = @transform_4, window_bounds = array<i64: 1, 16, 16, 128>}, {transform_indices = @transform_5, window_bounds = array<i64: 1, 2, 128>}]} {
    %c0 = arith.constant 0 : index
    %c0_0 = arith.constant 0 : index
    %0 = vector.load %arg3[%c0, %c0_0] : memref<1x128xf32, #tpu.memory_space<vmem>>, vector<1x128xf32>
    %1 = vector.shape_cast %0 : vector<1x128xf32> to vector<1x1x128xf32>
    %c0_1 = arith.constant 0 : index
    %c0_2 = arith.constant 0 : index
    %2 = vector.load %arg4[%c0_1, %c0_2] : memref<1x128xf32, #tpu.memory_space<vmem>>, vector<1x128xf32>
    %3 = vector.shape_cast %2 : vector<1x128xf32> to vector<1x1x128xf32>
    %c0_3 = arith.constant 0 : index
    %c0_4 = arith.constant 0 : index
    %c0_5 = arith.constant 0 : index
    %c0_6 = arith.constant 0 : index
    %4 = vector.load %arg1[%c0_3, %c0_4, %c0_5, %c0_6] : memref<1x16x16x128xf32, #tpu.memory_space<vmem>>, vector<1x16x16x128xf32>
    %5 = vector.shape_cast %4 : vector<1x16x16x128xf32> to vector<16x16x128xf32>
    %6 = vector.broadcast %1 : vector<1x1x128xf32> to vector<16x16x128xf32>
    %7 = arith.mulf %5, %6 : vector<16x16x128xf32>
    %8 = vector.broadcast %3 : vector<1x1x128xf32> to vector<16x16x128xf32>
    %9 = arith.addf %7, %8 : vector<16x16x128xf32>
    %cst = arith.constant 0.000000e+00 : f32
    %10 = vector.broadcast %cst : f32 to vector<16x16x128xf32>
    %11 = arith.maximumf %9, %10 : vector<16x16x128xf32>
    %cst_7 = arith.constant 0.000000e+00 : f32
    %12 = vector.broadcast %cst_7 : f32 to vector<1x32x128xf32>
    %cst_8 = arith.constant 0.000000e+00 : f32
    %13 = vector.broadcast %cst_8 : f32 to vector<16x1x128xf32>
    %c0_9 = arith.constant 0 : index
    %c0_10 = arith.constant 0 : index
    %c0_11 = arith.constant 0 : index
    %14 = vector.load %arg7[%c0_9, %c0_10, %c0_11] : memref<18x32x128xf32, #tpu.memory_space<vmem>>, vector<1x32x128xf32>
    tpu.vector_store %arg7[%c0_9, %c0_10, %c0_11], %12 {strides = array<i32>} : memref<18x32x128xf32, #tpu.memory_space<vmem>>, vector<1x32x128xf32>,
    %c17 = arith.constant 17 : index
    %c0_12 = arith.constant 0 : index
    %c0_13 = arith.constant 0 : index
    %15 = vector.load %arg7[%c17, %c0_12, %c0_13] : memref<18x32x128xf32, #tpu.memory_space<vmem>>, vector<1x32x128xf32>
    tpu.vector_store %arg7[%c17, %c0_12, %c0_13], %12 {strides = array<i32>} : memref<18x32x128xf32, #tpu.memory_space<vmem>>, vector<1x32x128xf32>,
    %c1 = arith.constant 1 : index
    %c7 = arith.constant 7 : index
    %c0_14 = arith.constant 0 : index
    %16 = vector.load %arg7[%c1, %c7, %c0_14] : memref<18x32x128xf32, #tpu.memory_space<vmem>>, vector<16x1x128xf32>
    tpu.vector_store %arg7[%c1, %c7, %c0_14], %13 {strides = array<i32>} : memref<18x32x128xf32, #tpu.memory_space<vmem>>, vector<16x1x128xf32>,
    %c1_15 = arith.constant 1 : index
    %c24 = arith.constant 24 : index
    %c0_16 = arith.constant 0 : index
    %17 = vector.load %arg7[%c1_15, %c24, %c0_16] : memref<18x32x128xf32, #tpu.memory_space<vmem>>, vector<16x1x128xf32>
    tpu.vector_store %arg7[%c1_15, %c24, %c0_16], %13 {strides = array<i32>} : memref<18x32x128xf32, #tpu.memory_space<vmem>>, vector<16x1x128xf32>,
    %c1_17 = arith.constant 1 : index
    %c8 = arith.constant 8 : index
    %c0_18 = arith.constant 0 : index
    %18 = vector.load %arg7[%c1_17, %c8, %c0_18] : memref<18x32x128xf32, #tpu.memory_space<vmem>>, vector<16x16x128xf32>
    tpu.vector_store %arg7[%c1_17, %c8, %c0_18], %11 {strides = array<i32>} : memref<18x32x128xf32, #tpu.memory_space<vmem>>, vector<16x16x128xf32>,
    %c0_19 = arith.constant 0 : index
    %c7_20 = arith.constant 7 : index
    %c0_21 = arith.constant 0 : index
    %19 = vector.load %arg7[%c0_19, %c7_20, %c0_21] : memref<18x32x128xf32, #tpu.memory_space<vmem>>, vector<16x16x128xf32>
    %20 = vector.shape_cast %19 : vector<16x16x128xf32> to vector<256x128xf32>
    %c0_22 = arith.constant 0 : index
    %c0_23 = arith.constant 0 : index
    %21 = vector.load %arg2[%c0_22, %c0_23] : memref<1152x128xf32, #tpu.memory_space<vmem>>, vector<128x128xf32>
    %cst_24 = arith.constant dense<0.000000e+00> : vector<256x128xf32>
    %22 = tpu.matmul %20, %21, %cst_24 {dimension_numbers = #tpu.dot_dimension_numbers<[1], [0], [0], [1], [0, 0, 1, 1], [], []>} : vector<256x128xf32>, vector<128x128xf32>, vector<256x128xf32> -> vector<256x128xf32>
    %c0_25 = arith.constant 0 : index
    %c8_26 = arith.constant 8 : index
    %c0_27 = arith.constant 0 : index
    %23 = vector.load %arg7[%c0_25, %c8_26, %c0_27] : memref<18x32x128xf32, #tpu.memory_space<vmem>>, vector<16x16x128xf32>
    %24 = vector.shape_cast %23 : vector<16x16x128xf32> to vector<256x128xf32>
    %c128 = arith.constant 128 : index
    %c0_28 = arith.constant 0 : index
    %25 = vector.load %arg2[%c128, %c0_28] : memref<1152x128xf32, #tpu.memory_space<vmem>>, vector<128x128xf32>
    %cst_29 = arith.constant dense<0.000000e+00> : vector<256x128xf32>
    %26 = tpu.matmul %24, %25, %cst_29 {dimension_numbers = #tpu.dot_dimension_numbers<[1], [0], [0], [1], [0, 0, 1, 1], [], []>} : vector<256x128xf32>, vector<128x128xf32>, vector<256x128xf32> -> vector<256x128xf32>
    %27 = arith.addf %22, %26 : vector<256x128xf32>
    %c0_30 = arith.constant 0 : index
    %c9 = arith.constant 9 : index
    %c0_31 = arith.constant 0 : index
    %28 = vector.load %arg7[%c0_30, %c9, %c0_31] : memref<18x32x128xf32, #tpu.memory_space<vmem>>, vector<16x16x128xf32>
    %29 = vector.shape_cast %28 : vector<16x16x128xf32> to vector<256x128xf32>
    %c256 = arith.constant 256 : index
    %c0_32 = arith.constant 0 : index
    %30 = vector.load %arg2[%c256, %c0_32] : memref<1152x128xf32, #tpu.memory_space<vmem>>, vector<128x128xf32>
    %cst_33 = arith.constant dense<0.000000e+00> : vector<256x128xf32>
    %31 = tpu.matmul %29, %30, %cst_33 {dimension_numbers = #tpu.dot_dimension_numbers<[1], [0], [0], [1], [0, 0, 1, 1], [], []>} : vector<256x128xf32>, vector<128x128xf32>, vector<256x128xf32> -> vector<256x128xf32>
    %32 = arith.addf %27, %31 : vector<256x128xf32>
    %c1_34 = arith.constant 1 : index
    %c7_35 = arith.constant 7 : index
    %c0_36 = arith.constant 0 : index
    %33 = vector.load %arg7[%c1_34, %c7_35, %c0_36] : memref<18x32x128xf32, #tpu.memory_space<vmem>>, vector<16x16x128xf32>
    %34 = vector.shape_cast %33 : vector<16x16x128xf32> to vector<256x128xf32>
    %c384 = arith.constant 384 : index
    %c0_37 = arith.constant 0 : index
    %35 = vector.load %arg2[%c384, %c0_37] : memref<1152x128xf32, #tpu.memory_space<vmem>>, vector<128x128xf32>
    %cst_38 = arith.constant dense<0.000000e+00> : vector<256x128xf32>
    %36 = tpu.matmul %34, %35, %cst_38 {dimension_numbers = #tpu.dot_dimension_numbers<[1], [0], [0], [1], [0, 0, 1, 1], [], []>} : vector<256x128xf32>, vector<128x128xf32>, vector<256x128xf32> -> vector<256x128xf32>
    %37 = arith.addf %32, %36 : vector<256x128xf32>
    %c1_39 = arith.constant 1 : index
    %c8_40 = arith.constant 8 : index
    %c0_41 = arith.constant 0 : index
    %38 = vector.load %arg7[%c1_39, %c8_40, %c0_41] : memref<18x32x128xf32, #tpu.memory_space<vmem>>, vector<16x16x128xf32>
    %39 = vector.shape_cast %38 : vector<16x16x128xf32> to vector<256x128xf32>
    %c512 = arith.constant 512 : index
    %c0_42 = arith.constant 0 : index
    %40 = vector.load %arg2[%c512, %c0_42] : memref<1152x128xf32, #tpu.memory_space<vmem>>, vector<128x128xf32>
    %cst_43 = arith.constant dense<0.000000e+00> : vector<256x128xf32>
    %41 = tpu.matmul %39, %40, %cst_43 {dimension_numbers = #tpu.dot_dimension_numbers<[1], [0], [0], [1], [0, 0, 1, 1], [], []>} : vector<256x128xf32>, vector<128x128xf32>, vector<256x128xf32> -> vector<256x128xf32>
    %42 = arith.addf %37, %41 : vector<256x128xf32>
    %c1_44 = arith.constant 1 : index
    %c9_45 = arith.constant 9 : index
    %c0_46 = arith.constant 0 : index
    %43 = vector.load %arg7[%c1_44, %c9_45, %c0_46] : memref<18x32x128xf32, #tpu.memory_space<vmem>>, vector<16x16x128xf32>
    %44 = vector.shape_cast %43 : vector<16x16x128xf32> to vector<256x128xf32>
    %c640 = arith.constant 640 : index
    %c0_47 = arith.constant 0 : index
    %45 = vector.load %arg2[%c640, %c0_47] : memref<1152x128xf32, #tpu.memory_space<vmem>>, vector<128x128xf32>
    %cst_48 = arith.constant dense<0.000000e+00> : vector<256x128xf32>
    %46 = tpu.matmul %44, %45, %cst_48 {dimension_numbers = #tpu.dot_dimension_numbers<[1], [0], [0], [1], [0, 0, 1, 1], [], []>} : vector<256x128xf32>, vector<128x128xf32>, vector<256x128xf32> -> vector<256x128xf32>
    %47 = arith.addf %42, %46 : vector<256x128xf32>
    %c2 = arith.constant 2 : index
    %c7_49 = arith.constant 7 : index
    %c0_50 = arith.constant 0 : index
    %48 = vector.load %arg7[%c2, %c7_49, %c0_50] : memref<18x32x128xf32, #tpu.memory_space<vmem>>, vector<16x16x128xf32>
    %49 = vector.shape_cast %48 : vector<16x16x128xf32> to vector<256x128xf32>
    %c768 = arith.constant 768 : index
    %c0_51 = arith.constant 0 : index
    %50 = vector.load %arg2[%c768, %c0_51] : memref<1152x128xf32, #tpu.memory_space<vmem>>, vector<128x128xf32>
    %cst_52 = arith.constant dense<0.000000e+00> : vector<256x128xf32>
    %51 = tpu.matmul %49, %50, %cst_52 {dimension_numbers = #tpu.dot_dimension_numbers<[1], [0], [0], [1], [0, 0, 1, 1], [], []>} : vector<256x128xf32>, vector<128x128xf32>, vector<256x128xf32> -> vector<256x128xf32>
    %52 = arith.addf %47, %51 : vector<256x128xf32>
    %c2_53 = arith.constant 2 : index
    %c8_54 = arith.constant 8 : index
    %c0_55 = arith.constant 0 : index
    %53 = vector.load %arg7[%c2_53, %c8_54, %c0_55] : memref<18x32x128xf32, #tpu.memory_space<vmem>>, vector<16x16x128xf32>
    %54 = vector.shape_cast %53 : vector<16x16x128xf32> to vector<256x128xf32>
    %c896 = arith.constant 896 : index
    %c0_56 = arith.constant 0 : index
    %55 = vector.load %arg2[%c896, %c0_56] : memref<1152x128xf32, #tpu.memory_space<vmem>>, vector<128x128xf32>
    %cst_57 = arith.constant dense<0.000000e+00> : vector<256x128xf32>
    %56 = tpu.matmul %54, %55, %cst_57 {dimension_numbers = #tpu.dot_dimension_numbers<[1], [0], [0], [1], [0, 0, 1, 1], [], []>} : vector<256x128xf32>, vector<128x128xf32>, vector<256x128xf32> -> vector<256x128xf32>
    %57 = arith.addf %52, %56 : vector<256x128xf32>
    %c2_58 = arith.constant 2 : index
    %c9_59 = arith.constant 9 : index
    %c0_60 = arith.constant 0 : index
    %58 = vector.load %arg7[%c2_58, %c9_59, %c0_60] : memref<18x32x128xf32, #tpu.memory_space<vmem>>, vector<16x16x128xf32>
    %59 = vector.shape_cast %58 : vector<16x16x128xf32> to vector<256x128xf32>
    %c1024 = arith.constant 1024 : index
    %c0_61 = arith.constant 0 : index
    %60 = vector.load %arg2[%c1024, %c0_61] : memref<1152x128xf32, #tpu.memory_space<vmem>>, vector<128x128xf32>
    %cst_62 = arith.constant dense<0.000000e+00> : vector<256x128xf32>
    %61 = tpu.matmul %59, %60, %cst_62 {dimension_numbers = #tpu.dot_dimension_numbers<[1], [0], [0], [1], [0, 0, 1, 1], [], []>} : vector<256x128xf32>, vector<128x128xf32>, vector<256x128xf32> -> vector<256x128xf32>
    %62 = arith.addf %57, %61 : vector<256x128xf32>
    %cst_63 = arith.constant 1.000000e+00 : f32
    %63 = vector.broadcast %cst_63 : f32 to vector<1x256xf32>
    %cst_64 = arith.constant dense<0.000000e+00> : vector<1x128xf32>
    %64 = tpu.matmul %63, %62, %cst_64 {dimension_numbers = #tpu.dot_dimension_numbers<[1], [0], [0], [1], [0, 0, 1, 1], [], []>} : vector<1x256xf32>, vector<256x128xf32>, vector<1x128xf32> -> vector<1x128xf32>
    %c0_65 = arith.constant 0 : index
    %c0_66 = arith.constant 0 : index
    %c0_67 = arith.constant 0 : index
    %65 = vector.load %arg6[%c0_65, %c0_66, %c0_67] : memref<1x2x128xf32, #tpu.memory_space<vmem>>, vector<1x1x128xf32>
    %66 = vector.shape_cast %65 : vector<1x1x128xf32> to vector<1x128xf32>
    %67 = vector.shape_cast %64 : vector<1x128xf32> to vector<1x1x128xf32>
    tpu.vector_store %arg6[%c0_65, %c0_66, %c0_67], %67 {strides = array<i32>} : memref<1x2x128xf32, #tpu.memory_space<vmem>>, vector<1x1x128xf32>,
    %68 = arith.mulf %62, %62 : vector<256x128xf32>
    %cst_68 = arith.constant dense<0.000000e+00> : vector<1x128xf32>
    %69 = tpu.matmul %63, %68, %cst_68 {dimension_numbers = #tpu.dot_dimension_numbers<[1], [0], [0], [1], [0, 0, 1, 1], [], []>} : vector<1x256xf32>, vector<256x128xf32>, vector<1x128xf32> -> vector<1x128xf32>
    %c0_69 = arith.constant 0 : index
    %c1_70 = arith.constant 1 : index
    %c0_71 = arith.constant 0 : index
    %70 = vector.load %arg6[%c0_69, %c1_70, %c0_71] : memref<1x2x128xf32, #tpu.memory_space<vmem>>, vector<1x1x128xf32>
    %71 = vector.shape_cast %70 : vector<1x1x128xf32> to vector<1x128xf32>
    %72 = vector.shape_cast %69 : vector<1x128xf32> to vector<1x1x128xf32>
    tpu.vector_store %arg6[%c0_69, %c1_70, %c0_71], %72 {strides = array<i32>} : memref<1x2x128xf32, #tpu.memory_space<vmem>>, vector<1x1x128xf32>,
    %73 = vector.shape_cast %62 : vector<256x128xf32> to vector<16x16x128xf32>
    %c0_72 = arith.constant 0 : index
    %c0_73 = arith.constant 0 : index
    %c0_74 = arith.constant 0 : index
    %c0_75 = arith.constant 0 : index
    %74 = vector.load %arg5[%c0_72, %c0_73, %c0_74, %c0_75] : memref<1x16x16x128xf32, #tpu.memory_space<vmem>>, vector<1x16x16x128xf32>
    %75 = vector.shape_cast %74 : vector<1x16x16x128xf32> to vector<16x16x128xf32>
    %76 = vector.shape_cast %73 : vector<16x16x128xf32> to vector<1x16x16x128xf32>
    tpu.vector_store %arg5[%c0_72, %c0_73, %c0_74, %c0_75], %76 {strides = array<i32>} : memref<1x16x16x128xf32, #tpu.memory_space<vmem>>, vector<1x16x16x128xf32>,
    return
  }
  func.func @transform_0(%arg0: i32) -> (i32, i32, i32, i32) {
    %c0_i32 = arith.constant 0 : i32
    %c0_i32_0 = arith.constant 0 : i32
    %c0_i32_1 = arith.constant 0 : i32
    %c0_i32_2 = arith.constant 0 : i32
    return %arg0, %c0_i32, %c0_i32_0, %c0_i32_1 : i32, i32, i32, i32
  }
  func.func @transform_1(%arg0: i32) -> (i32, i32) {
    %c0_i32 = arith.constant 0 : i32
    %c0_i32_0 = arith.constant 0 : i32
    %c0_i32_1 = arith.constant 0 : i32
    return %c0_i32, %c0_i32_0 : i32, i32
  }
  func.func @transform_2(%arg0: i32) -> (i32, i32) {
    %c0_i32 = arith.constant 0 : i32
    %c0_i32_0 = arith.constant 0 : i32
    %c0_i32_1 = arith.constant 0 : i32
    return %c0_i32, %c0_i32_0 : i32, i32
  }
  func.func @transform_3(%arg0: i32) -> (i32, i32) {
    %c0_i32 = arith.constant 0 : i32
    %c0_i32_0 = arith.constant 0 : i32
    %c0_i32_1 = arith.constant 0 : i32
    return %c0_i32, %c0_i32_0 : i32, i32
  }
  func.func @transform_4(%arg0: i32) -> (i32, i32, i32, i32) {
    %c0_i32 = arith.constant 0 : i32
    %c0_i32_0 = arith.constant 0 : i32
    %c0_i32_1 = arith.constant 0 : i32
    %c0_i32_2 = arith.constant 0 : i32
    return %arg0, %c0_i32, %c0_i32_0, %c0_i32_1 : i32, i32, i32, i32
  }
  func.func @transform_5(%arg0: i32) -> (i32, i32, i32) {
    %c0_i32 = arith.constant 0 : i32
    %c0_i32_0 = arith.constant 0 : i32
    %c0_i32_1 = arith.constant 0 : i32
    return %arg0, %c0_i32, %c0_i32_0 : i32, i32, i32
  }
}

</mosaic_0001>

<llo_original>
// kernel: residual_forward.5
$region0: #{residual_forward.5}
  #allocation0 [shape = 'u32[]', space=smem, size = 0x4, offset = 0x4, fixed_abs, tag = 'smem constant byte address 0x4 - core index']
  #allocation1 [shape = 'u32[72,128]{1,0:T(1,128)}', space=vmem, size = 0x9000, scoped, tag = 'internal scratch']
  %s0 = inlined_call_operand.vmem [shape: f32[2,16,16,128], index: 0, kind: input, shape index: {}]
  %s1 = inlined_call_operand.vmem [shape: f32[2,16,16,128], index: 1, kind: input, shape index: {}]
  %s2 = inlined_call_operand.vmem [shape: f32[1,128], index: 2, kind: input, shape index: {}]
  %s3 = inlined_call_operand.vmem [shape: f32[1,128], index: 3, kind: input, shape index: {}]
  %s4 = inlined_call_operand.vmem [shape: f32[2,16,16,128], index: 4, kind: output, shape index: {}]
  %s5 = sld [smem:[#allocation0]]
  $region49: #{residual_forward.5} parent=0
    _
  %s7 = ssub.s32 1, %s5
  %s8 = scalar_select 0, %s7, %s5
  loop: start=0, step=1, limit=4
  $region2: #{residual_forward.5} parent=0 // loop_pre_header
    _
  $region3: #{residual_forward.5} parent=0 // loop_header
    %s10 = sphi 0, %s14
    %p11 = scmp.ge.s32.totalorder %s10, 4
    %s20 = sphi 0, %s22
    %s23 = sphi 0, %s20
    %s24 = sphi 0, %s23
    %s40 = sphi 0, %s24
    %s46 = sphi 0, %s48
    %s49 = sphi 0, %s46
    %s50 = sphi 0, %s49
    %s66 = sphi 0, %s50
    %s70 = sphi 0, %s70
    %s72 = sphi 0, %s70
    %s73 = sphi 0, %s72
    %s87 = sphi 0, %s73
    %s91 = sphi 0, %s91
    %s93 = sphi 0, %s91
    %s94 = sphi 0, %s93
    %s108 = sphi 0, %s94
    %s114 = sphi 0, %s116
    %s117 = sphi 0, %s114
    %s118 = sphi 0, %s117
    %s134 = sphi 0, %s118
  $region4: #{residual_forward.5} parent=0 // loop_header_branch
    %13 = sbr.rel (%p11) target = $region8
  $region5: #{residual_forward.5} parent=0 // loop_body
    %s15 = ssub.s32 %s10, 1
    %s16 = ssub.s32 %s10, 2
    %s17 = sadd.s32 %s10, 1
    %s18 = ssub.s32 %s10, %s17
    %p19 = scmp.eq.s32.totalorder %s18, 0
    %s21 = sadd.s32 %s20, 1
    %s22 = scalar_select %p19, %s20, %s21
    %p25 = pneg %p19
    %p26 = scmp.eq.s32.totalorder %s10, 1
    %p27 = por %p25, %p26
    %p28 = scmp.ne.s32.totalorder %s20, %s23
    %p29 = scmp.eq.s32.totalorder %s10, 0
    %p30 = por %p28, %p29
    %p31 = scmp.ne.s32.totalorder %s20, %s23
    %p32 = scmp.eq.s32.totalorder %s15, 1
    %p33 = por %p31, %p32
    %p34 = scmp.ne.s32.totalorder %s23, %s24
    %p35 = scmp.eq.s32.totalorder %s15, 0
    %p36 = por %p34, %p35
    %p37 = scmp.ne.s32.totalorder %s23, %s24
    %p38 = scmp.eq.s32.totalorder %s16, 1
    %p39 = por %p37, %p38
    %p41 = scmp.ne.s32.totalorder %s24, %s40
    %p42 = scmp.eq.s32.totalorder %s16, 0
    %p43 = por %p41, %p42
    %s44 = ssub.s32 %s10, %s17
    %p45 = scmp.eq.s32.totalorder %s44, 0
    %s47 = sadd.s32 %s46, 1
    %s48 = scalar_select %p45, %s46, %s47
    %p51 = pneg %p45
    %p52 = scmp.eq.s32.totalorder %s10, 1
    %p53 = por %p51, %p52
    %p54 = scmp.ne.s32.totalorder %s46, %s49
    %p55 = scmp.eq.s32.totalorder %s10, 0
    %p56 = por %p54, %p55
    %p57 = scmp.ne.s32.totalorder %s46, %s49
    %p58 = scmp.eq.s32.totalorder %s15, 1
    %p59 = por %p57, %p58
    %p60 = scmp.ne.s32.totalorder %s49, %s50
    %p61 = scmp.eq.s32.totalorder %s15, 0
    %p62 = por %p60, %p61
    %p63 = scmp.ne.s32.totalorder %s49, %s50
    %p64 = scmp.eq.s32.totalorder %s16, 1
    %p65 = por %p63, %p64
    %p67 = scmp.ne.s32.totalorder %s50, %s66
    %p68 = scmp.eq.s32.totalorder %s16, 0
    %p69 = por %p67, %p68
    %s71 = sadd.s32 %s70, 1
    %p74 = scmp.eq.s32.totalorder %s10, 1
    %p75 = scmp.ne.s32.totalorder %s70, %s72
    %p76 = scmp.eq.s32.totalorder %s10, 0
    %p77 = por %p75, %p76
    %p78 = scmp.ne.s32.totalorder %s70, %s72
    %p79 = scmp.eq.s32.totalorder %s15, 1
    %p80 = por %p78, %p79
    %p81 = scmp.ne.s32.totalorder %s72, %s73
    %p82 = scmp.eq.s32.totalorder %s15, 0
    %p83 = por %p81, %p82
    %p84 = scmp.ne.s32.totalorder %s72, %s73
    %p85 = scmp.eq.s32.totalorder %s16, 1
    %p86 = por %p84, %p85
    %p88 = scmp.ne.s32.totalorder %s73, %s87
    %p89 = scmp.eq.s32.totalorder %s16, 0
    %p90 = por %p88, %p89
    %s92 = sadd.s32 %s91, 1
    %p95 = scmp.eq.s32.totalorder %s10, 1
    %p96 = scmp.ne.s32.totalorder %s91, %s93
    %p97 = scmp.eq.s32.totalorder %s10, 0
    %p98 = por %p96, %p97
    %p99 = scmp.ne.s32.totalorder %s91, %s93
    %p100 = scmp.eq.s32.totalorder %s15, 1
    %p101 = por %p99, %p100
    %p102 = scmp.ne.s32.totalorder %s93, %s94
    %p103 = scmp.eq.s32.totalorder %s15, 0
    %p104 = por %p102, %p103
    %p105 = scmp.ne.s32.totalorder %s93, %s94
    %p106 = scmp.eq.s32.totalorder %s16, 1
    %p107 = por %p105, %p106
    %p109 = scmp.ne.s32.totalorder %s94, %s108
    %p110 = scmp.eq.s32.totalorder %s16, 0
    %p111 = por %p109, %p110
    %s112 = ssub.s32 %s10, %s17
    %p113 = scmp.eq.s32.totalorder %s112, 0
    %s115 = sadd.s32 %s114, 1
    %s116 = scalar_select %p113, %s114, %s115
    %p119 = pneg %p113
    %p120 = scmp.eq.s32.totalorder %s10, 1
    %p121 = por %p119, %p120
    %p122 = scmp.ne.s32.totalorder %s114, %s117
    %p123 = scmp.eq.s32.totalorder %s10, 0
    %p124 = por %p122, %p123
    %p125 = scmp.ne.s32.totalorder %s114, %s117
    %p126 = scmp.eq.s32.totalorder %s15, 1
    %p127 = por %p125, %p126
    %p128 = scmp.ne.s32.totalorder %s117, %s118
    %p129 = scmp.eq.s32.totalorder %s15, 0
    %p130 = por %p128, %p129
    %p131 = scmp.ne.s32.totalorder %s117, %s118
    %p132 = scmp.eq.s32.totalorder %s16, 1
    %p133 = por %p131, %p132
    %p135 = scmp.ne.s32.totalorder %s118, %s134
    %p136 = scmp.eq.s32.totalorder %s16, 0
    %p137 = por %p135, %p136
    %p138 = scmp.le.s32.totalorder 1, %s10
    %p139 = scmp.lt.s32.totalorder %s10, 3
    %p140 = pnand %p138, %p139
    %p141 = pneg %p140
    // Predicated region
    $region9: #{residual_forward.5} parent=5 // pred_check
      _
    $region10: #{residual_forward.5} parent=5 // pred_check_branch
      %143 = sbr.rel (%p140) target = $region12
    $region11: #{residual_forward.5} parent=5 // pred_region
      %s144 = ssub.s32 %s10, 1
      // Predicated region
      $region13: #{residual_forward.5} parent=11 // pred_check
        %p145 = pneg %p83
      $region14: #{residual_forward.5} parent=11 // pred_check_branch
        %147 = sbr.rel (%p145) target = $region16
      $region15: #{residual_forward.5} parent=11 // pred_region
        _
      $region16: #{residual_forward.5} parent=11 // pred_fallthru
        _
      // Predicated region
      $region17: #{residual_forward.5} parent=11 // pred_check
        %p148 = pneg %p104
      $region18: #{residual_forward.5} parent=11 // pred_check_branch
        %150 = sbr.rel (%p148) target = $region20
      $region19: #{residual_forward.5} parent=11 // pred_region
        _
      $region20: #{residual_forward.5} parent=11 // pred_fallthru
        _
    $region12: #{residual_forward.5} parent=5 // pred_fallthru
      _
    %p151 = scmp.lt.s32.totalorder %s10, 2
    // Predicated region
    $region21: #{residual_forward.5} parent=5 // pred_check
      %p152 = pneg %p151
    $region22: #{residual_forward.5} parent=5 // pred_check_branch
      %154 = sbr.rel (%p152) target = $region24
    $region23: #{residual_forward.5} parent=5 // pred_region
      // Predicated region
      $region25: #{residual_forward.5} parent=23 // pred_check
        %p155 = pneg %p30
      $region26: #{residual_forward.5} parent=23 // pred_check_branch
        %157 = sbr.rel (%p155) target = $region28
      $region27: #{residual_forward.5} parent=23 // pred_region
        %p158 = scmp.lt.s32.totalorder %s10, 1
        %s159 = scalar_select %p158, %s10, 1
        %s160 = smul.addr %s159, 32
        %s161 = smul.addr %s160, 8
        %s162 = scalar_lea.vmem %s0, %s161
      $region28: #{residual_forward.5} parent=23 // pred_fallthru
        _
      // Predicated region
      $region29: #{residual_forward.5} parent=23 // pred_check
        %p163 = pneg %p56
      $region30: #{residual_forward.5} parent=23 // pred_check_branch
        %165 = sbr.rel (%p163) target = $region32
      $region31: #{residual_forward.5} parent=23 // pred_region
        %p166 = scmp.lt.s32.totalorder %s10, 1
        %s167 = scalar_select %p166, %s10, 1
        %s168 = smul.addr %s167, 32
        %s169 = smul.addr %s168, 8
        %s170 = scalar_lea.vmem %s1, %s169
      $region32: #{residual_forward.5} parent=23 // pred_fallthru
        _
    $region24: #{residual_forward.5} parent=5 // pred_fallthru
      _
    %p171 = scmp.le.s32.totalorder 1, %s10
    %p172 = scmp.lt.s32.totalorder %s10, 3
    %p173 = pnand %p171, %p172
    %p174 = pneg %p173
    // Predicated region
    $region33: #{residual_forward.5} parent=5 // pred_check
      _
    $region34: #{residual_forward.5} parent=5 // pred_check_branch
      %176 = sbr.rel (%p173) target = $region36
    $region35: #{residual_forward.5} parent=5 // pred_region
      %s177 = ssub.s32 %s10, 1
      %p178 = scmp.lt.s32.totalorder %s15, 1
      %s179 = scalar_select %p178, %s15, 1
      %s180 = smul.addr %s179, 32
      %s181 = smul.addr %s180, 8
      %s182 = scalar_lea.vmem %s0, %s181
      %p183 = pneg %p36
      %p184 = pneg %p33
      %p185 = scmp.lt.s32.totalorder %s15, 1
      %s186 = scalar_select %p185, %s15, 1
      %s187 = smul.addr %s186, 32
      %s188 = smul.addr %s187, 8
      %s189 = scalar_lea.vmem %s1, %s188
      %p190 = pneg %p62
      %p191 = pneg %p59
      %p192 = pneg %p83
      %p193 = pneg %p80
      %p194 = pneg %p104
      %p195 = pneg %p101
      %p196 = pneg %p130
      %p197 = pneg %p127
      %p198 = scmp.lt.s32.totalorder %s15, 1
      %s199 = scalar_select %p198, %s15, 1
      %s200 = smul.addr %s199, 32
      %s201 = smul.addr %s200, 8
      %s202 = scalar_lea.vmem %s4, %s201
      %p203 = scmp.lt.s32.totalorder %s15, 1
      %s204 = scalar_select %p203, %s15, 1
      %s205 = smul.addr %s204, 32
      %s206 = smul.addr %s205, 8
      %s207 = scalar_lea.vmem %s0, %s206
      %p208 = scmp.lt.s32.totalorder %s15, 1
      %s209 = scalar_select %p208, %s15, 1
      %s210 = smul.addr %s209, 32
      %s211 = smul.addr %s210, 8
      %s212 = scalar_lea.vmem %s1, %s211
      %p213 = scmp.lt.s32.totalorder %s15, 1
      %s214 = scalar_select %p213, %s15, 1
      %s215 = smul.addr %s214, 32
      %s216 = smul.addr %s215, 8
      %s217 = scalar_lea.vmem %s4, %s216
      %v218 = vld [vmem:[%s207] sm:$0xff]
      %v219 = vld [vmem:[%s207 + $0x8] sm:$0xff]
      %v220 = vld [vmem:[%s207 + $0x10] sm:$0xff]
      %v221 = vld [vmem:[%s207 + $0x18] sm:$0xff]
      %v222 = vld [vmem:[%s207 + $0x20] sm:$0xff]
      %v223 = vld [vmem:[%s207 + $0x28] sm:$0xff]
      %v224 = vld [vmem:[%s207 + $0x30] sm:$0xff]
      %v225 = vld [vmem:[%s207 + $0x38] sm:$0xff]
      %v226 = vld [vmem:[%s207 + $0x40] sm:$0xff]
      %v227 = vld [vmem:[%s207 + $0x48] sm:$0xff]
      %v228 = vld [vmem:[%s207 + $0x50] sm:$0xff]
      %v229 = vld [vmem:[%s207 + $0x58] sm:$0xff]
      %v230 = vld [vmem:[%s207 + $0x60] sm:$0xff]
      %v231 = vld [vmem:[%s207 + $0x68] sm:$0xff]
      %v232 = vld [vmem:[%s207 + $0x70] sm:$0xff]
      %v233 = vld [vmem:[%s207 + $0x78] sm:$0xff]
      %v234 = vld [vmem:[%s207 + $0x80] sm:$0xff]
      %v235 = vld [vmem:[%s207 + $0x88] sm:$0xff]
      %v236 = vld [vmem:[%s207 + $0x90] sm:$0xff]
      %v237 = vld [vmem:[%s207 + $0x98] sm:$0xff]
      %v238 = vld [vmem:[%s207 + $0xa0] sm:$0xff]
      %v239 = vld [vmem:[%s207 + $0xa8] sm:$0xff]
      %v240 = vld [vmem:[%s207 + $0xb0] sm:$0xff]
      %v241 = vld [vmem:[%s207 + $0xb8] sm:$0xff]
      %v242 = vld [vmem:[%s207 + $0xc0] sm:$0xff]
      %v243 = vld [vmem:[%s207 + $0xc8] sm:$0xff]
      %v244 = vld [vmem:[%s207 + $0xd0] sm:$0xff]
      %v245 = vld [vmem:[%s207 + $0xd8] sm:$0xff]
      %v246 = vld [vmem:[%s207 + $0xe0] sm:$0xff]
      %v247 = vld [vmem:[%s207 + $0xe8] sm:$0xff]
      %v248 = vld [vmem:[%s207 + $0xf0] sm:$0xff]
      %v249 = vld [vmem:[%s207 + $0xf8] sm:$0xff]
      %v250 = vld [vmem:[%s2] sm:$0x1]
      %v252 = vperm.slane %v250, 0
      %v254 = vmul.f32 %v218, %v252
      %v255 = vmul.f32 %v219, %v252
      %v256 = vmul.f32 %v220, %v252
      %v257 = vmul.f32 %v221, %v252
      %v258 = vmul.f32 %v222, %v252
      %v259 = vmul.f32 %v223, %v252
      %v260 = vmul.f32 %v224, %v252
      %v261 = vmul.f32 %v225, %v252
      %v262 = vmul.f32 %v226, %v252
      %v263 = vmul.f32 %v227, %v252
      %v264 = vmul.f32 %v228, %v252
      %v265 = vmul.f32 %v229, %v252
      %v266 = vmul.f32 %v230, %v252
      %v267 = vmul.f32 %v231, %v252
      %v268 = vmul.f32 %v232, %v252
      %v269 = vmul.f32 %v233, %v252
      %v270 = vmul.f32 %v234, %v252
      %v271 = vmul.f32 %v235, %v252
      %v272 = vmul.f32 %v236, %v252
      %v273 = vmul.f32 %v237, %v252
      %v274 = vmul.f32 %v238, %v252
      %v275 = vmul.f32 %v239, %v252
      %v276 = vmul.f32 %v240, %v252
      %v277 = vmul.f32 %v241, %v252
      %v278 = vmul.f32 %v242, %v252
      %v279 = vmul.f32 %v243, %v252
      %v280 = vmul.f32 %v244, %v252
      %v281 = vmul.f32 %v245, %v252
      %v282 = vmul.f32 %v246, %v252
      %v283 = vmul.f32 %v247, %v252
      %v284 = vmul.f32 %v248, %v252
      %v285 = vmul.f32 %v249, %v252
      %v286 = vld [vmem:[%s3] sm:$0x1]
      %v288 = vperm.slane %v286, 0
      %v290 = vadd.f32 %v254, %v288
      %v291 = vadd.f32 %v255, %v288
      %v292 = vadd.f32 %v256, %v288
      %v293 = vadd.f32 %v257, %v288
      %v294 = vadd.f32 %v258, %v288
      %v295 = vadd.f32 %v259, %v288
      %v296 = vadd.f32 %v260, %v288
      %v297 = vadd.f32 %v261, %v288
      %v298 = vadd.f32 %v262, %v288
      %v299 = vadd.f32 %v263, %v288
      %v300 = vadd.f32 %v264, %v288
      %v301 = vadd.f32 %v265, %v288
      %v302 = vadd.f32 %v266, %v288
      %v303 = vadd.f32 %v267, %v288
      %v304 = vadd.f32 %v268, %v288
      %v305 = vadd.f32 %v269, %v288
      %v306 = vadd.f32 %v270, %v288
      %v307 = vadd.f32 %v271, %v288
      %v308 = vadd.f32 %v272, %v288
      %v309 = vadd.f32 %v273, %v288
      %v310 = vadd.f32 %v274, %v288
      %v311 = vadd.f32 %v275, %v288
      %v312 = vadd.f32 %v276, %v288
      %v313 = vadd.f32 %v277, %v288
      %v314 = vadd.f32 %v278, %v288
      %v315 = vadd.f32 %v279, %v288
      %v316 = vadd.f32 %v280, %v288
      %v317 = vadd.f32 %v281, %v288
      %v318 = vadd.f32 %v282, %v288
      %v319 = vadd.f32 %v283, %v288
      %v320 = vadd.f32 %v284, %v288
      %v321 = vadd.f32 %v285, %v288
      %v322 = vld [vmem:[%s212] sm:$0xff]
      %v323 = vld [vmem:[%s212 + $0x8] sm:$0xff]
      %v324 = vld [vmem:[%s212 + $0x10] sm:$0xff]
      %v325 = vld [vmem:[%s212 + $0x18] sm:$0xff]
      %v326 = vld [vmem:[%s212 + $0x20] sm:$0xff]
      %v327 = vld [vmem:[%s212 + $0x28] sm:$0xff]
      %v328 = vld [vmem:[%s212 + $0x30] sm:$0xff]
      %v329 = vld [vmem:[%s212 + $0x38] sm:$0xff]
      %v330 = vld [vmem:[%s212 + $0x40] sm:$0xff]
      %v331 = vld [vmem:[%s212 + $0x48] sm:$0xff]
      %v332 = vld [vmem:[%s212 + $0x50] sm:$0xff]
      %v333 = vld [vmem:[%s212 + $0x58] sm:$0xff]
      %v334 = vld [vmem:[%s212 + $0x60] sm:$0xff]
      %v335 = vld [vmem:[%s212 + $0x68] sm:$0xff]
      %v336 = vld [vmem:[%s212 + $0x70] sm:$0xff]
      %v337 = vld [vmem:[%s212 + $0x78] sm:$0xff]
      %v338 = vld [vmem:[%s212 + $0x80] sm:$0xff]
      %v339 = vld [vmem:[%s212 + $0x88] sm:$0xff]
      %v340 = vld [vmem:[%s212 + $0x90] sm:$0xff]
      %v341 = vld [vmem:[%s212 + $0x98] sm:$0xff]
      %v342 = vld [vmem:[%s212 + $0xa0] sm:$0xff]
      %v343 = vld [vmem:[%s212 + $0xa8] sm:$0xff]
      %v344 = vld [vmem:[%s212 + $0xb0] sm:$0xff]
      %v345 = vld [vmem:[%s212 + $0xb8] sm:$0xff]
      %v346 = vld [vmem:[%s212 + $0xc0] sm:$0xff]
      %v347 = vld [vmem:[%s212 + $0xc8] sm:$0xff]
      %v348 = vld [vmem:[%s212 + $0xd0] sm:$0xff]
      %v349 = vld [vmem:[%s212 + $0xd8] sm:$0xff]
      %v350 = vld [vmem:[%s212 + $0xe0] sm:$0xff]
      %v351 = vld [vmem:[%s212 + $0xe8] sm:$0xff]
      %v352 = vld [vmem:[%s212 + $0xf0] sm:$0xff]
      %v353 = vld [vmem:[%s212 + $0xf8] sm:$0xff]
      %v354 = vadd.f32 %v290, %v322
      %v355 = vadd.f32 %v291, %v323
      %v356 = vadd.f32 %v292, %v324
      %v357 = vadd.f32 %v293, %v325
      %v358 = vadd.f32 %v294, %v326
      %v359 = vadd.f32 %v295, %v327
      %v360 = vadd.f32 %v296, %v328
      %v361 = vadd.f32 %v297, %v329
      %v362 = vadd.f32 %v298, %v330
      %v363 = vadd.f32 %v299, %v331
      %v364 = vadd.f32 %v300, %v332
      %v365 = vadd.f32 %v301, %v333
      %v366 = vadd.f32 %v302, %v334
      %v367 = vadd.f32 %v303, %v335
      %v368 = vadd.f32 %v304, %v336
      %v369 = vadd.f32 %v305, %v337
      %v370 = vadd.f32 %v306, %v338
      %v371 = vadd.f32 %v307, %v339
      %v372 = vadd.f32 %v308, %v340
      %v373 = vadd.f32 %v309, %v341
      %v374 = vadd.f32 %v310, %v342
      %v375 = vadd.f32 %v311, %v343
      %v376 = vadd.f32 %v312, %v344
      %v377 = vadd.f32 %v313, %v345
      %v378 = vadd.f32 %v314, %v346
      %v379 = vadd.f32 %v315, %v347
      %v380 = vadd.f32 %v316, %v348
      %v381 = vadd.f32 %v317, %v349
      %v382 = vadd.f32 %v318, %v350
      %v383 = vadd.f32 %v319, %v351
      %v384 = vadd.f32 %v320, %v352
      %v385 = vadd.f32 %v321, %v353
      %v386 = vmax.f32 %v354, 0.0
      %v387 = vmax.f32 %v355, 0.0
      %v388 = vmax.f32 %v356, 0.0
      %v389 = vmax.f32 %v357, 0.0
      %v390 = vmax.f32 %v358, 0.0
      %v391 = vmax.f32 %v359, 0.0
      %v392 = vmax.f32 %v360, 0.0
      %v393 = vmax.f32 %v361, 0.0
      %v394 = vmax.f32 %v362, 0.0
      %v395 = vmax.f32 %v363, 0.0
      %v396 = vmax.f32 %v364, 0.0
      %v397 = vmax.f32 %v365, 0.0
      %v398 = vmax.f32 %v366, 0.0
      %v399 = vmax.f32 %v367, 0.0
      %v400 = vmax.f32 %v368, 0.0
      %v401 = vmax.f32 %v369, 0.0
      %v402 = vmax.f32 %v370, 0.0
      %v403 = vmax.f32 %v371, 0.0
      %v404 = vmax.f32 %v372, 0.0
      %v405 = vmax.f32 %v373, 0.0
      %v406 = vmax.f32 %v374, 0.0
      %v407 = vmax.f32 %v375, 0.0
      %v408 = vmax.f32 %v376, 0.0
      %v409 = vmax.f32 %v377, 0.0
      %v410 = vmax.f32 %v378, 0.0
      %v411 = vmax.f32 %v379, 0.0
      %v412 = vmax.f32 %v380, 0.0
      %v413 = vmax.f32 %v381, 0.0
      %v414 = vmax.f32 %v382, 0.0
      %v415 = vmax.f32 %v383, 0.0
      %v416 = vmax.f32 %v384, 0.0
      %v417 = vmax.f32 %v385, 0.0
      %418 = vst [vmem:[%s217] sm:$0xff] %v386
      %419 = vst [vmem:[%s217 + $0x8] sm:$0xff] %v387
      %420 = vst [vmem:[%s217 + $0x10] sm:$0xff] %v388
      %421 = vst [vmem:[%s217 + $0x18] sm:$0xff] %v389
      %422 = vst [vmem:[%s217 + $0x20] sm:$0xff] %v390
      %423 = vst [vmem:[%s217 + $0x28] sm:$0xff] %v391
      %424 = vst [vmem:[%s217 + $0x30] sm:$0xff] %v392
      %425 = vst [vmem:[%s217 + $0x38] sm:$0xff] %v393
      %426 = vst [vmem:[%s217 + $0x40] sm:$0xff] %v394
      %427 = vst [vmem:[%s217 + $0x48] sm:$0xff] %v395
      %428 = vst [vmem:[%s217 + $0x50] sm:$0xff] %v396
      %429 = vst [vmem:[%s217 + $0x58] sm:$0xff] %v397
      %430 = vst [vmem:[%s217 + $0x60] sm:$0xff] %v398
      %431 = vst [vmem:[%s217 + $0x68] sm:$0xff] %v399
      %432 = vst [vmem:[%s217 + $0x70] sm:$0xff] %v400
      %433 = vst [vmem:[%s217 + $0x78] sm:$0xff] %v401
      %434 = vst [vmem:[%s217 + $0x80] sm:$0xff] %v402
      %435 = vst [vmem:[%s217 + $0x88] sm:$0xff] %v403
      %436 = vst [vmem:[%s217 + $0x90] sm:$0xff] %v404
      %437 = vst [vmem:[%s217 + $0x98] sm:$0xff] %v405
      %438 = vst [vmem:[%s217 + $0xa0] sm:$0xff] %v406
      %439 = vst [vmem:[%s217 + $0xa8] sm:$0xff] %v407
      %440 = vst [vmem:[%s217 + $0xb0] sm:$0xff] %v408
      %441 = vst [vmem:[%s217 + $0xb8] sm:$0xff] %v409
      %442 = vst [vmem:[%s217 + $0xc0] sm:$0xff] %v410
      %443 = vst [vmem:[%s217 + $0xc8] sm:$0xff] %v411
      %444 = vst [vmem:[%s217 + $0xd0] sm:$0xff] %v412
      %445 = vst [vmem:[%s217 + $0xd8] sm:$0xff] %v413
      %446 = vst [vmem:[%s217 + $0xe0] sm:$0xff] %v414
      %447 = vst [vmem:[%s217 + $0xe8] sm:$0xff] %v415
      %448 = vst [vmem:[%s217 + $0xf0] sm:$0xff] %v416
      %449 = vst [vmem:[%s217 + $0xf8] sm:$0xff] %v417
      %p450 = scmp.lt.s32.totalorder %s15, 1
      %s451 = scalar_select %p450, %s15, 1
      %s452 = smul.addr %s451, 32
      %s453 = smul.addr %s452, 8
      %s454 = scalar_lea.vmem %s4, %s453
      // Predicated region
      $region37: #{residual_forward.5} parent=35 // pred_check
        %p455 = pneg %p127
      $region38: #{residual_forward.5} parent=35 // pred_check_branch
        %457 = sbr.rel (%p455) target = $region40
      $region39: #{residual_forward.5} parent=35 // pred_region
        _
      $region40: #{residual_forward.5} parent=35 // pred_fallthru
        _
    $region36: #{residual_forward.5} parent=5 // pred_fallthru
      _
    %p458 = scmp.le.s32.totalorder 2, %s10
    // Predicated region
    $region41: #{residual_forward.5} parent=5 // pred_check
      %p459 = pneg %p458
    $region42: #{residual_forward.5} parent=5 // pred_check_branch
      %461 = sbr.rel (%p459) target = $region44
    $region43: #{residual_forward.5} parent=5 // pred_region
      %s462 = ssub.s32 %s10, 2
      // Predicated region
      $region45: #{residual_forward.5} parent=43 // pred_check
        %p463 = pneg %p133
      $region46: #{residual_forward.5} parent=43 // pred_check_branch
        %465 = sbr.rel (%p463) target = $region48
      $region47: #{residual_forward.5} parent=43 // pred_region
        %p466 = scmp.lt.s32.totalorder %s16, 1
        %s467 = scalar_select %p466, %s16, 1
        %s468 = smul.addr %s467, 32
        %s469 = smul.addr %s468, 8
        %s470 = scalar_lea.vmem %s4, %s469
      $region48: #{residual_forward.5} parent=43 // pred_fallthru
        _
    $region44: #{residual_forward.5} parent=5 // pred_fallthru
      _
  $region6: #{residual_forward.5} parent=0 // loop_footer
    %s14 = sadd.s32 1, %s10
  $region7: #{residual_forward.5} parent=0 // loop_footer_branch
    %9 = sbr.rel target = $region3
  $region8: #{residual_forward.5} parent=0 // loop_exit
    _

// kernel: residual_forward.3
$region0: #{residual_forward.3}
  #allocation0 [shape = 'u32[]', space=smem, size = 0x4, offset = 0x4, fixed_abs, tag = 'smem constant byte address 0x4 - core index']
  #allocation1 [shape = 'u32[72,128]{1,0:T(1,128)}', space=vmem, size = 0x9000, scoped, tag = 'internal scratch']
  #allocation2 [shape = 'f32[18,32,128]{2,1,0:T(8,128)}', space=vmem, size = 0x48000, scoped, tag = 'scratch operand']
  %s0 = inlined_call_operand.vmem [shape: f32[2,16,16,128], index: 0, kind: input, shape index: {}]
  %s1 = inlined_call_operand.vmem [shape: f32[1152,128], index: 1, kind: input, shape index: {}]
  %s2 = inlined_call_operand.vmem [shape: f32[2,16,16,128], index: 2, kind: output, shape index: {0}]
  %s3 = inlined_call_operand.vmem [shape: f32[2,2,128], index: 3, kind: output, shape index: {1}]
  %4 = xla_tuple %s2, %s3
  %s5 = sld [smem:[#allocation0]]
  $region49: #{residual_forward.3} parent=0
    _
  %s7 = ssub.s32 1, %s5
  %s8 = scalar_select 0, %s7, %s5
  loop: start=0, step=1, limit=4
  $region2: #{residual_forward.3} parent=0 // loop_pre_header
    _
  $region3: #{residual_forward.3} parent=0 // loop_header
    %s10 = sphi 0, %s14
    %p11 = scmp.ge.s32.totalorder %s10, 4
    %s20 = sphi 0, %s22
    %s23 = sphi 0, %s20
    %s24 = sphi 0, %s23
    %s40 = sphi 0, %s24
    %s44 = sphi 0, %s44
    %s46 = sphi 0, %s44
    %s47 = sphi 0, %s46
    %s61 = sphi 0, %s47
    %s67 = sphi 0, %s69
    %s70 = sphi 0, %s67
    %s71 = sphi 0, %s70
    %s87 = sphi 0, %s71
    %s93 = sphi 0, %s95
    %s96 = sphi 0, %s93
    %s97 = sphi 0, %s96
    %s113 = sphi 0, %s97
  $region4: #{residual_forward.3} parent=0 // loop_header_branch
    %13 = sbr.rel (%p11) target = $region8
  $region5: #{residual_forward.3} parent=0 // loop_body
    %s15 = ssub.s32 %s10, 1
    %s16 = ssub.s32 %s10, 2
    %s17 = sadd.s32 %s10, 1
    %s18 = ssub.s32 %s10, %s17
    %p19 = scmp.eq.s32.totalorder %s18, 0
    %s21 = sadd.s32 %s20, 1
    %s22 = scalar_select %p19, %s20, %s21
    %p25 = pneg %p19
    %p26 = scmp.eq.s32.totalorder %s10, 1
    %p27 = por %p25, %p26
    %p28 = scmp.ne.s32.totalorder %s20, %s23
    %p29 = scmp.eq.s32.totalorder %s10, 0
    %p30 = por %p28, %p29
    %p31 = scmp.ne.s32.totalorder %s20, %s23
    %p32 = scmp.eq.s32.totalorder %s15, 1
    %p33 = por %p31, %p32
    %p34 = scmp.ne.s32.totalorder %s23, %s24
    %p35 = scmp.eq.s32.totalorder %s15, 0
    %p36 = por %p34, %p35
    %p37 = scmp.ne.s32.totalorder %s23, %s24
    %p38 = scmp.eq.s32.totalorder %s16, 1
    %p39 = por %p37, %p38
    %p41 = scmp.ne.s32.totalorder %s24, %s40
    %p42 = scmp.eq.s32.totalorder %s16, 0
    %p43 = por %p41, %p42
    %s45 = sadd.s32 %s44, 1
    %p48 = scmp.eq.s32.totalorder %s10, 1
    %p49 = scmp.ne.s32.totalorder %s44, %s46
    %p50 = scmp.eq.s32.totalorder %s10, 0
    %p51 = por %p49, %p50
    %p52 = scmp.ne.s32.totalorder %s44, %s46
    %p53 = scmp.eq.s32.totalorder %s15, 1
    %p54 = por %p52, %p53
    %p55 = scmp.ne.s32.totalorder %s46, %s47
    %p56 = scmp.eq.s32.totalorder %s15, 0
    %p57 = por %p55, %p56
    %p58 = scmp.ne.s32.totalorder %s46, %s47
    %p59 = scmp.eq.s32.totalorder %s16, 1
    %p60 = por %p58, %p59
    %p62 = scmp.ne.s32.totalorder %s47, %s61
    %p63 = scmp.eq.s32.totalorder %s16, 0
    %p64 = por %p62, %p63
    %s65 = ssub.s32 %s10, %s17
    %p66 = scmp.eq.s32.totalorder %s65, 0
    %s68 = sadd.s32 %s67, 1
    %s69 = scalar_select %p66, %s67, %s68
    %p72 = pneg %p66
    %p73 = scmp.eq.s32.totalorder %s10, 1
    %p74 = por %p72, %p73
    %p75 = scmp.ne.s32.totalorder %s67, %s70
    %p76 = scmp.eq.s32.totalorder %s10, 0
    %p77 = por %p75, %p76
    %p78 = scmp.ne.s32.totalorder %s67, %s70
    %p79 = scmp.eq.s32.totalorder %s15, 1
    %p80 = por %p78, %p79
    %p81 = scmp.ne.s32.totalorder %s70, %s71
    %p82 = scmp.eq.s32.totalorder %s15, 0
    %p83 = por %p81, %p82
    %p84 = scmp.ne.s32.totalorder %s70, %s71
    %p85 = scmp.eq.s32.totalorder %s16, 1
    %p86 = por %p84, %p85
    %p88 = scmp.ne.s32.totalorder %s71, %s87
    %p89 = scmp.eq.s32.totalorder %s16, 0
    %p90 = por %p88, %p89
    %s91 = ssub.s32 %s10, %s17
    %p92 = scmp.eq.s32.totalorder %s91, 0
    %s94 = sadd.s32 %s93, 1
    %s95 = scalar_select %p92, %s93, %s94
    %p98 = pneg %p92
    %p99 = scmp.eq.s32.totalorder %s10, 1
    %p100 = por %p98, %p99
    %p101 = scmp.ne.s32.totalorder %s93, %s96
    %p102 = scmp.eq.s32.totalorder %s10, 0
    %p103 = por %p101, %p102
    %p104 = scmp.ne.s32.totalorder %s93, %s96
    %p105 = scmp.eq.s32.totalorder %s15, 1
    %p106 = por %p104, %p105
    %p107 = scmp.ne.s32.totalorder %s96, %s97
    %p108 = scmp.eq.s32.totalorder %s15, 0
    %p109 = por %p107, %p108
    %p110 = scmp.ne.s32.totalorder %s96, %s97
    %p111 = scmp.eq.s32.totalorder %s16, 1
    %p112 = por %p110, %p111
    %p114 = scmp.ne.s32.totalorder %s97, %s113
    %p115 = scmp.eq.s32.totalorder %s16, 0
    %p116 = por %p114, %p115
    %p117 = scmp.le.s32.totalorder 1, %s10
    %p118 = scmp.lt.s32.totalorder %s10, 3
    %p119 = pnand %p117, %p118
    %p120 = pneg %p119
    // Predicated region
    $region9: #{residual_forward.3} parent=5 // pred_check
      _
    $region10: #{residual_forward.3} parent=5 // pred_check_branch
      %122 = sbr.rel (%p119) target = $region12
    $region11: #{residual_forward.3} parent=5 // pred_region
      %s123 = ssub.s32 %s10, 1
      // Predicated region
      $region13: #{residual_forward.3} parent=11 // pred_check
        %p124 = pneg %p57
      $region14: #{residual_forward.3} parent=11 // pred_check_branch
        %126 = sbr.rel (%p124) target = $region16
      $region15: #{residual_forward.3} parent=11 // pred_region
        _
      $region16: #{residual_forward.3} parent=11 // pred_fallthru
        _
    $region12: #{residual_forward.3} parent=5 // pred_fallthru
      _
    %p127 = scmp.lt.s32.totalorder %s10, 2
    // Predicated region
    $region17: #{residual_forward.3} parent=5 // pred_check
      %p128 = pneg %p127
    $region18: #{residual_forward.3} parent=5 // pred_check_branch
      %130 = sbr.rel (%p128) target = $region20
    $region19: #{residual_forward.3} parent=5 // pred_region
      // Predicated region
      $region21: #{residual_forward.3} parent=19 // pred_check
        %p131 = pneg %p30
      $region22: #{residual_forward.3} parent=19 // pred_check_branch
        %133 = sbr.rel (%p131) target = $region24
      $region23: #{residual_forward.3} parent=19 // pred_region
        %p134 = scmp.lt.s32.totalorder %s10, 1
        %s135 = scalar_select %p134, %s10, 1
        %s136 = smul.addr %s135, 32
        %s137 = smul.addr %s136, 8
        %s138 = scalar_lea.vmem %s0, %s137
      $region24: #{residual_forward.3} parent=19 // pred_fallthru
        _
    $region20: #{residual_forward.3} parent=5 // pred_fallthru
      _
    %p139 = scmp.le.s32.totalorder 1, %s10
    %p140 = scmp.lt.s32.totalorder %s10, 3
    %p141 = pnand %p139, %p140
    %p142 = pneg %p141
    // Predicated region
    $region25: #{residual_forward.3} parent=5 // pred_check
      _
    $region26: #{residual_forward.3} parent=5 // pred_check_branch
      %144 = sbr.rel (%p141) target = $region28
    $region27: #{residual_forward.3} parent=5 // pred_region
      %s145 = ssub.s32 %s10, 1
      %p146 = scmp.lt.s32.totalorder %s15, 1
      %s147 = scalar_select %p146, %s15, 1
      %s148 = smul.addr %s147, 32
      %s149 = smul.addr %s148, 8
      %s150 = scalar_lea.vmem %s0, %s149
      %p151 = pneg %p36
      %p152 = pneg %p33
      %p153 = pneg %p57
      %p154 = pneg %p54
      %p155 = pneg %p83
      %p156 = pneg %p80
      %p157 = scmp.lt.s32.totalorder %s15, 1
      %s158 = scalar_select %p157, %s15, 1
      %s159 = smul.addr %s158, 32
      %s160 = smul.addr %s159, 8
      %s161 = scalar_lea.vmem %s2, %s160
      %p162 = pneg %p109
      %p163 = pneg %p106
      %p164 = scmp.lt.s32.totalorder %s15, 1
      %s165 = scalar_select %p164, %s15, 1
      %s166 = smul.addr %s165, 2
      %s167 = scalar_lea.vmem %s3, %s166
      %p168 = scmp.lt.s32.totalorder %s15, 1
      %s169 = scalar_select %p168, %s15, 1
      %s170 = smul.addr %s169, 32
      %s171 = smul.addr %s170, 8
      %s172 = scalar_lea.vmem %s0, %s171
      %p173 = scmp.lt.s32.totalorder %s15, 1
      %s174 = scalar_select %p173, %s15, 1
      %s175 = smul.addr %s174, 32
      %s176 = smul.addr %s175, 8
      %s177 = scalar_lea.vmem %s2, %s176
      %p178 = scmp.lt.s32.totalorder %s15, 1
      %s179 = scalar_select %p178, %s15, 1
      %s180 = smul.addr %s179, 2
      %s181 = scalar_lea.vmem %s3, %s180
      %v182 = vld [vmem:[%s172] sm:$0xff]
      %v183 = vld [vmem:[%s172 + $0x8] sm:$0xff]
      %v184 = vld [vmem:[%s172 + $0x10] sm:$0xff]
      %v185 = vld [vmem:[%s172 + $0x18] sm:$0xff]
      %v186 = vld [vmem:[%s172 + $0x20] sm:$0xff]
      %v187 = vld [vmem:[%s172 + $0x28] sm:$0xff]
      %v188 = vld [vmem:[%s172 + $0x30] sm:$0xff]
      %v189 = vld [vmem:[%s172 + $0x38] sm:$0xff]
      %v190 = vld [vmem:[%s172 + $0x40] sm:$0xff]
      %v191 = vld [vmem:[%s172 + $0x48] sm:$0xff]
      %v192 = vld [vmem:[%s172 + $0x50] sm:$0xff]
      %v193 = vld [vmem:[%s172 + $0x58] sm:$0xff]
      %v194 = vld [vmem:[%s172 + $0x60] sm:$0xff]
      %v195 = vld [vmem:[%s172 + $0x68] sm:$0xff]
      %v196 = vld [vmem:[%s172 + $0x70] sm:$0xff]
      %v197 = vld [vmem:[%s172 + $0x78] sm:$0xff]
      %v198 = vld [vmem:[%s172 + $0x80] sm:$0xff]
      %v199 = vld [vmem:[%s172 + $0x88] sm:$0xff]
      %v200 = vld [vmem:[%s172 + $0x90] sm:$0xff]
      %v201 = vld [vmem:[%s172 + $0x98] sm:$0xff]
      %v202 = vld [vmem:[%s172 + $0xa0] sm:$0xff]
      %v203 = vld [vmem:[%s172 + $0xa8] sm:$0xff]
      %v204 = vld [vmem:[%s172 + $0xb0] sm:$0xff]
      %v205 = vld [vmem:[%s172 + $0xb8] sm:$0xff]
      %v206 = vld [vmem:[%s172 + $0xc0] sm:$0xff]
      %v207 = vld [vmem:[%s172 + $0xc8] sm:$0xff]
      %v208 = vld [vmem:[%s172 + $0xd0] sm:$0xff]
      %v209 = vld [vmem:[%s172 + $0xd8] sm:$0xff]
      %v210 = vld [vmem:[%s172 + $0xe0] sm:$0xff]
      %v211 = vld [vmem:[%s172 + $0xe8] sm:$0xff]
      %v212 = vld [vmem:[%s172 + $0xf0] sm:$0xff]
      %v213 = vld [vmem:[%s172 + $0xf8] sm:$0xff]
      %214 = vst [vmem:[#allocation2] sm:$0xff] 0.0
      %215 = vst [vmem:[#allocation2 + $0x8] sm:$0xff] 0.0
      %216 = vst [vmem:[#allocation2 + $0x10] sm:$0xff] 0.0
      %217 = vst [vmem:[#allocation2 + $0x18] sm:$0xff] 0.0
      %s218 = scalar_lea.vmem [#allocation2], 544
      %219 = vst [vmem:[%s218] sm:$0xff] 0.0
      %220 = vst [vmem:[%s218 + $0x8] sm:$0xff] 0.0
      %221 = vst [vmem:[%s218 + $0x10] sm:$0xff] 0.0
      %222 = vst [vmem:[%s218 + $0x18] sm:$0xff] 0.0
      %s223 = scalar_lea.vmem [#allocation2], 32
      %224 = vst [vmem:[%s223 + $0x7] sm:$0x1] 0.0
      %225 = vst [vmem:[%s223 + $0x27] sm:$0x1] 0.0
      %226 = vst [vmem:[%s223 + $0x47] sm:$0x1] 0.0
      %227 = vst [vmem:[%s223 + $0x67] sm:$0x1] 0.0
      %228 = vst [vmem:[%s223 + $0x87] sm:$0x1] 0.0
      %229 = vst [vmem:[%s223 + $0xa7] sm:$0x1] 0.0
      %230 = vst [vmem:[%s223 + $0xc7] sm:$0x1] 0.0
      %231 = vst [vmem:[%s223 + $0xe7] sm:$0x1] 0.0
      %232 = vst [vmem:[%s223 + $0x107] sm:$0x1] 0.0
      %233 = vst [vmem:[%s223 + $0x127] sm:$0x1] 0.0
      %234 = vst [vmem:[%s223 + $0x147] sm:$0x1] 0.0
      %235 = vst [vmem:[%s223 + $0x167] sm:$0x1] 0.0
      %236 = vst [vmem:[%s223 + $0x187] sm:$0x1] 0.0
      %237 = vst [vmem:[%s223 + $0x1a7] sm:$0x1] 0.0
      %238 = vst [vmem:[%s223 + $0x1c7] sm:$0x1] 0.0
      %239 = vst [vmem:[%s223 + $0x1e7] sm:$0x1] 0.0
      %240 = vst [vmem:[%s223 + $0x18] sm:$0x1] 0.0
      %241 = vst [vmem:[%s223 + $0x38] sm:$0x1] 0.0
      %242 = vst [vmem:[%s223 + $0x58] sm:$0x1] 0.0
      %243 = vst [vmem:[%s223 + $0x78] sm:$0x1] 0.0
      %244 = vst [vmem:[%s223 + $0x98] sm:$0x1] 0.0
      %245 = vst [vmem:[%s223 + $0xb8] sm:$0x1] 0.0
      %246 = vst [vmem:[%s223 + $0xd8] sm:$0x1] 0.0
      %247 = vst [vmem:[%s223 + $0xf8] sm:$0x1] 0.0
      %248 = vst [vmem:[%s223 + $0x118] sm:$0x1] 0.0
      %249 = vst [vmem:[%s223 + $0x138] sm:$0x1] 0.0
      %250 = vst [vmem:[%s223 + $0x158] sm:$0x1] 0.0
      %251 = vst [vmem:[%s223 + $0x178] sm:$0x1] 0.0
      %252 = vst [vmem:[%s223 + $0x198] sm:$0x1] 0.0
      %253 = vst [vmem:[%s223 + $0x1b8] sm:$0x1] 0.0
      %254 = vst [vmem:[%s223 + $0x1d8] sm:$0x1] 0.0
      %255 = vst [vmem:[%s223 + $0x1f8] sm:$0x1] 0.0
      %256 = vst [vmem:[%s223 + $0x8] sm:$0xff] %v182
      %257 = vst [vmem:[%s223 + $0x10] sm:$0xff] %v183
      %258 = vst [vmem:[%s223 + $0x28] sm:$0xff] %v184
      %259 = vst [vmem:[%s223 + $0x30] sm:$0xff] %v185
      %260 = vst [vmem:[%s223 + $0x48] sm:$0xff] %v186
      %261 = vst [vmem:[%s223 + $0x50] sm:$0xff] %v187
      %262 = vst [vmem:[%s223 + $0x68] sm:$0xff] %v188
      %263 = vst [vmem:[%s223 + $0x70] sm:$0xff] %v189
      %264 = vst [vmem:[%s223 + $0x88] sm:$0xff] %v190
      %265 = vst [vmem:[%s223 + $0x90] sm:$0xff] %v191
      %266 = vst [vmem:[%s223 + $0xa8] sm:$0xff] %v192
      %267 = vst [vmem:[%s223 + $0xb0] sm:$0xff] %v193
      %268 = vst [vmem:[%s223 + $0xc8] sm:$0xff] %v194
      %269 = vst [vmem:[%s223 + $0xd0] sm:$0xff] %v195
      %270 = vst [vmem:[%s223 + $0xe8] sm:$0xff] %v196
      %271 = vst [vmem:[%s223 + $0xf0] sm:$0xff] %v197
      %272 = vst [vmem:[%s223 + $0x108] sm:$0xff] %v198
      %273 = vst [vmem:[%s223 + $0x110] sm:$0xff] %v199
      %274 = vst [vmem:[%s223 + $0x128] sm:$0xff] %v200
      %275 = vst [vmem:[%s223 + $0x130] sm:$0xff] %v201
      %276 = vst [vmem:[%s223 + $0x148] sm:$0xff] %v202
      %277 = vst [vmem:[%s223 + $0x150] sm:$0xff] %v203
      %278 = vst [vmem:[%s223 + $0x168] sm:$0xff] %v204
      %279 = vst [vmem:[%s223 + $0x170] sm:$0xff] %v205
      %280 = vst [vmem:[%s223 + $0x188] sm:$0xff] %v206
      %281 = vst [vmem:[%s223 + $0x190] sm:$0xff] %v207
      %282 = vst [vmem:[%s223 + $0x1a8] sm:$0xff] %v208
      %283 = vst [vmem:[%s223 + $0x1b0] sm:$0xff] %v209
      %284 = vst [vmem:[%s223 + $0x1c8] sm:$0xff] %v210
      %285 = vst [vmem:[%s223 + $0x1d0] sm:$0xff] %v211
      %286 = vst [vmem:[%s223 + $0x1e8] sm:$0xff] %v212
      %287 = vst [vmem:[%s223 + $0x1f0] sm:$0xff] %v213
      %v288 = vld [vmem:[#allocation2 + $0x7] sm:$0xff]
      %v289 = vld [vmem:[#allocation2 + $0xf] sm:$0xff]
      %v290 = vld [vmem:[#allocation2 + $0x27] sm:$0xff]
      %v291 = vld [vmem:[#allocation2 + $0x2f] sm:$0xff]
      %v292 = vld [vmem:[#allocation2 + $0x47] sm:$0xff]
      %v293 = vld [vmem:[#allocation2 + $0x4f] sm:$0xff]
      %v294 = vld [vmem:[#allocation2 + $0x67] sm:$0xff]
      %v295 = vld [vmem:[#allocation2 + $0x6f] sm:$0xff]
      %v296 = vld [vmem:[#allocation2 + $0x87] sm:$0xff]
      %v297 = vld [vmem:[#allocation2 + $0x8f] sm:$0xff]
      %v298 = vld [vmem:[#allocation2 + $0xa7] sm:$0xff]
      %v299 = vld [vmem:[#allocation2 + $0xaf] sm:$0xff]
      %v300 = vld [vmem:[#allocation2 + $0xc7] sm:$0xff]
      %v301 = vld [vmem:[#allocation2 + $0xcf] sm:$0xff]
      %v302 = vld [vmem:[#allocation2 + $0xe7] sm:$0xff]
      %v303 = vld [vmem:[#allocation2 + $0xef] sm:$0xff]
      %v304 = vld [vmem:[#allocation2 + $0x107] sm:$0xff]
      %v305 = vld [vmem:[#allocation2 + $0x10f] sm:$0xff]
      %v306 = vld [vmem:[#allocation2 + $0x127] sm:$0xff]
      %v307 = vld [vmem:[#allocation2 + $0x12f] sm:$0xff]
      %v308 = vld [vmem:[#allocation2 + $0x147] sm:$0xff]
      %v309 = vld [vmem:[#allocation2 + $0x14f] sm:$0xff]
      %v310 = vld [vmem:[#allocation2 + $0x167] sm:$0xff]
      %v311 = vld [vmem:[#allocation2 + $0x16f] sm:$0xff]
      %v312 = vld [vmem:[#allocation2 + $0x187] sm:$0xff]
      %v313 = vld [vmem:[#allocation2 + $0x18f] sm:$0xff]
      %v314 = vld [vmem:[#allocation2 + $0x1a7] sm:$0xff]
      %v315 = vld [vmem:[#allocation2 + $0x1af] sm:$0xff]
      %v316 = vld [vmem:[#allocation2 + $0x1c7] sm:$0xff]
      %v317 = vld [vmem:[#allocation2 + $0x1cf] sm:$0xff]
      %v318 = vld [vmem:[#allocation2 + $0x1e7] sm:$0xff]
      %v319 = vld [vmem:[#allocation2 + $0x1ef] sm:$0xff]
      %v320 = vld [vmem:[%s1] sm:$0xff]
      %v321 = vld [vmem:[%s1 + $0x8] sm:$0xff]
      %v322 = vld [vmem:[%s1 + $0x10] sm:$0xff]
      %v323 = vld [vmem:[%s1 + $0x18] sm:$0xff]
      %v324 = vld [vmem:[%s1 + $0x20] sm:$0xff]
      %v325 = vld [vmem:[%s1 + $0x28] sm:$0xff]
      %v326 = vld [vmem:[%s1 + $0x30] sm:$0xff]
      %v327 = vld [vmem:[%s1 + $0x38] sm:$0xff]
      %v328 = vld [vmem:[%s1 + $0x40] sm:$0xff]
      %v329 = vld [vmem:[%s1 + $0x48] sm:$0xff]
      %v330 = vld [vmem:[%s1 + $0x50] sm:$0xff]
      %v331 = vld [vmem:[%s1 + $0x58] sm:$0xff]
      %v332 = vld [vmem:[%s1 + $0x60] sm:$0xff]
      %v333 = vld [vmem:[%s1 + $0x68] sm:$0xff]
      %v334 = vld [vmem:[%s1 + $0x70] sm:$0xff]
      %v335 = vld [vmem:[%s1 + $0x78] sm:$0xff]
      %v336 = vld [vmem:[#allocation2 + $0x8] sm:$0xff]
      %v337 = vld [vmem:[#allocation2 + $0x10] sm:$0xff]
      %v338 = vld [vmem:[#allocation2 + $0x28] sm:$0xff]
      %v339 = vld [vmem:[#allocation2 + $0x30] sm:$0xff]
      %v340 = vld [vmem:[#allocation2 + $0x48] sm:$0xff]
      %v341 = vld [vmem:[#allocation2 + $0x50] sm:$0xff]
      %v342 = vld [vmem:[#allocation2 + $0x68] sm:$0xff]
      %v343 = vld [vmem:[#allocation2 + $0x70] sm:$0xff]
      %v344 = vld [vmem:[#allocation2 + $0x88] sm:$0xff]
      %v345 = vld [vmem:[#allocation2 + $0x90] sm:$0xff]
      %v346 = vld [vmem:[#allocation2 + $0xa8] sm:$0xff]
      %v347 = vld [vmem:[#allocation2 + $0xb0] sm:$0xff]
      %v348 = vld [vmem:[#allocation2 + $0xc8] sm:$0xff]
      %v349 = vld [vmem:[#allocation2 + $0xd0] sm:$0xff]
      %v350 = vld [vmem:[#allocation2 + $0xe8] sm:$0xff]
      %v351 = vld [vmem:[#allocation2 + $0xf0] sm:$0xff]
      %v352 = vld [vmem:[#allocation2 + $0x108] sm:$0xff]
      %v353 = vld [vmem:[#allocation2 + $0x110] sm:$0xff]
      %v354 = vld [vmem:[#allocation2 + $0x128] sm:$0xff]
      %v355 = vld [vmem:[#allocation2 + $0x130] sm:$0xff]
      %v356 = vld [vmem:[#allocation2 + $0x148] sm:$0xff]
      %v357 = vld [vmem:[#allocation2 + $0x150] sm:$0xff]
      %v358 = vld [vmem:[#allocation2 + $0x168] sm:$0xff]
      %v359 = vld [vmem:[#allocation2 + $0x170] sm:$0xff]
      %v360 = vld [vmem:[#allocation2 + $0x188] sm:$0xff]
      %v361 = vld [vmem:[#allocation2 + $0x190] sm:$0xff]
      %v362 = vld [vmem:[#allocation2 + $0x1a8] sm:$0xff]
      %v363 = vld [vmem:[#allocation2 + $0x1b0] sm:$0xff]
      %v364 = vld [vmem:[#allocation2 + $0x1c8] sm:$0xff]
      %v365 = vld [vmem:[#allocation2 + $0x1d0] sm:$0xff]
      %v366 = vld [vmem:[#allocation2 + $0x1e8] sm:$0xff]
      %v367 = vld [vmem:[#allocation2 + $0x1f0] sm:$0xff]
      %v368 = vld [vmem:[%s1 + $0x80] sm:$0xff]
      %v369 = vld [vmem:[%s1 + $0x88] sm:$0xff]
      %v370 = vld [vmem:[%s1 + $0x90] sm:$0xff]
      %v371 = vld [vmem:[%s1 + $0x98] sm:$0xff]
      %v372 = vld [vmem:[%s1 + $0xa0] sm:$0xff]
      %v373 = vld [vmem:[%s1 + $0xa8] sm:$0xff]
      %v374 = vld [vmem:[%s1 + $0xb0] sm:$0xff]
      %v375 = vld [vmem:[%s1 + $0xb8] sm:$0xff]
      %v376 = vld [vmem:[%s1 + $0xc0] sm:$0xff]
      %v377 = vld [vmem:[%s1 + $0xc8] sm:$0xff]
      %v378 = vld [vmem:[%s1 + $0xd0] sm:$0xff]
      %v379 = vld [vmem:[%s1 + $0xd8] sm:$0xff]
      %v380 = vld [vmem:[%s1 + $0xe0] sm:$0xff]
      %v381 = vld [vmem:[%s1 + $0xe8] sm:$0xff]
      %v382 = vld [vmem:[%s1 + $0xf0] sm:$0xff]
      %v383 = vld [vmem:[%s1 + $0xf8] sm:$0xff]
      %384 = vmatpush.msra.mxu0 %v383
      %385 = vmatpush.msra.mxu0 %v382
      %386 = vmatpush.msra.mxu0 %v381
      %387 = vmatpush.msra.mxu0 %v380
      %388 = vmatpush.msra.mxu0 %v379
      %389 = vmatpush.msra.mxu0 %v378
      %390 = vmatpush.msra.mxu0 %v377
      %391 = vmatpush.msra.mxu0 %v376
      %392 = vmatpush.msra.mxu0 %v375
      %393 = vmatpush.msra.mxu0 %v374
      %394 = vmatpush.msra.mxu0 %v373
      %395 = vmatpush.msra.mxu0 %v372
      %396 = vmatpush.msra.mxu0 %v371
      %397 = vmatpush.msra.mxu0 %v370
      %398 = vmatpush.msra.mxu0 %v369
      %399 = vmatpush.msra.mxu0 %v368
      %400 = vmatmul.f32.gmra.mxu0 %v336
      %v401 = vpop.f32.mrf.mxu0
      %v402 = vadd.f32 0.0, %v401
      %403 = vmatmul.f32.gmra.mxu0 %v337
      %v404 = vpop.f32.mrf.mxu0
      %v405 = vadd.f32 0.0, %v404
      %406 = vmatmul.f32.gmra.mxu0 %v338
      %v407 = vpop.f32.mrf.mxu0
      %v408 = vadd.f32 0.0, %v407
      %409 = vmatmul.f32.gmra.mxu0 %v339
      %v410 = vpop.f32.mrf.mxu0
      %v411 = vadd.f32 0.0, %v410
      %412 = vmatmul.f32.gmra.mxu0 %v340
      %v413 = vpop.f32.mrf.mxu0
      %v414 = vadd.f32 0.0, %v413
      %415 = vmatmul.f32.gmra.mxu0 %v341
      %v416 = vpop.f32.mrf.mxu0
      %v417 = vadd.f32 0.0, %v416
      %418 = vmatmul.f32.gmra.mxu0 %v342
      %v419 = vpop.f32.mrf.mxu0
      %v420 = vadd.f32 0.0, %v419
      %421 = vmatmul.f32.gmra.mxu0 %v343
      %v422 = vpop.f32.mrf.mxu0
      %v423 = vadd.f32 0.0, %v422
      %424 = vmatmul.f32.gmra.mxu0 %v344
      %v425 = vpop.f32.mrf.mxu0
      %v426 = vadd.f32 0.0, %v425
      %427 = vmatmul.f32.gmra.mxu0 %v345
      %v428 = vpop.f32.mrf.mxu0
      %v429 = vadd.f32 0.0, %v428
      %430 = vmatmul.f32.gmra.mxu0 %v346
      %v431 = vpop.f32.mrf.mxu0
      %v432 = vadd.f32 0.0, %v431
      %433 = vmatmul.f32.gmra.mxu0 %v347
      %v434 = vpop.f32.mrf.mxu0
      %v435 = vadd.f32 0.0, %v434
      %436 = vmatmul.f32.gmra.mxu0 %v348
      %v437 = vpop.f32.mrf.mxu0
      %v438 = vadd.f32 0.0, %v437
      %439 = vmatmul.f32.gmra.mxu0 %v349
      %v440 = vpop.f32.mrf.mxu0
      %v441 = vadd.f32 0.0, %v440
      %442 = vmatmul.f32.gmra.mxu0 %v350
      %v443 = vpop.f32.mrf.mxu0
      %v444 = vadd.f32 0.0, %v443
      %445 = vmatmul.f32.gmra.mxu0 %v351
      %v446 = vpop.f32.mrf.mxu0
      %v447 = vadd.f32 0.0, %v446
      %448 = vmatmul.f32.gmra.mxu0 %v352
      %v449 = vpop.f32.mrf.mxu0
      %v450 = vadd.f32 0.0, %v449
      %451 = vmatmul.f32.gmra.mxu0 %v353
      %v452 = vpop.f32.mrf.mxu0
      %v453 = vadd.f32 0.0, %v452
      %454 = vmatmul.f32.gmra.mxu0 %v354
      %v455 = vpop.f32.mrf.mxu0
      %v456 = vadd.f32 0.0, %v455
      %457 = vmatmul.f32.gmra.mxu0 %v355
      %v458 = vpop.f32.mrf.mxu0
      %v459 = vadd.f32 0.0, %v458
      %460 = vmatmul.f32.gmra.mxu0 %v356
      %v461 = vpop.f32.mrf.mxu0
      %v462 = vadd.f32 0.0, %v461
      %463 = vmatmul.f32.gmra.mxu0 %v357
      %v464 = vpop.f32.mrf.mxu0
      %v465 = vadd.f32 0.0, %v464
      %466 = vmatmul.f32.gmra.mxu0 %v358
      %v467 = vpop.f32.mrf.mxu0
      %v468 = vadd.f32 0.0, %v467
      %469 = vmatmul.f32.gmra.mxu0 %v359
      %v470 = vpop.f32.mrf.mxu0
      %v471 = vadd.f32 0.0, %v470
      %472 = vmatmul.f32.gmra.mxu0 %v360
      %v473 = vpop.f32.mrf.mxu0
      %v474 = vadd.f32 0.0, %v473
      %475 = vmatmul.f32.gmra.mxu0 %v361
      %v476 = vpop.f32.mrf.mxu0
      %v477 = vadd.f32 0.0, %v476
      %478 = vmatmul.f32.gmra.mxu0 %v362
      %v479 = vpop.f32.mrf.mxu0
      %v480 = vadd.f32 0.0, %v479
      %481 = vmatmul.f32.gmra.mxu0 %v363
      %v482 = vpop.f32.mrf.mxu0
      %v483 = vadd.f32 0.0, %v482
      %484 = vmatmul.f32.gmra.mxu0 %v364
      %v485 = vpop.f32.mrf.mxu0
      %v486 = vadd.f32 0.0, %v485
      %487 = vmatmul.f32.gmra.mxu0 %v365
      %v488 = vpop.f32.mrf.mxu0
      %v489 = vadd.f32 0.0, %v488
      %490 = vmatmul.f32.gmra.mxu0 %v366
      %v491 = vpop.f32.mrf.mxu0
      %v492 = vadd.f32 0.0, %v491
      %493 = vmatmul.f32.gmra.mxu0 %v367
      %v494 = vpop.f32.mrf.mxu0
      %v495 = vadd.f32 0.0, %v494
      %496 = vdwg.mxu0
      %497 = vmatpush.msra.mxu0 %v335
      %498 = vmatpush.msra.mxu0 %v334
      %499 = vmatpush.msra.mxu0 %v333
      %500 = vmatpush.msra.mxu0 %v332
      %501 = vmatpush.msra.mxu0 %v331
      %502 = vmatpush.msra.mxu0 %v330
      %503 = vmatpush.msra.mxu0 %v329
      %504 = vmatpush.msra.mxu0 %v328
      %505 = vmatpush.msra.mxu0 %v327
      %506 = vmatpush.msra.mxu0 %v326
      %507 = vmatpush.msra.mxu0 %v325
      %508 = vmatpush.msra.mxu0 %v324
      %509 = vmatpush.msra.mxu0 %v323
      %510 = vmatpush.msra.mxu0 %v322
      %511 = vmatpush.msra.mxu0 %v321
      %512 = vmatpush.msra.mxu0 %v320
      %513 = vmatmul.f32.gmra.mxu0 %v288
      %v514 = vpop.f32.mrf.mxu0
      %v515 = vadd.f32 %v402, %v514
      %516 = vmatmul.f32.gmra.mxu0 %v289
      %v517 = vpop.f32.mrf.mxu0
      %v518 = vadd.f32 %v405, %v517
      %519 = vmatmul.f32.gmra.mxu0 %v290
      %v520 = vpop.f32.mrf.mxu0
      %v521 = vadd.f32 %v408, %v520
      %522 = vmatmul.f32.gmra.mxu0 %v291
      %v523 = vpop.f32.mrf.mxu0
      %v524 = vadd.f32 %v411, %v523
      %525 = vmatmul.f32.gmra.mxu0 %v292
      %v526 = vpop.f32.mrf.mxu0
      %v527 = vadd.f32 %v414, %v526
      %528 = vmatmul.f32.gmra.mxu0 %v293
      %v529 = vpop.f32.mrf.mxu0
      %v530 = vadd.f32 %v417, %v529
      %531 = vmatmul.f32.gmra.mxu0 %v294
      %v532 = vpop.f32.mrf.mxu0
      %v533 = vadd.f32 %v420, %v532
      %534 = vmatmul.f32.gmra.mxu0 %v295
      %v535 = vpop.f32.mrf.mxu0
      %v536 = vadd.f32 %v423, %v535
      %537 = vmatmul.f32.gmra.mxu0 %v296
      %v538 = vpop.f32.mrf.mxu0
      %v539 = vadd.f32 %v426, %v538
      %540 = vmatmul.f32.gmra.mxu0 %v297
      %v541 = vpop.f32.mrf.mxu0
      %v542 = vadd.f32 %v429, %v541
      %543 = vmatmul.f32.gmra.mxu0 %v298
      %v544 = vpop.f32.mrf.mxu0
      %v545 = vadd.f32 %v432, %v544
      %546 = vmatmul.f32.gmra.mxu0 %v299
      %v547 = vpop.f32.mrf.mxu0
      %v548 = vadd.f32 %v435, %v547
      %549 = vmatmul.f32.gmra.mxu0 %v300
      %v550 = vpop.f32.mrf.mxu0
      %v551 = vadd.f32 %v438, %v550
      %552 = vmatmul.f32.gmra.mxu0 %v301
      %v553 = vpop.f32.mrf.mxu0
      %v554 = vadd.f32 %v441, %v553
      %555 = vmatmul.f32.gmra.mxu0 %v302
      %v556 = vpop.f32.mrf.mxu0
      %v557 = vadd.f32 %v444, %v556
      %558 = vmatmul.f32.gmra.mxu0 %v303
      %v559 = vpop.f32.mrf.mxu0
      %v560 = vadd.f32 %v447, %v559
      %561 = vmatmul.f32.gmra.mxu0 %v304
      %v562 = vpop.f32.mrf.mxu0
      %v563 = vadd.f32 %v450, %v562
      %564 = vmatmul.f32.gmra.mxu0 %v305
      %v565 = vpop.f32.mrf.mxu0
      %v566 = vadd.f32 %v453, %v565
      %567 = vmatmul.f32.gmra.mxu0 %v306
      %v568 = vpop.f32.mrf.mxu0
      %v569 = vadd.f32 %v456, %v568
      %570 = vmatmul.f32.gmra.mxu0 %v307
      %v571 = vpop.f32.mrf.mxu0
      %v572 = vadd.f32 %v459, %v571
      %573 = vmatmul.f32.gmra.mxu0 %v308
      %v574 = vpop.f32.mrf.mxu0
      %v575 = vadd.f32 %v462, %v574
      %576 = vmatmul.f32.gmra.mxu0 %v309
      %v577 = vpop.f32.mrf.mxu0
      %v578 = vadd.f32 %v465, %v577
      %579 = vmatmul.f32.gmra.mxu0 %v310
      %v580 = vpop.f32.mrf.mxu0
      %v581 = vadd.f32 %v468, %v580
      %582 = vmatmul.f32.gmra.mxu0 %v311
      %v583 = vpop.f32.mrf.mxu0
      %v584 = vadd.f32 %v471, %v583
      %585 = vmatmul.f32.gmra.mxu0 %v312
      %v586 = vpop.f32.mrf.mxu0
      %v587 = vadd.f32 %v474, %v586
      %588 = vmatmul.f32.gmra.mxu0 %v313
      %v589 = vpop.f32.mrf.mxu0
      %v590 = vadd.f32 %v477, %v589
      %591 = vmatmul.f32.gmra.mxu0 %v314
      %v592 = vpop.f32.mrf.mxu0
      %v593 = vadd.f32 %v480, %v592
      %594 = vmatmul.f32.gmra.mxu0 %v315
      %v595 = vpop.f32.mrf.mxu0
      %v596 = vadd.f32 %v483, %v595
      %597 = vmatmul.f32.gmra.mxu0 %v316
      %v598 = vpop.f32.mrf.mxu0
      %v599 = vadd.f32 %v486, %v598
      %600 = vmatmul.f32.gmra.mxu0 %v317
      %v601 = vpop.f32.mrf.mxu0
      %v602 = vadd.f32 %v489, %v601
      %603 = vmatmul.f32.gmra.mxu0 %v318
      %v604 = vpop.f32.mrf.mxu0
      %v605 = vadd.f32 %v492, %v604
      %606 = vmatmul.f32.gmra.mxu0 %v319
      %v607 = vpop.f32.mrf.mxu0
      %v608 = vadd.f32 %v495, %v607
      %609 = vdwg.mxu0
      %v610 = vld [vmem:[#allocation2 + $0x9] sm:$0xff]
      %v611 = vld [vmem:[#allocation2 + $0x11] sm:$0xff]
      %v612 = vld [vmem:[#allocation2 + $0x29] sm:$0xff]
      %v613 = vld [vmem:[#allocation2 + $0x31] sm:$0xff]
      %v614 = vld [vmem:[#allocation2 + $0x49] sm:$0xff]
      %v615 = vld [vmem:[#allocation2 + $0x51] sm:$0xff]
      %v616 = vld [vmem:[#allocation2 + $0x69] sm:$0xff]
      %v617 = vld [vmem:[#allocation2 + $0x71] sm:$0xff]
      %v618 = vld [vmem:[#allocation2 + $0x89] sm:$0xff]
      %v619 = vld [vmem:[#allocation2 + $0x91] sm:$0xff]
      %v620 = vld [vmem:[#allocation2 + $0xa9] sm:$0xff]
      %v621 = vld [vmem:[#allocation2 + $0xb1] sm:$0xff]
      %v622 = vld [vmem:[#allocation2 + $0xc9] sm:$0xff]
      %v623 = vld [vmem:[#allocation2 + $0xd1] sm:$0xff]
      %v624 = vld [vmem:[#allocation2 + $0xe9] sm:$0xff]
      %v625 = vld [vmem:[#allocation2 + $0xf1] sm:$0xff]
      %v626 = vld [vmem:[#allocation2 + $0x109] sm:$0xff]
      %v627 = vld [vmem:[#allocation2 + $0x111] sm:$0xff]
      %v628 = vld [vmem:[#allocation2 + $0x129] sm:$0xff]
      %v629 = vld [vmem:[#allocation2 + $0x131] sm:$0xff]
      %v630 = vld [vmem:[#allocation2 + $0x149] sm:$0xff]
      %v631 = vld [vmem:[#allocation2 + $0x151] sm:$0xff]
      %v632 = vld [vmem:[#allocation2 + $0x169] sm:$0xff]
      %v633 = vld [vmem:[#allocation2 + $0x171] sm:$0xff]
      %v634 = vld [vmem:[#allocation2 + $0x189] sm:$0xff]
      %v635 = vld [vmem:[#allocation2 + $0x191] sm:$0xff]
      %v636 = vld [vmem:[#allocation2 + $0x1a9] sm:$0xff]
      %v637 = vld [vmem:[#allocation2 + $0x1b1] sm:$0xff]
      %v638 = vld [vmem:[#allocation2 + $0x1c9] sm:$0xff]
      %v639 = vld [vmem:[#allocation2 + $0x1d1] sm:$0xff]
      %v640 = vld [vmem:[#allocation2 + $0x1e9] sm:$0xff]
      %v641 = vld [vmem:[#allocation2 + $0x1f1] sm:$0xff]
      %v642 = vld [vmem:[%s1 + $0x100] sm:$0xff]
      %v643 = vld [vmem:[%s1 + $0x108] sm:$0xff]
      %v644 = vld [vmem:[%s1 + $0x110] sm:$0xff]
      %v645 = vld [vmem:[%s1 + $0x118] sm:$0xff]
      %v646 = vld [vmem:[%s1 + $0x120] sm:$0xff]
      %v647 = vld [vmem:[%s1 + $0x128] sm:$0xff]
      %v648 = vld [vmem:[%s1 + $0x130] sm:$0xff]
      %v649 = vld [vmem:[%s1 + $0x138] sm:$0xff]
      %v650 = vld [vmem:[%s1 + $0x140] sm:$0xff]
      %v651 = vld [vmem:[%s1 + $0x148] sm:$0xff]
      %v652 = vld [vmem:[%s1 + $0x150] sm:$0xff]
      %v653 = vld [vmem:[%s1 + $0x158] sm:$0xff]
      %v654 = vld [vmem:[%s1 + $0x160] sm:$0xff]
      %v655 = vld [vmem:[%s1 + $0x168] sm:$0xff]
      %v656 = vld [vmem:[%s1 + $0x170] sm:$0xff]
      %v657 = vld [vmem:[%s1 + $0x178] sm:$0xff]
      %658 = vmatpush.msra.mxu0 %v657
      %659 = vmatpush.msra.mxu0 %v656
      %660 = vmatpush.msra.mxu0 %v655
      %661 = vmatpush.msra.mxu0 %v654
      %662 = vmatpush.msra.mxu0 %v653
      %663 = vmatpush.msra.mxu0 %v652
      %664 = vmatpush.msra.mxu0 %v651
      %665 = vmatpush.msra.mxu0 %v650
      %666 = vmatpush.msra.mxu0 %v649
      %667 = vmatpush.msra.mxu0 %v648
      %668 = vmatpush.msra.mxu0 %v647
      %669 = vmatpush.msra.mxu0 %v646
      %670 = vmatpush.msra.mxu0 %v645
      %671 = vmatpush.msra.mxu0 %v644
      %672 = vmatpush.msra.mxu0 %v643
      %673 = vmatpush.msra.mxu0 %v642
      %674 = vmatmul.f32.gmra.mxu0 %v610
      %v675 = vpop.f32.mrf.mxu0
      %v676 = vadd.f32 0.0, %v675
      %677 = vmatmul.f32.gmra.mxu0 %v611
      %v678 = vpop.f32.mrf.mxu0
      %v679 = vadd.f32 0.0, %v678
      %680 = vmatmul.f32.gmra.mxu0 %v612
      %v681 = vpop.f32.mrf.mxu0
      %v682 = vadd.f32 0.0, %v681
      %683 = vmatmul.f32.gmra.mxu0 %v613
      %v684 = vpop.f32.mrf.mxu0
      %v685 = vadd.f32 0.0, %v684
      %686 = vmatmul.f32.gmra.mxu0 %v614
      %v687 = vpop.f32.mrf.mxu0
      %v688 = vadd.f32 0.0, %v687
      %689 = vmatmul.f32.gmra.mxu0 %v615
      %v690 = vpop.f32.mrf.mxu0
      %v691 = vadd.f32 0.0, %v690
      %692 = vmatmul.f32.gmra.mxu0 %v616
      %v693 = vpop.f32.mrf.mxu0
      %v694 = vadd.f32 0.0, %v693
      %695 = vmatmul.f32.gmra.mxu0 %v617
      %v696 = vpop.f32.mrf.mxu0
      %v697 = vadd.f32 0.0, %v696
      %698 = vmatmul.f32.gmra.mxu0 %v618
      %v699 = vpop.f32.mrf.mxu0
      %v700 = vadd.f32 0.0, %v699
      %701 = vmatmul.f32.gmra.mxu0 %v619
      %v702 = vpop.f32.mrf.mxu0
      %v703 = vadd.f32 0.0, %v702
      %704 = vmatmul.f32.gmra.mxu0 %v620
      %v705 = vpop.f32.mrf.mxu0
      %v706 = vadd.f32 0.0, %v705
      %707 = vmatmul.f32.gmra.mxu0 %v621
      %v708 = vpop.f32.mrf.mxu0
      %v709 = vadd.f32 0.0, %v708
      %710 = vmatmul.f32.gmra.mxu0 %v622
      %v711 = vpop.f32.mrf.mxu0
      %v712 = vadd.f32 0.0, %v711
      %713 = vmatmul.f32.gmra.mxu0 %v623
      %v714 = vpop.f32.mrf.mxu0
      %v715 = vadd.f32 0.0, %v714
      %716 = vmatmul.f32.gmra.mxu0 %v624
      %v717 = vpop.f32.mrf.mxu0
      %v718 = vadd.f32 0.0, %v717
      %719 = vmatmul.f32.gmra.mxu0 %v625
      %v720 = vpop.f32.mrf.mxu0
      %v721 = vadd.f32 0.0, %v720
      %722 = vmatmul.f32.gmra.mxu0 %v626
      %v723 = vpop.f32.mrf.mxu0
      %v724 = vadd.f32 0.0, %v723
      %725 = vmatmul.f32.gmra.mxu0 %v627
      %v726 = vpop.f32.mrf.mxu0
      %v727 = vadd.f32 0.0, %v726
      %728 = vmatmul.f32.gmra.mxu0 %v628
      %v729 = vpop.f32.mrf.mxu0
      %v730 = vadd.f32 0.0, %v729
      %731 = vmatmul.f32.gmra.mxu0 %v629
      %v732 = vpop.f32.mrf.mxu0
      %v733 = vadd.f32 0.0, %v732
      %734 = vmatmul.f32.gmra.mxu0 %v630
      %v735 = vpop.f32.mrf.mxu0
      %v736 = vadd.f32 0.0, %v735
      %737 = vmatmul.f32.gmra.mxu0 %v631
      %v738 = vpop.f32.mrf.mxu0
      %v739 = vadd.f32 0.0, %v738
      %740 = vmatmul.f32.gmra.mxu0 %v632
      %v741 = vpop.f32.mrf.mxu0
      %v742 = vadd.f32 0.0, %v741
      %743 = vmatmul.f32.gmra.mxu0 %v633
      %v744 = vpop.f32.mrf.mxu0
      %v745 = vadd.f32 0.0, %v744
      %746 = vmatmul.f32.gmra.mxu0 %v634
      %v747 = vpop.f32.mrf.mxu0
      %v748 = vadd.f32 0.0, %v747
      %749 = vmatmul.f32.gmra.mxu0 %v635
      %v750 = vpop.f32.mrf.mxu0
      %v751 = vadd.f32 0.0, %v750
      %752 = vmatmul.f32.gmra.mxu0 %v636
      %v753 = vpop.f32.mrf.mxu0
      %v754 = vadd.f32 0.0, %v753
      %755 = vmatmul.f32.gmra.mxu0 %v637
      %v756 = vpop.f32.mrf.mxu0
      %v757 = vadd.f32 0.0, %v756
      %758 = vmatmul.f32.gmra.mxu0 %v638
      %v759 = vpop.f32.mrf.mxu0
      %v760 = vadd.f32 0.0, %v759
      %761 = vmatmul.f32.gmra.mxu0 %v639
      %v762 = vpop.f32.mrf.mxu0
      %v763 = vadd.f32 0.0, %v762
      %764 = vmatmul.f32.gmra.mxu0 %v640
      %v765 = vpop.f32.mrf.mxu0
      %v766 = vadd.f32 0.0, %v765
      %767 = vmatmul.f32.gmra.mxu0 %v641
      %v768 = vpop.f32.mrf.mxu0
      %v769 = vadd.f32 0.0, %v768
      %770 = vdwg.mxu0
      %v771 = vadd.f32 %v515, %v676
      %v772 = vadd.f32 %v518, %v679
      %v773 = vadd.f32 %v521, %v682
      %v774 = vadd.f32 %v524, %v685
      %v775 = vadd.f32 %v527, %v688
      %v776 = vadd.f32 %v530, %v691
      %v777 = vadd.f32 %v533, %v694
      %v778 = vadd.f32 %v536, %v697
      %v779 = vadd.f32 %v539, %v700
      %v780 = vadd.f32 %v542, %v703
      %v781 = vadd.f32 %v545, %v706
      %v782 = vadd.f32 %v548, %v709
      %v783 = vadd.f32 %v551, %v712
      %v784 = vadd.f32 %v554, %v715
      %v785 = vadd.f32 %v557, %v718
      %v786 = vadd.f32 %v560, %v721
      %v787 = vadd.f32 %v563, %v724
      %v788 = vadd.f32 %v566, %v727
      %v789 = vadd.f32 %v569, %v730
      %v790 = vadd.f32 %v572, %v733
      %v791 = vadd.f32 %v575, %v736
      %v792 = vadd.f32 %v578, %v739
      %v793 = vadd.f32 %v581, %v742
      %v794 = vadd.f32 %v584, %v745
      %v795 = vadd.f32 %v587, %v748
      %v796 = vadd.f32 %v590, %v751
      %v797 = vadd.f32 %v593, %v754
      %v798 = vadd.f32 %v596, %v757
      %v799 = vadd.f32 %v599, %v760
      %v800 = vadd.f32 %v602, %v763
      %v801 = vadd.f32 %v605, %v766
      %v802 = vadd.f32 %v608, %v769
      %v803 = vld [vmem:[%s223 + $0x7] sm:$0xff]
      %v804 = vld [vmem:[%s223 + $0xf] sm:$0xff]
      %v805 = vld [vmem:[%s223 + $0x27] sm:$0xff]
      %v806 = vld [vmem:[%s223 + $0x2f] sm:$0xff]
      %v807 = vld [vmem:[%s223 + $0x47] sm:$0xff]
      %v808 = vld [vmem:[%s223 + $0x4f] sm:$0xff]
      %v809 = vld [vmem:[%s223 + $0x67] sm:$0xff]
      %v810 = vld [vmem:[%s223 + $0x6f] sm:$0xff]
      %v811 = vld [vmem:[%s223 + $0x87] sm:$0xff]
      %v812 = vld [vmem:[%s223 + $0x8f] sm:$0xff]
      %v813 = vld [vmem:[%s223 + $0xa7] sm:$0xff]
      %v814 = vld [vmem:[%s223 + $0xaf] sm:$0xff]
      %v815 = vld [vmem:[%s223 + $0xc7] sm:$0xff]
      %v816 = vld [vmem:[%s223 + $0xcf] sm:$0xff]
      %v817 = vld [vmem:[%s223 + $0xe7] sm:$0xff]
      %v818 = vld [vmem:[%s223 + $0xef] sm:$0xff]
      %v819 = vld [vmem:[%s223 + $0x107] sm:$0xff]
      %v820 = vld [vmem:[%s223 + $0x10f] sm:$0xff]
      %v821 = vld [vmem:[%s223 + $0x127] sm:$0xff]
      %v822 = vld [vmem:[%s223 + $0x12f] sm:$0xff]
      %v823 = vld [vmem:[%s223 + $0x147] sm:$0xff]
      %v824 = vld [vmem:[%s223 + $0x14f] sm:$0xff]
      %v825 = vld [vmem:[%s223 + $0x167] sm:$0xff]
      %v826 = vld [vmem:[%s223 + $0x16f] sm:$0xff]
      %v827 = vld [vmem:[%s223 + $0x187] sm:$0xff]
      %v828 = vld [vmem:[%s223 + $0x18f] sm:$0xff]
      %v829 = vld [vmem:[%s223 + $0x1a7] sm:$0xff]
      %v830 = vld [vmem:[%s223 + $0x1af] sm:$0xff]
      %v831 = vld [vmem:[%s223 + $0x1c7] sm:$0xff]
      %v832 = vld [vmem:[%s223 + $0x1cf] sm:$0xff]
      %v833 = vld [vmem:[%s223 + $0x1e7] sm:$0xff]
      %v834 = vld [vmem:[%s223 + $0x1ef] sm:$0xff]
      %v835 = vld [vmem:[%s1 + $0x180] sm:$0xff]
      %v836 = vld [vmem:[%s1 + $0x188] sm:$0xff]
      %v837 = vld [vmem:[%s1 + $0x190] sm:$0xff]
      %v838 = vld [vmem:[%s1 + $0x198] sm:$0xff]
      %v839 = vld [vmem:[%s1 + $0x1a0] sm:$0xff]
      %v840 = vld [vmem:[%s1 + $0x1a8] sm:$0xff]
      %v841 = vld [vmem:[%s1 + $0x1b0] sm:$0xff]
      %v842 = vld [vmem:[%s1 + $0x1b8] sm:$0xff]
      %v843 = vld [vmem:[%s1 + $0x1c0] sm:$0xff]
      %v844 = vld [vmem:[%s1 + $0x1c8] sm:$0xff]
      %v845 = vld [vmem:[%s1 + $0x1d0] sm:$0xff]
      %v846 = vld [vmem:[%s1 + $0x1d8] sm:$0xff]
      %v847 = vld [vmem:[%s1 + $0x1e0] sm:$0xff]
      %v848 = vld [vmem:[%s1 + $0x1e8] sm:$0xff]
      %v849 = vld [vmem:[%s1 + $0x1f0] sm:$0xff]
      %v850 = vld [vmem:[%s1 + $0x1f8] sm:$0xff]
      %851 = vmatpush.msra.mxu0 %v850
      %852 = vmatpush.msra.mxu0 %v849
      %853 = vmatpush.msra.mxu0 %v848
      %854 = vmatpush.msra.mxu0 %v847
      %855 = vmatpush.msra.mxu0 %v846
      %856 = vmatpush.msra.mxu0 %v845
      %857 = vmatpush.msra.mxu0 %v844
      %858 = vmatpush.msra.mxu0 %v843
      %859 = vmatpush.msra.mxu0 %v842
      %860 = vmatpush.msra.mxu0 %v841
      %861 = vmatpush.msra.mxu0 %v840
      %862 = vmatpush.msra.mxu0 %v839
      %863 = vmatpush.msra.mxu0 %v838
      %864 = vmatpush.msra.mxu0 %v837
      %865 = vmatpush.msra.mxu0 %v836
      %866 = vmatpush.msra.mxu0 %v835
      %867 = vmatmul.f32.gmra.mxu0 %v803
      %v868 = vpop.f32.mrf.mxu0
      %v869 = vadd.f32 0.0, %v868
      %870 = vmatmul.f32.gmra.mxu0 %v804
      %v871 = vpop.f32.mrf.mxu0
      %v872 = vadd.f32 0.0, %v871
      %873 = vmatmul.f32.gmra.mxu0 %v805
      %v874 = vpop.f32.mrf.mxu0
      %v875 = vadd.f32 0.0, %v874
      %876 = vmatmul.f32.gmra.mxu0 %v806
      %v877 = vpop.f32.mrf.mxu0
      %v878 = vadd.f32 0.0, %v877
      %879 = vmatmul.f32.gmra.mxu0 %v807
      %v880 = vpop.f32.mrf.mxu0
      %v881 = vadd.f32 0.0, %v880
      %882 = vmatmul.f32.gmra.mxu0 %v808
      %v883 = vpop.f32.mrf.mxu0
      %v884 = vadd.f32 0.0, %v883
      %885 = vmatmul.f32.gmra.mxu0 %v809
      %v886 = vpop.f32.mrf.mxu0
      %v887 = vadd.f32 0.0, %v886
      %888 = vmatmul.f32.gmra.mxu0 %v810
      %v889 = vpop.f32.mrf.mxu0
      %v890 = vadd.f32 0.0, %v889
      %891 = vmatmul.f32.gmra.mxu0 %v811
      %v892 = vpop.f32.mrf.mxu0
      %v893 = vadd.f32 0.0, %v892
      %894 = vmatmul.f32.gmra.mxu0 %v812
      %v895 = vpop.f32.mrf.mxu0
      %v896 = vadd.f32 0.0, %v895
      %897 = vmatmul.f32.gmra.mxu0 %v813
      %v898 = vpop.f32.mrf.mxu0
      %v899 = vadd.f32 0.0, %v898
      %900 = vmatmul.f32.gmra.mxu0 %v814
      %v901 = vpop.f32.mrf.mxu0
      %v902 = vadd.f32 0.0, %v901
      %903 = vmatmul.f32.gmra.mxu0 %v815
      %v904 = vpop.f32.mrf.mxu0
      %v905 = vadd.f32 0.0, %v904
      %906 = vmatmul.f32.gmra.mxu0 %v816
      %v907 = vpop.f32.mrf.mxu0
      %v908 = vadd.f32 0.0, %v907
      %909 = vmatmul.f32.gmra.mxu0 %v817
      %v910 = vpop.f32.mrf.mxu0
      %v911 = vadd.f32 0.0, %v910
      %912 = vmatmul.f32.gmra.mxu0 %v818
      %v913 = vpop.f32.mrf.mxu0
      %v914 = vadd.f32 0.0, %v913
      %915 = vmatmul.f32.gmra.mxu0 %v819
      %v916 = vpop.f32.mrf.mxu0
      %v917 = vadd.f32 0.0, %v916
      %918 = vmatmul.f32.gmra.mxu0 %v820
      %v919 = vpop.f32.mrf.mxu0
      %v920 = vadd.f32 0.0, %v919
      %921 = vmatmul.f32.gmra.mxu0 %v821
      %v922 = vpop.f32.mrf.mxu0
      %v923 = vadd.f32 0.0, %v922
      %924 = vmatmul.f32.gmra.mxu0 %v822
      %v925 = vpop.f32.mrf.mxu0
      %v926 = vadd.f32 0.0, %v925
      %927 = vmatmul.f32.gmra.mxu0 %v823
      %v928 = vpop.f32.mrf.mxu0
      %v929 = vadd.f32 0.0, %v928
      %930 = vmatmul.f32.gmra.mxu0 %v824
      %v931 = vpop.f32.mrf.mxu0
      %v932 = vadd.f32 0.0, %v931
      %933 = vmatmul.f32.gmra.mxu0 %v825
      %v934 = vpop.f32.mrf.mxu0
      %v935 = vadd.f32 0.0, %v934
      %936 = vmatmul.f32.gmra.mxu0 %v826
      %v937 = vpop.f32.mrf.mxu0
      %v938 = vadd.f32 0.0, %v937
      %939 = vmatmul.f32.gmra.mxu0 %v827
      %v940 = vpop.f32.mrf.mxu0
      %v941 = vadd.f32 0.0, %v940
      %942 = vmatmul.f32.gmra.mxu0 %v828
      %v943 = vpop.f32.mrf.mxu0
      %v944 = vadd.f32 0.0, %v943
      %945 = vmatmul.f32.gmra.mxu0 %v829
      %v946 = vpop.f32.mrf.mxu0
      %v947 = vadd.f32 0.0, %v946
      %948 = vmatmul.f32.gmra.mxu0 %v830
      %v949 = vpop.f32.mrf.mxu0
      %v950 = vadd.f32 0.0, %v949
      %951 = vmatmul.f32.gmra.mxu0 %v831
      %v952 = vpop.f32.mrf.mxu0
      %v953 = vadd.f32 0.0, %v952
      %954 = vmatmul.f32.gmra.mxu0 %v832
      %v955 = vpop.f32.mrf.mxu0
      %v956 = vadd.f32 0.0, %v955
      %957 = vmatmul.f32.gmra.mxu0 %v833
      %v958 = vpop.f32.mrf.mxu0
      %v959 = vadd.f32 0.0, %v958
      %960 = vmatmul.f32.gmra.mxu0 %v834
      %v961 = vpop.f32.mrf.mxu0
      %v962 = vadd.f32 0.0, %v961
      %963 = vdwg.mxu0
      %v964 = vadd.f32 %v771, %v869
      %v965 = vadd.f32 %v772, %v872
      %v966 = vadd.f32 %v773, %v875
      %v967 = vadd.f32 %v774, %v878
      %v968 = vadd.f32 %v775, %v881
      %v969 = vadd.f32 %v776, %v884
      %v970 = vadd.f32 %v777, %v887
      %v971 = vadd.f32 %v778, %v890
      %v972 = vadd.f32 %v779, %v893
      %v973 = vadd.f32 %v780, %v896
      %v974 = vadd.f32 %v781, %v899
      %v975 = vadd.f32 %v782, %v902
      %v976 = vadd.f32 %v783, %v905
      %v977 = vadd.f32 %v784, %v908
      %v978 = vadd.f32 %v785, %v911
      %v979 = vadd.f32 %v786, %v914
      %v980 = vadd.f32 %v787, %v917
      %v981 = vadd.f32 %v788, %v920
      %v982 = vadd.f32 %v789, %v923
      %v983 = vadd.f32 %v790, %v926
      %v984 = vadd.f32 %v791, %v929
      %v985 = vadd.f32 %v792, %v932
      %v986 = vadd.f32 %v793, %v935
      %v987 = vadd.f32 %v794, %v938
      %v988 = vadd.f32 %v795, %v941
      %v989 = vadd.f32 %v796, %v944
      %v990 = vadd.f32 %v797, %v947
      %v991 = vadd.f32 %v798, %v950
      %v992 = vadd.f32 %v799, %v953
      %v993 = vadd.f32 %v800, %v956
      %v994 = vadd.f32 %v801, %v959
      %v995 = vadd.f32 %v802, %v962
      %v996 = vld [vmem:[%s223 + $0x8] sm:$0xff]
      %v997 = vld [vmem:[%s223 + $0x10] sm:$0xff]
      %v998 = vld [vmem:[%s223 + $0x28] sm:$0xff]
      %v999 = vld [vmem:[%s223 + $0x30] sm:$0xff]
      %v1000 = vld [vmem:[%s223 + $0x48] sm:$0xff]
      %v1001 = vld [vmem:[%s223 + $0x50] sm:$0xff]
      %v1002 = vld [vmem:[%s223 + $0x68] sm:$0xff]
      %v1003 = vld [vmem:[%s223 + $0x70] sm:$0xff]
      %v1004 = vld [vmem:[%s223 + $0x88] sm:$0xff]
      %v1005 = vld [vmem:[%s223 + $0x90] sm:$0xff]
      %v1006 = vld [vmem:[%s223 + $0xa8] sm:$0xff]
      %v1007 = vld [vmem:[%s223 + $0xb0] sm:$0xff]
      %v1008 = vld [vmem:[%s223 + $0xc8] sm:$0xff]
      %v1009 = vld [vmem:[%s223 + $0xd0] sm:$0xff]
      %v1010 = vld [vmem:[%s223 + $0xe8] sm:$0xff]
      %v1011 = vld [vmem:[%s223 + $0xf0] sm:$0xff]
      %v1012 = vld [vmem:[%s223 + $0x108] sm:$0xff]
      %v1013 = vld [vmem:[%s223 + $0x110] sm:$0xff]
      %v1014 = vld [vmem:[%s223 + $0x128] sm:$0xff]
      %v1015 = vld [vmem:[%s223 + $0x130] sm:$0xff]
      %v1016 = vld [vmem:[%s223 + $0x148] sm:$0xff]
      %v1017 = vld [vmem:[%s223 + $0x150] sm:$0xff]
      %v1018 = vld [vmem:[%s223 + $0x168] sm:$0xff]
      %v1019 = vld [vmem:[%s223 + $0x170] sm:$0xff]
      %v1020 = vld [vmem:[%s223 + $0x188] sm:$0xff]
      %v1021 = vld [vmem:[%s223 + $0x190] sm:$0xff]
      %v1022 = vld [vmem:[%s223 + $0x1a8] sm:$0xff]
      %v1023 = vld [vmem:[%s223 + $0x1b0] sm:$0xff]
      %v1024 = vld [vmem:[%s223 + $0x1c8] sm:$0xff]
      %v1025 = vld [vmem:[%s223 + $0x1d0] sm:$0xff]
      %v1026 = vld [vmem:[%s223 + $0x1e8] sm:$0xff]
      %v1027 = vld [vmem:[%s223 + $0x1f0] sm:$0xff]
      %v1028 = vld [vmem:[%s1 + $0x200] sm:$0xff]
      %v1029 = vld [vmem:[%s1 + $0x208] sm:$0xff]
      %v1030 = vld [vmem:[%s1 + $0x210] sm:$0xff]
      %v1031 = vld [vmem:[%s1 + $0x218] sm:$0xff]
      %v1032 = vld [vmem:[%s1 + $0x220] sm:$0xff]
      %v1033 = vld [vmem:[%s1 + $0x228] sm:$0xff]
      %v1034 = vld [vmem:[%s1 + $0x230] sm:$0xff]
      %v1035 = vld [vmem:[%s1 + $0x238] sm:$0xff]
      %v1036 = vld [vmem:[%s1 + $0x240] sm:$0xff]
      %v1037 = vld [vmem:[%s1 + $0x248] sm:$0xff]
      %v1038 = vld [vmem:[%s1 + $0x250] sm:$0xff]
      %v1039 = vld [vmem:[%s1 + $0x258] sm:$0xff]
      %v1040 = vld [vmem:[%s1 + $0x260] sm:$0xff]
      %v1041 = vld [vmem:[%s1 + $0x268] sm:$0xff]
      %v1042 = vld [vmem:[%s1 + $0x270] sm:$0xff]
      %v1043 = vld [vmem:[%s1 + $0x278] sm:$0xff]
      %1044 = vmatpush.msra.mxu0 %v1043
      %1045 = vmatpush.msra.mxu0 %v1042
      %1046 = vmatpush.msra.mxu0 %v1041
      %1047 = vmatpush.msra.mxu0 %v1040
      %1048 = vmatpush.msra.mxu0 %v1039
      %1049 = vmatpush.msra.mxu0 %v1038
      %1050 = vmatpush.msra.mxu0 %v1037
      %1051 = vmatpush.msra.mxu0 %v1036
      %1052 = vmatpush.msra.mxu0 %v1035
      %1053 = vmatpush.msra.mxu0 %v1034
      %1054 = vmatpush.msra.mxu0 %v1033
      %1055 = vmatpush.msra.mxu0 %v1032
      %1056 = vmatpush.msra.mxu0 %v1031
      %1057 = vmatpush.msra.mxu0 %v1030
      %1058 = vmatpush.msra.mxu0 %v1029
      %1059 = vmatpush.msra.mxu0 %v1028
      %1060 = vmatmul.f32.gmra.mxu0 %v996
      %v1061 = vpop.f32.mrf.mxu0
      %v1062 = vadd.f32 0.0, %v1061
      %1063 = vmatmul.f32.gmra.mxu0 %v997
      %v1064 = vpop.f32.mrf.mxu0
      %v1065 = vadd.f32 0.0, %v1064
      %1066 = vmatmul.f32.gmra.mxu0 %v998
      %v1067 = vpop.f32.mrf.mxu0
      %v1068 = vadd.f32 0.0, %v1067
      %1069 = vmatmul.f32.gmra.mxu0 %v999
      %v1070 = vpop.f32.mrf.mxu0
      %v1071 = vadd.f32 0.0, %v1070
      %1072 = vmatmul.f32.gmra.mxu0 %v1000
      %v1073 = vpop.f32.mrf.mxu0
      %v1074 = vadd.f32 0.0, %v1073
      %1075 = vmatmul.f32.gmra.mxu0 %v1001
      %v1076 = vpop.f32.mrf.mxu0
      %v1077 = vadd.f32 0.0, %v1076
      %1078 = vmatmul.f32.gmra.mxu0 %v1002
      %v1079 = vpop.f32.mrf.mxu0
      %v1080 = vadd.f32 0.0, %v1079
      %1081 = vmatmul.f32.gmra.mxu0 %v1003
      %v1082 = vpop.f32.mrf.mxu0
      %v1083 = vadd.f32 0.0, %v1082
      %1084 = vmatmul.f32.gmra.mxu0 %v1004
      %v1085 = vpop.f32.mrf.mxu0
      %v1086 = vadd.f32 0.0, %v1085
      %1087 = vmatmul.f32.gmra.mxu0 %v1005
      %v1088 = vpop.f32.mrf.mxu0
      %v1089 = vadd.f32 0.0, %v1088
      %1090 = vmatmul.f32.gmra.mxu0 %v1006
      %v1091 = vpop.f32.mrf.mxu0
      %v1092 = vadd.f32 0.0, %v1091
      %1093 = vmatmul.f32.gmra.mxu0 %v1007
      %v1094 = vpop.f32.mrf.mxu0
      %v1095 = vadd.f32 0.0, %v1094
      %1096 = vmatmul.f32.gmra.mxu0 %v1008
      %v1097 = vpop.f32.mrf.mxu0
      %v1098 = vadd.f32 0.0, %v1097
      %1099 = vmatmul.f32.gmra.mxu0 %v1009
      %v1100 = vpop.f32.mrf.mxu0
      %v1101 = vadd.f32 0.0, %v1100
      %1102 = vmatmul.f32.gmra.mxu0 %v1010
      %v1103 = vpop.f32.mrf.mxu0
      %v1104 = vadd.f32 0.0, %v1103
      %1105 = vmatmul.f32.gmra.mxu0 %v1011
      %v1106 = vpop.f32.mrf.mxu0
      %v1107 = vadd.f32 0.0, %v1106
      %1108 = vmatmul.f32.gmra.mxu0 %v1012
      %v1109 = vpop.f32.mrf.mxu0
      %v1110 = vadd.f32 0.0, %v1109
      %1111 = vmatmul.f32.gmra.mxu0 %v1013
      %v1112 = vpop.f32.mrf.mxu0
      %v1113 = vadd.f32 0.0, %v1112
      %1114 = vmatmul.f32.gmra.mxu0 %v1014
      %v1115 = vpop.f32.mrf.mxu0
      %v1116 = vadd.f32 0.0, %v1115
      %1117 = vmatmul.f32.gmra.mxu0 %v1015
      %v1118 = vpop.f32.mrf.mxu0
      %v1119 = vadd.f32 0.0, %v1118
      %1120 = vmatmul.f32.gmra.mxu0 %v1016
      %v1121 = vpop.f32.mrf.mxu0
      %v1122 = vadd.f32 0.0, %v1121
      %1123 = vmatmul.f32.gmra.mxu0 %v1017
      %v1124 = vpop.f32.mrf.mxu0
      %v1125 = vadd.f32 0.0, %v1124
      %1126 = vmatmul.f32.gmra.mxu0 %v1018
      %v1127 = vpop.f32.mrf.mxu0
      %v1128 = vadd.f32 0.0, %v1127
      %1129 = vmatmul.f32.gmra.mxu0 %v1019
      %v1130 = vpop.f32.mrf.mxu0
      %v1131 = vadd.f32 0.0, %v1130
      %1132 = vmatmul.f32.gmra.mxu0 %v1020
      %v1133 = vpop.f32.mrf.mxu0
      %v1134 = vadd.f32 0.0, %v1133
      %1135 = vmatmul.f32.gmra.mxu0 %v1021
      %v1136 = vpop.f32.mrf.mxu0
      %v1137 = vadd.f32 0.0, %v1136
      %1138 = vmatmul.f32.gmra.mxu0 %v1022
      %v1139 = vpop.f32.mrf.mxu0
      %v1140 = vadd.f32 0.0, %v1139
      %1141 = vmatmul.f32.gmra.mxu0 %v1023
      %v1142 = vpop.f32.mrf.mxu0
      %v1143 = vadd.f32 0.0, %v1142
      %1144 = vmatmul.f32.gmra.mxu0 %v1024
      %v1145 = vpop.f32.mrf.mxu0
      %v1146 = vadd.f32 0.0, %v1145
      %1147 = vmatmul.f32.gmra.mxu0 %v1025
      %v1148 = vpop.f32.mrf.mxu0
      %v1149 = vadd.f32 0.0, %v1148
      %1150 = vmatmul.f32.gmra.mxu0 %v1026
      %v1151 = vpop.f32.mrf.mxu0
      %v1152 = vadd.f32 0.0, %v1151
      %1153 = vmatmul.f32.gmra.mxu0 %v1027
      %v1154 = vpop.f32.mrf.mxu0
      %v1155 = vadd.f32 0.0, %v1154
      %1156 = vdwg.mxu0
      %v1157 = vadd.f32 %v964, %v1062
      %v1158 = vadd.f32 %v965, %v1065
      %v1159 = vadd.f32 %v966, %v1068
      %v1160 = vadd.f32 %v967, %v1071
      %v1161 = vadd.f32 %v968, %v1074
      %v1162 = vadd.f32 %v969, %v1077
      %v1163 = vadd.f32 %v970, %v1080
      %v1164 = vadd.f32 %v971, %v1083
      %v1165 = vadd.f32 %v972, %v1086
      %v1166 = vadd.f32 %v973, %v1089
      %v1167 = vadd.f32 %v974, %v1092
      %v1168 = vadd.f32 %v975, %v1095
      %v1169 = vadd.f32 %v976, %v1098
      %v1170 = vadd.f32 %v977, %v1101
      %v1171 = vadd.f32 %v978, %v1104
      %v1172 = vadd.f32 %v979, %v1107
      %v1173 = vadd.f32 %v980, %v1110
      %v1174 = vadd.f32 %v981, %v1113
      %v1175 = vadd.f32 %v982, %v1116
      %v1176 = vadd.f32 %v983, %v1119
      %v1177 = vadd.f32 %v984, %v1122
      %v1178 = vadd.f32 %v985, %v1125
      %v1179 = vadd.f32 %v986, %v1128
      %v1180 = vadd.f32 %v987, %v1131
      %v1181 = vadd.f32 %v988, %v1134
      %v1182 = vadd.f32 %v989, %v1137
      %v1183 = vadd.f32 %v990, %v1140
      %v1184 = vadd.f32 %v991, %v1143
      %v1185 = vadd.f32 %v992, %v1146
      %v1186 = vadd.f32 %v993, %v1149
      %v1187 = vadd.f32 %v994, %v1152
      %v1188 = vadd.f32 %v995, %v1155
      %v1189 = vld [vmem:[%s223 + $0x9] sm:$0xff]
      %v1190 = vld [vmem:[%s223 + $0x11] sm:$0xff]
      %v1191 = vld [vmem:[%s223 + $0x29] sm:$0xff]
      %v1192 = vld [vmem:[%s223 + $0x31] sm:$0xff]
      %v1193 = vld [vmem:[%s223 + $0x49] sm:$0xff]
      %v1194 = vld [vmem:[%s223 + $0x51] sm:$0xff]
      %v1195 = vld [vmem:[%s223 + $0x69] sm:$0xff]
      %v1196 = vld [vmem:[%s223 + $0x71] sm:$0xff]
      %v1197 = vld [vmem:[%s223 + $0x89] sm:$0xff]
      %v1198 = vld [vmem:[%s223 + $0x91] sm:$0xff]
      %v1199 = vld [vmem:[%s223 + $0xa9] sm:$0xff]
      %v1200 = vld [vmem:[%s223 + $0xb1] sm:$0xff]
      %v1201 = vld [vmem:[%s223 + $0xc9] sm:$0xff]
      %v1202 = vld [vmem:[%s223 + $0xd1] sm:$0xff]
      %v1203 = vld [vmem:[%s223 + $0xe9] sm:$0xff]
      %v1204 = vld [vmem:[%s223 + $0xf1] sm:$0xff]
      %v1205 = vld [vmem:[%s223 + $0x109] sm:$0xff]
      %v1206 = vld [vmem:[%s223 + $0x111] sm:$0xff]
      %v1207 = vld [vmem:[%s223 + $0x129] sm:$0xff]
      %v1208 = vld [vmem:[%s223 + $0x131] sm:$0xff]
      %v1209 = vld [vmem:[%s223 + $0x149] sm:$0xff]
      %v1210 = vld [vmem:[%s223 + $0x151] sm:$0xff]
      %v1211 = vld [vmem:[%s223 + $0x169] sm:$0xff]
      %v1212 = vld [vmem:[%s223 + $0x171] sm:$0xff]
      %v1213 = vld [vmem:[%s223 + $0x189] sm:$0xff]
      %v1214 = vld [vmem:[%s223 + $0x191] sm:$0xff]
      %v1215 = vld [vmem:[%s223 + $0x1a9] sm:$0xff]
      %v1216 = vld [vmem:[%s223 + $0x1b1] sm:$0xff]
      %v1217 = vld [vmem:[%s223 + $0x1c9] sm:$0xff]
      %v1218 = vld [vmem:[%s223 + $0x1d1] sm:$0xff]
      %v1219 = vld [vmem:[%s223 + $0x1e9] sm:$0xff]
      %v1220 = vld [vmem:[%s223 + $0x1f1] sm:$0xff]
      %v1221 = vld [vmem:[%s1 + $0x280] sm:$0xff]
      %v1222 = vld [vmem:[%s1 + $0x288] sm:$0xff]
      %v1223 = vld [vmem:[%s1 + $0x290] sm:$0xff]
      %v1224 = vld [vmem:[%s1 + $0x298] sm:$0xff]
      %v1225 = vld [vmem:[%s1 + $0x2a0] sm:$0xff]
      %v1226 = vld [vmem:[%s1 + $0x2a8] sm:$0xff]
      %v1227 = vld [vmem:[%s1 + $0x2b0] sm:$0xff]
      %v1228 = vld [vmem:[%s1 + $0x2b8] sm:$0xff]
      %v1229 = vld [vmem:[%s1 + $0x2c0] sm:$0xff]
      %v1230 = vld [vmem:[%s1 + $0x2c8] sm:$0xff]
      %v1231 = vld [vmem:[%s1 + $0x2d0] sm:$0xff]
      %v1232 = vld [vmem:[%s1 + $0x2d8] sm:$0xff]
      %v1233 = vld [vmem:[%s1 + $0x2e0] sm:$0xff]
      %v1234 = vld [vmem:[%s1 + $0x2e8] sm:$0xff]
      %v1235 = vld [vmem:[%s1 + $0x2f0] sm:$0xff]
      %v1236 = vld [vmem:[%s1 + $0x2f8] sm:$0xff]
      %1237 = vmatpush.msra.mxu0 %v1236
      %1238 = vmatpush.msra.mxu0 %v1235
      %1239 = vmatpush.msra.mxu0 %v1234
      %1240 = vmatpush.msra.mxu0 %v1233
      %1241 = vmatpush.msra.mxu0 %v1232
      %1242 = vmatpush.msra.mxu0 %v1231
      %1243 = vmatpush.msra.mxu0 %v1230
      %1244 = vmatpush.msra.mxu0 %v1229
      %1245 = vmatpush.msra.mxu0 %v1228
      %1246 = vmatpush.msra.mxu0 %v1227
      %1247 = vmatpush.msra.mxu0 %v1226
      %1248 = vmatpush.msra.mxu0 %v1225
      %1249 = vmatpush.msra.mxu0 %v1224
      %1250 = vmatpush.msra.mxu0 %v1223
      %1251 = vmatpush.msra.mxu0 %v1222
      %1252 = vmatpush.msra.mxu0 %v1221
      %1253 = vmatmul.f32.gmra.mxu0 %v1189
      %v1254 = vpop.f32.mrf.mxu0
      %v1255 = vadd.f32 0.0, %v1254
      %1256 = vmatmul.f32.gmra.mxu0 %v1190
      %v1257 = vpop.f32.mrf.mxu0
      %v1258 = vadd.f32 0.0, %v1257
      %1259 = vmatmul.f32.gmra.mxu0 %v1191
      %v1260 = vpop.f32.mrf.mxu0
      %v1261 = vadd.f32 0.0, %v1260
      %1262 = vmatmul.f32.gmra.mxu0 %v1192
      %v1263 = vpop.f32.mrf.mxu0
      %v1264 = vadd.f32 0.0, %v1263
      %1265 = vmatmul.f32.gmra.mxu0 %v1193
      %v1266 = vpop.f32.mrf.mxu0
      %v1267 = vadd.f32 0.0, %v1266
      %1268 = vmatmul.f32.gmra.mxu0 %v1194
      %v1269 = vpop.f32.mrf.mxu0
      %v1270 = vadd.f32 0.0, %v1269
      %1271 = vmatmul.f32.gmra.mxu0 %v1195
      %v1272 = vpop.f32.mrf.mxu0
      %v1273 = vadd.f32 0.0, %v1272
      %1274 = vmatmul.f32.gmra.mxu0 %v1196
      %v1275 = vpop.f32.mrf.mxu0
      %v1276 = vadd.f32 0.0, %v1275
      %1277 = vmatmul.f32.gmra.mxu0 %v1197
      %v1278 = vpop.f32.mrf.mxu0
      %v1279 = vadd.f32 0.0, %v1278
      %1280 = vmatmul.f32.gmra.mxu0 %v1198
      %v1281 = vpop.f32.mrf.mxu0
      %v1282 = vadd.f32 0.0, %v1281
      %1283 = vmatmul.f32.gmra.mxu0 %v1199
      %v1284 = vpop.f32.mrf.mxu0
      %v1285 = vadd.f32 0.0, %v1284
      %1286 = vmatmul.f32.gmra.mxu0 %v1200
      %v1287 = vpop.f32.mrf.mxu0
      %v1288 = vadd.f32 0.0, %v1287
      %1289 = vmatmul.f32.gmra.mxu0 %v1201
      %v1290 = vpop.f32.mrf.mxu0
      %v1291 = vadd.f32 0.0, %v1290
      %1292 = vmatmul.f32.gmra.mxu0 %v1202
      %v1293 = vpop.f32.mrf.mxu0
      %v1294 = vadd.f32 0.0, %v1293
      %1295 = vmatmul.f32.gmra.mxu0 %v1203
      %v1296 = vpop.f32.mrf.mxu0
      %v1297 = vadd.f32 0.0, %v1296
      %1298 = vmatmul.f32.gmra.mxu0 %v1204
      %v1299 = vpop.f32.mrf.mxu0
      %v1300 = vadd.f32 0.0, %v1299
      %1301 = vmatmul.f32.gmra.mxu0 %v1205
      %v1302 = vpop.f32.mrf.mxu0
      %v1303 = vadd.f32 0.0, %v1302
      %1304 = vmatmul.f32.gmra.mxu0 %v1206
      %v1305 = vpop.f32.mrf.mxu0
      %v1306 = vadd.f32 0.0, %v1305
      %1307 = vmatmul.f32.gmra.mxu0 %v1207
      %v1308 = vpop.f32.mrf.mxu0
      %v1309 = vadd.f32 0.0, %v1308
      %1310 = vmatmul.f32.gmra.mxu0 %v1208
      %v1311 = vpop.f32.mrf.mxu0
      %v1312 = vadd.f32 0.0, %v1311
      %1313 = vmatmul.f32.gmra.mxu0 %v1209
      %v1314 = vpop.f32.mrf.mxu0
      %v1315 = vadd.f32 0.0, %v1314
      %1316 = vmatmul.f32.gmra.mxu0 %v1210
      %v1317 = vpop.f32.mrf.mxu0
      %v1318 = vadd.f32 0.0, %v1317
      %1319 = vmatmul.f32.gmra.mxu0 %v1211
      %v1320 = vpop.f32.mrf.mxu0
      %v1321 = vadd.f32 0.0, %v1320
      %1322 = vmatmul.f32.gmra.mxu0 %v1212
      %v1323 = vpop.f32.mrf.mxu0
      %v1324 = vadd.f32 0.0, %v1323
      %1325 = vmatmul.f32.gmra.mxu0 %v1213
      %v1326 = vpop.f32.mrf.mxu0
      %v1327 = vadd.f32 0.0, %v1326
      %1328 = vmatmul.f32.gmra.mxu0 %v1214
      %v1329 = vpop.f32.mrf.mxu0
      %v1330 = vadd.f32 0.0, %v1329
      %1331 = vmatmul.f32.gmra.mxu0 %v1215
      %v1332 = vpop.f32.mrf.mxu0
      %v1333 = vadd.f32 0.0, %v1332
      %1334 = vmatmul.f32.gmra.mxu0 %v1216
      %v1335 = vpop.f32.mrf.mxu0
      %v1336 = vadd.f32 0.0, %v1335
      %1337 = vmatmul.f32.gmra.mxu0 %v1217
      %v1338 = vpop.f32.mrf.mxu0
      %v1339 = vadd.f32 0.0, %v1338
      %1340 = vmatmul.f32.gmra.mxu0 %v1218
      %v1341 = vpop.f32.mrf.mxu0
      %v1342 = vadd.f32 0.0, %v1341
      %1343 = vmatmul.f32.gmra.mxu0 %v1219
      %v1344 = vpop.f32.mrf.mxu0
      %v1345 = vadd.f32 0.0, %v1344
      %1346 = vmatmul.f32.gmra.mxu0 %v1220
      %v1347 = vpop.f32.mrf.mxu0
      %v1348 = vadd.f32 0.0, %v1347
      %1349 = vdwg.mxu0
      %v1350 = vadd.f32 %v1157, %v1255
      %v1351 = vadd.f32 %v1158, %v1258
      %v1352 = vadd.f32 %v1159, %v1261
      %v1353 = vadd.f32 %v1160, %v1264
      %v1354 = vadd.f32 %v1161, %v1267
      %v1355 = vadd.f32 %v1162, %v1270
      %v1356 = vadd.f32 %v1163, %v1273
      %v1357 = vadd.f32 %v1164, %v1276
      %v1358 = vadd.f32 %v1165, %v1279
      %v1359 = vadd.f32 %v1166, %v1282
      %v1360 = vadd.f32 %v1167, %v1285
      %v1361 = vadd.f32 %v1168, %v1288
      %v1362 = vadd.f32 %v1169, %v1291
      %v1363 = vadd.f32 %v1170, %v1294
      %v1364 = vadd.f32 %v1171, %v1297
      %v1365 = vadd.f32 %v1172, %v1300
      %v1366 = vadd.f32 %v1173, %v1303
      %v1367 = vadd.f32 %v1174, %v1306
      %v1368 = vadd.f32 %v1175, %v1309
      %v1369 = vadd.f32 %v1176, %v1312
      %v1370 = vadd.f32 %v1177, %v1315
      %v1371 = vadd.f32 %v1178, %v1318
      %v1372 = vadd.f32 %v1179, %v1321
      %v1373 = vadd.f32 %v1180, %v1324
      %v1374 = vadd.f32 %v1181, %v1327
      %v1375 = vadd.f32 %v1182, %v1330
      %v1376 = vadd.f32 %v1183, %v1333
      %v1377 = vadd.f32 %v1184, %v1336
      %v1378 = vadd.f32 %v1185, %v1339
      %v1379 = vadd.f32 %v1186, %v1342
      %v1380 = vadd.f32 %v1187, %v1345
      %v1381 = vadd.f32 %v1188, %v1348
      %s1382 = scalar_lea.vmem [#allocation2], 64
      %v1383 = vld [vmem:[%s1382 + $0x7] sm:$0xff]
      %v1384 = vld [vmem:[%s1382 + $0xf] sm:$0xff]
      %v1385 = vld [vmem:[%s1382 + $0x27] sm:$0xff]
      %v1386 = vld [vmem:[%s1382 + $0x2f] sm:$0xff]
      %v1387 = vld [vmem:[%s1382 + $0x47] sm:$0xff]
      %v1388 = vld [vmem:[%s1382 + $0x4f] sm:$0xff]
      %v1389 = vld [vmem:[%s1382 + $0x67] sm:$0xff]
      %v1390 = vld [vmem:[%s1382 + $0x6f] sm:$0xff]
      %v1391 = vld [vmem:[%s1382 + $0x87] sm:$0xff]
      %v1392 = vld [vmem:[%s1382 + $0x8f] sm:$0xff]
      %v1393 = vld [vmem:[%s1382 + $0xa7] sm:$0xff]
      %v1394 = vld [vmem:[%s1382 + $0xaf] sm:$0xff]
      %v1395 = vld [vmem:[%s1382 + $0xc7] sm:$0xff]
      %v1396 = vld [vmem:[%s1382 + $0xcf] sm:$0xff]
      %v1397 = vld [vmem:[%s1382 + $0xe7] sm:$0xff]
      %v1398 = vld [vmem:[%s1382 + $0xef] sm:$0xff]
      %v1399 = vld [vmem:[%s1382 + $0x107] sm:$0xff]
      %v1400 = vld [vmem:[%s1382 + $0x10f] sm:$0xff]
      %v1401 = vld [vmem:[%s1382 + $0x127] sm:$0xff]
      %v1402 = vld [vmem:[%s1382 + $0x12f] sm:$0xff]
      %v1403 = vld [vmem:[%s1382 + $0x147] sm:$0xff]
      %v1404 = vld [vmem:[%s1382 + $0x14f] sm:$0xff]
      %v1405 = vld [vmem:[%s1382 + $0x167] sm:$0xff]
      %v1406 = vld [vmem:[%s1382 + $0x16f] sm:$0xff]
      %v1407 = vld [vmem:[%s1382 + $0x187] sm:$0xff]
      %v1408 = vld [vmem:[%s1382 + $0x18f] sm:$0xff]
      %v1409 = vld [vmem:[%s1382 + $0x1a7] sm:$0xff]
      %v1410 = vld [vmem:[%s1382 + $0x1af] sm:$0xff]
      %v1411 = vld [vmem:[%s1382 + $0x1c7] sm:$0xff]
      %v1412 = vld [vmem:[%s1382 + $0x1cf] sm:$0xff]
      %v1413 = vld [vmem:[%s1382 + $0x1e7] sm:$0xff]
      %v1414 = vld [vmem:[%s1382 + $0x1ef] sm:$0xff]
      %v1415 = vld [vmem:[%s1 + $0x300] sm:$0xff]
      %v1416 = vld [vmem:[%s1 + $0x308] sm:$0xff]
      %v1417 = vld [vmem:[%s1 + $0x310] sm:$0xff]
      %v1418 = vld [vmem:[%s1 + $0x318] sm:$0xff]
      %v1419 = vld [vmem:[%s1 + $0x320] sm:$0xff]
      %v1420 = vld [vmem:[%s1 + $0x328] sm:$0xff]
      %v1421 = vld [vmem:[%s1 + $0x330] sm:$0xff]
      %v1422 = vld [vmem:[%s1 + $0x338] sm:$0xff]
      %v1423 = vld [vmem:[%s1 + $0x340] sm:$0xff]
      %v1424 = vld [vmem:[%s1 + $0x348] sm:$0xff]
      %v1425 = vld [vmem:[%s1 + $0x350] sm:$0xff]
      %v1426 = vld [vmem:[%s1 + $0x358] sm:$0xff]
      %v1427 = vld [vmem:[%s1 + $0x360] sm:$0xff]
      %v1428 = vld [vmem:[%s1 + $0x368] sm:$0xff]
      %v1429 = vld [vmem:[%s1 + $0x370] sm:$0xff]
      %v1430 = vld [vmem:[%s1 + $0x378] sm:$0xff]
      %1431 = vmatpush.msra.mxu0 %v1430
      %1432 = vmatpush.msra.mxu0 %v1429
      %1433 = vmatpush.msra.mxu0 %v1428
      %1434 = vmatpush.msra.mxu0 %v1427
      %1435 = vmatpush.msra.mxu0 %v1426
      %1436 = vmatpush.msra.mxu0 %v1425
      %1437 = vmatpush.msra.mxu0 %v1424
      %1438 = vmatpush.msra.mxu0 %v1423
      %1439 = vmatpush.msra.mxu0 %v1422
      %1440 = vmatpush.msra.mxu0 %v1421
      %1441 = vmatpush.msra.mxu0 %v1420
      %1442 = vmatpush.msra.mxu0 %v1419
      %1443 = vmatpush.msra.mxu0 %v1418
      %1444 = vmatpush.msra.mxu0 %v1417
      %1445 = vmatpush.msra.mxu0 %v1416
      %1446 = vmatpush.msra.mxu0 %v1415
      %1447 = vmatmul.f32.gmra.mxu0 %v1383
      %v1448 = vpop.f32.mrf.mxu0
      %v1449 = vadd.f32 0.0, %v1448
      %1450 = vmatmul.f32.gmra.mxu0 %v1384
      %v1451 = vpop.f32.mrf.mxu0
      %v1452 = vadd.f32 0.0, %v1451
      %1453 = vmatmul.f32.gmra.mxu0 %v1385
      %v1454 = vpop.f32.mrf.mxu0
      %v1455 = vadd.f32 0.0, %v1454
      %1456 = vmatmul.f32.gmra.mxu0 %v1386
      %v1457 = vpop.f32.mrf.mxu0
      %v1458 = vadd.f32 0.0, %v1457
      %1459 = vmatmul.f32.gmra.mxu0 %v1387
      %v1460 = vpop.f32.mrf.mxu0
      %v1461 = vadd.f32 0.0, %v1460
      %1462 = vmatmul.f32.gmra.mxu0 %v1388
      %v1463 = vpop.f32.mrf.mxu0
      %v1464 = vadd.f32 0.0, %v1463
      %1465 = vmatmul.f32.gmra.mxu0 %v1389
      %v1466 = vpop.f32.mrf.mxu0
      %v1467 = vadd.f32 0.0, %v1466
      %1468 = vmatmul.f32.gmra.mxu0 %v1390
      %v1469 = vpop.f32.mrf.mxu0
      %v1470 = vadd.f32 0.0, %v1469
      %1471 = vmatmul.f32.gmra.mxu0 %v1391
      %v1472 = vpop.f32.mrf.mxu0
      %v1473 = vadd.f32 0.0, %v1472
      %1474 = vmatmul.f32.gmra.mxu0 %v1392
      %v1475 = vpop.f32.mrf.mxu0
      %v1476 = vadd.f32 0.0, %v1475
      %1477 = vmatmul.f32.gmra.mxu0 %v1393
      %v1478 = vpop.f32.mrf.mxu0
      %v1479 = vadd.f32 0.0, %v1478
      %1480 = vmatmul.f32.gmra.mxu0 %v1394
      %v1481 = vpop.f32.mrf.mxu0
      %v1482 = vadd.f32 0.0, %v1481
      %1483 = vmatmul.f32.gmra.mxu0 %v1395
      %v1484 = vpop.f32.mrf.mxu0
      %v1485 = vadd.f32 0.0, %v1484
      %1486 = vmatmul.f32.gmra.mxu0 %v1396
      %v1487 = vpop.f32.mrf.mxu0
      %v1488 = vadd.f32 0.0, %v1487
      %1489 = vmatmul.f32.gmra.mxu0 %v1397
      %v1490 = vpop.f32.mrf.mxu0
      %v1491 = vadd.f32 0.0, %v1490
      %1492 = vmatmul.f32.gmra.mxu0 %v1398
      %v1493 = vpop.f32.mrf.mxu0
      %v1494 = vadd.f32 0.0, %v1493
      %1495 = vmatmul.f32.gmra.mxu0 %v1399
      %v1496 = vpop.f32.mrf.mxu0
      %v1497 = vadd.f32 0.0, %v1496
      %1498 = vmatmul.f32.gmra.mxu0 %v1400
      %v1499 = vpop.f32.mrf.mxu0
      %v1500 = vadd.f32 0.0, %v1499
      %1501 = vmatmul.f32.gmra.mxu0 %v1401
      %v1502 = vpop.f32.mrf.mxu0
      %v1503 = vadd.f32 0.0, %v1502
      %1504 = vmatmul.f32.gmra.mxu0 %v1402
      %v1505 = vpop.f32.mrf.mxu0
      %v1506 = vadd.f32 0.0, %v1505
      %1507 = vmatmul.f32.gmra.mxu0 %v1403
      %v1508 = vpop.f32.mrf.mxu0
      %v1509 = vadd.f32 0.0, %v1508
      %1510 = vmatmul.f32.gmra.mxu0 %v1404
      %v1511 = vpop.f32.mrf.mxu0
      %v1512 = vadd.f32 0.0, %v1511
      %1513 = vmatmul.f32.gmra.mxu0 %v1405
      %v1514 = vpop.f32.mrf.mxu0
      %v1515 = vadd.f32 0.0, %v1514
      %1516 = vmatmul.f32.gmra.mxu0 %v1406
      %v1517 = vpop.f32.mrf.mxu0
      %v1518 = vadd.f32 0.0, %v1517
      %1519 = vmatmul.f32.gmra.mxu0 %v1407
      %v1520 = vpop.f32.mrf.mxu0
      %v1521 = vadd.f32 0.0, %v1520
      %1522 = vmatmul.f32.gmra.mxu0 %v1408
      %v1523 = vpop.f32.mrf.mxu0
      %v1524 = vadd.f32 0.0, %v1523
      %1525 = vmatmul.f32.gmra.mxu0 %v1409
      %v1526 = vpop.f32.mrf.mxu0
      %v1527 = vadd.f32 0.0, %v1526
      %1528 = vmatmul.f32.gmra.mxu0 %v1410
      %v1529 = vpop.f32.mrf.mxu0
      %v1530 = vadd.f32 0.0, %v1529
      %1531 = vmatmul.f32.gmra.mxu0 %v1411
      %v1532 = vpop.f32.mrf.mxu0
      %v1533 = vadd.f32 0.0, %v1532
      %1534 = vmatmul.f32.gmra.mxu0 %v1412
      %v1535 = vpop.f32.mrf.mxu0
      %v1536 = vadd.f32 0.0, %v1535
      %1537 = vmatmul.f32.gmra.mxu0 %v1413
      %v1538 = vpop.f32.mrf.mxu0
      %v1539 = vadd.f32 0.0, %v1538
      %1540 = vmatmul.f32.gmra.mxu0 %v1414
      %v1541 = vpop.f32.mrf.mxu0
      %v1542 = vadd.f32 0.0, %v1541
      %1543 = vdwg.mxu0
      %v1544 = vadd.f32 %v1350, %v1449
      %v1545 = vadd.f32 %v1351, %v1452
      %v1546 = vadd.f32 %v1352, %v1455
      %v1547 = vadd.f32 %v1353, %v1458
      %v1548 = vadd.f32 %v1354, %v1461
      %v1549 = vadd.f32 %v1355, %v1464
      %v1550 = vadd.f32 %v1356, %v1467
      %v1551 = vadd.f32 %v1357, %v1470
      %v1552 = vadd.f32 %v1358, %v1473
      %v1553 = vadd.f32 %v1359, %v1476
      %v1554 = vadd.f32 %v1360, %v1479
      %v1555 = vadd.f32 %v1361, %v1482
      %v1556 = vadd.f32 %v1362, %v1485
      %v1557 = vadd.f32 %v1363, %v1488
      %v1558 = vadd.f32 %v1364, %v1491
      %v1559 = vadd.f32 %v1365, %v1494
      %v1560 = vadd.f32 %v1366, %v1497
      %v1561 = vadd.f32 %v1367, %v1500
      %v1562 = vadd.f32 %v1368, %v1503
      %v1563 = vadd.f32 %v1369, %v1506
      %v1564 = vadd.f32 %v1370, %v1509
      %v1565 = vadd.f32 %v1371, %v1512
      %v1566 = vadd.f32 %v1372, %v1515
      %v1567 = vadd.f32 %v1373, %v1518
      %v1568 = vadd.f32 %v1374, %v1521
      %v1569 = vadd.f32 %v1375, %v1524
      %v1570 = vadd.f32 %v1376, %v1527
      %v1571 = vadd.f32 %v1377, %v1530
      %v1572 = vadd.f32 %v1378, %v1533
      %v1573 = vadd.f32 %v1379, %v1536
      %v1574 = vadd.f32 %v1380, %v1539
      %v1575 = vadd.f32 %v1381, %v1542
      %v1576 = vld [vmem:[%s1382 + $0x8] sm:$0xff]
      %v1577 = vld [vmem:[%s1382 + $0x10] sm:$0xff]
      %v1578 = vld [vmem:[%s1382 + $0x28] sm:$0xff]
      %v1579 = vld [vmem:[%s1382 + $0x30] sm:$0xff]
      %v1580 = vld [vmem:[%s1382 + $0x48] sm:$0xff]
      %v1581 = vld [vmem:[%s1382 + $0x50] sm:$0xff]
      %v1582 = vld [vmem:[%s1382 + $0x68] sm:$0xff]
      %v1583 = vld [vmem:[%s1382 + $0x70] sm:$0xff]
      %v1584 = vld [vmem:[%s1382 + $0x88] sm:$0xff]
      %v1585 = vld [vmem:[%s1382 + $0x90] sm:$0xff]
      %v1586 = vld [vmem:[%s1382 + $0xa8] sm:$0xff]
      %v1587 = vld [vmem:[%s1382 + $0xb0] sm:$0xff]
      %v1588 = vld [vmem:[%s1382 + $0xc8] sm:$0xff]
      %v1589 = vld [vmem:[%s1382 + $0xd0] sm:$0xff]
      %v1590 = vld [vmem:[%s1382 + $0xe8] sm:$0xff]
      %v1591 = vld [vmem:[%s1382 + $0xf0] sm:$0xff]
      %v1592 = vld [vmem:[%s1382 + $0x108] sm:$0xff]
      %v1593 = vld [vmem:[%s1382 + $0x110] sm:$0xff]
      %v1594 = vld [vmem:[%s1382 + $0x128] sm:$0xff]
      %v1595 = vld [vmem:[%s1382 + $0x130] sm:$0xff]
      %v1596 = vld [vmem:[%s1382 + $0x148] sm:$0xff]
      %v1597 = vld [vmem:[%s1382 + $0x150] sm:$0xff]
      %v1598 = vld [vmem:[%s1382 + $0x168] sm:$0xff]
      %v1599 = vld [vmem:[%s1382 + $0x170] sm:$0xff]
      %v1600 = vld [vmem:[%s1382 + $0x188] sm:$0xff]
      %v1601 = vld [vmem:[%s1382 + $0x190] sm:$0xff]
      %v1602 = vld [vmem:[%s1382 + $0x1a8] sm:$0xff]
      %v1603 = vld [vmem:[%s1382 + $0x1b0] sm:$0xff]
      %v1604 = vld [vmem:[%s1382 + $0x1c8] sm:$0xff]
      %v1605 = vld [vmem:[%s1382 + $0x1d0] sm:$0xff]
      %v1606 = vld [vmem:[%s1382 + $0x1e8] sm:$0xff]
      %v1607 = vld [vmem:[%s1382 + $0x1f0] sm:$0xff]
      %v1608 = vld [vmem:[%s1 + $0x380] sm:$0xff]
      %v1609 = vld [vmem:[%s1 + $0x388] sm:$0xff]
      %v1610 = vld [vmem:[%s1 + $0x390] sm:$0xff]
      %v1611 = vld [vmem:[%s1 + $0x398] sm:$0xff]
      %v1612 = vld [vmem:[%s1 + $0x3a0] sm:$0xff]
      %v1613 = vld [vmem:[%s1 + $0x3a8] sm:$0xff]
      %v1614 = vld [vmem:[%s1 + $0x3b0] sm:$0xff]
      %v1615 = vld [vmem:[%s1 + $0x3b8] sm:$0xff]
      %v1616 = vld [vmem:[%s1 + $0x3c0] sm:$0xff]
      %v1617 = vld [vmem:[%s1 + $0x3c8] sm:$0xff]
      %v1618 = vld [vmem:[%s1 + $0x3d0] sm:$0xff]
      %v1619 = vld [vmem:[%s1 + $0x3d8] sm:$0xff]
      %v1620 = vld [vmem:[%s1 + $0x3e0] sm:$0xff]
      %v1621 = vld [vmem:[%s1 + $0x3e8] sm:$0xff]
      %v1622 = vld [vmem:[%s1 + $0x3f0] sm:$0xff]
      %v1623 = vld [vmem:[%s1 + $0x3f8] sm:$0xff]
      %1624 = vmatpush.msra.mxu0 %v1623
      %1625 = vmatpush.msra.mxu0 %v1622
      %1626 = vmatpush.msra.mxu0 %v1621
      %1627 = vmatpush.msra.mxu0 %v1620
      %1628 = vmatpush.msra.mxu0 %v1619
      %1629 = vmatpush.msra.mxu0 %v1618
      %1630 = vmatpush.msra.mxu0 %v1617
      %1631 = vmatpush.msra.mxu0 %v1616
      %1632 = vmatpush.msra.mxu0 %v1615
      %1633 = vmatpush.msra.mxu0 %v1614
      %1634 = vmatpush.msra.mxu0 %v1613
      %1635 = vmatpush.msra.mxu0 %v1612
      %1636 = vmatpush.msra.mxu0 %v1611
      %1637 = vmatpush.msra.mxu0 %v1610
      %1638 = vmatpush.msra.mxu0 %v1609
      %1639 = vmatpush.msra.mxu0 %v1608
      %1640 = vmatmul.f32.gmra.mxu0 %v1576
      %v1641 = vpop.f32.mrf.mxu0
      %v1642 = vadd.f32 0.0, %v1641
      %1643 = vmatmul.f32.gmra.mxu0 %v1577
      %v1644 = vpop.f32.mrf.mxu0
      %v1645 = vadd.f32 0.0, %v1644
      %1646 = vmatmul.f32.gmra.mxu0 %v1578
      %v1647 = vpop.f32.mrf.mxu0
      %v1648 = vadd.f32 0.0, %v1647
      %1649 = vmatmul.f32.gmra.mxu0 %v1579
      %v1650 = vpop.f32.mrf.mxu0
      %v1651 = vadd.f32 0.0, %v1650
      %1652 = vmatmul.f32.gmra.mxu0 %v1580
      %v1653 = vpop.f32.mrf.mxu0
      %v1654 = vadd.f32 0.0, %v1653
      %1655 = vmatmul.f32.gmra.mxu0 %v1581
      %v1656 = vpop.f32.mrf.mxu0
      %v1657 = vadd.f32 0.0, %v1656
      %1658 = vmatmul.f32.gmra.mxu0 %v1582
      %v1659 = vpop.f32.mrf.mxu0
      %v1660 = vadd.f32 0.0, %v1659
      %1661 = vmatmul.f32.gmra.mxu0 %v1583
      %v1662 = vpop.f32.mrf.mxu0
      %v1663 = vadd.f32 0.0, %v1662
      %1664 = vmatmul.f32.gmra.mxu0 %v1584
      %v1665 = vpop.f32.mrf.mxu0
      %v1666 = vadd.f32 0.0, %v1665
      %1667 = vmatmul.f32.gmra.mxu0 %v1585
      %v1668 = vpop.f32.mrf.mxu0
      %v1669 = vadd.f32 0.0, %v1668
      %1670 = vmatmul.f32.gmra.mxu0 %v1586
      %v1671 = vpop.f32.mrf.mxu0
      %v1672 = vadd.f32 0.0, %v1671
      %1673 = vmatmul.f32.gmra.mxu0 %v1587
      %v1674 = vpop.f32.mrf.mxu0
      %v1675 = vadd.f32 0.0, %v1674
      %1676 = vmatmul.f32.gmra.mxu0 %v1588
      %v1677 = vpop.f32.mrf.mxu0
      %v1678 = vadd.f32 0.0, %v1677
      %1679 = vmatmul.f32.gmra.mxu0 %v1589
      %v1680 = vpop.f32.mrf.mxu0
      %v1681 = vadd.f32 0.0, %v1680
      %1682 = vmatmul.f32.gmra.mxu0 %v1590
      %v1683 = vpop.f32.mrf.mxu0
      %v1684 = vadd.f32 0.0, %v1683
      %1685 = vmatmul.f32.gmra.mxu0 %v1591
      %v1686 = vpop.f32.mrf.mxu0
      %v1687 = vadd.f32 0.0, %v1686
      %1688 = vmatmul.f32.gmra.mxu0 %v1592
      %v1689 = vpop.f32.mrf.mxu0
      %v1690 = vadd.f32 0.0, %v1689
      %1691 = vmatmul.f32.gmra.mxu0 %v1593
      %v1692 = vpop.f32.mrf.mxu0
      %v1693 = vadd.f32 0.0, %v1692
      %1694 = vmatmul.f32.gmra.mxu0 %v1594
      %v1695 = vpop.f32.mrf.mxu0
      %v1696 = vadd.f32 0.0, %v1695
      %1697 = vmatmul.f32.gmra.mxu0 %v1595
      %v1698 = vpop.f32.mrf.mxu0
      %v1699 = vadd.f32 0.0, %v1698
      %1700 = vmatmul.f32.gmra.mxu0 %v1596
      %v1701 = vpop.f32.mrf.mxu0
      %v1702 = vadd.f32 0.0, %v1701
      %1703 = vmatmul.f32.gmra.mxu0 %v1597
      %v1704 = vpop.f32.mrf.mxu0
      %v1705 = vadd.f32 0.0, %v1704
      %1706 = vmatmul.f32.gmra.mxu0 %v1598
      %v1707 = vpop.f32.mrf.mxu0
      %v1708 = vadd.f32 0.0, %v1707
      %1709 = vmatmul.f32.gmra.mxu0 %v1599
      %v1710 = vpop.f32.mrf.mxu0
      %v1711 = vadd.f32 0.0, %v1710
      %1712 = vmatmul.f32.gmra.mxu0 %v1600
      %v1713 = vpop.f32.mrf.mxu0
      %v1714 = vadd.f32 0.0, %v1713
      %1715 = vmatmul.f32.gmra.mxu0 %v1601
      %v1716 = vpop.f32.mrf.mxu0
      %v1717 = vadd.f32 0.0, %v1716
      %1718 = vmatmul.f32.gmra.mxu0 %v1602
      %v1719 = vpop.f32.mrf.mxu0
      %v1720 = vadd.f32 0.0, %v1719
      %1721 = vmatmul.f32.gmra.mxu0 %v1603
      %v1722 = vpop.f32.mrf.mxu0
      %v1723 = vadd.f32 0.0, %v1722
      %1724 = vmatmul.f32.gmra.mxu0 %v1604
      %v1725 = vpop.f32.mrf.mxu0
      %v1726 = vadd.f32 0.0, %v1725
      %1727 = vmatmul.f32.gmra.mxu0 %v1605
      %v1728 = vpop.f32.mrf.mxu0
      %v1729 = vadd.f32 0.0, %v1728
      %1730 = vmatmul.f32.gmra.mxu0 %v1606
      %v1731 = vpop.f32.mrf.mxu0
      %v1732 = vadd.f32 0.0, %v1731
      %1733 = vmatmul.f32.gmra.mxu0 %v1607
      %v1734 = vpop.f32.mrf.mxu0
      %v1735 = vadd.f32 0.0, %v1734
      %1736 = vdwg.mxu0
      %v1737 = vadd.f32 %v1544, %v1642
      %v1738 = vadd.f32 %v1545, %v1645
      %v1739 = vadd.f32 %v1546, %v1648
      %v1740 = vadd.f32 %v1547, %v1651
      %v1741 = vadd.f32 %v1548, %v1654
      %v1742 = vadd.f32 %v1549, %v1657
      %v1743 = vadd.f32 %v1550, %v1660
      %v1744 = vadd.f32 %v1551, %v1663
      %v1745 = vadd.f32 %v1552, %v1666
      %v1746 = vadd.f32 %v1553, %v1669
      %v1747 = vadd.f32 %v1554, %v1672
      %v1748 = vadd.f32 %v1555, %v1675
      %v1749 = vadd.f32 %v1556, %v1678
      %v1750 = vadd.f32 %v1557, %v1681
      %v1751 = vadd.f32 %v1558, %v1684
      %v1752 = vadd.f32 %v1559, %v1687
      %v1753 = vadd.f32 %v1560, %v1690
      %v1754 = vadd.f32 %v1561, %v1693
      %v1755 = vadd.f32 %v1562, %v1696
      %v1756 = vadd.f32 %v1563, %v1699
      %v1757 = vadd.f32 %v1564, %v1702
      %v1758 = vadd.f32 %v1565, %v1705
      %v1759 = vadd.f32 %v1566, %v1708
      %v1760 = vadd.f32 %v1567, %v1711
      %v1761 = vadd.f32 %v1568, %v1714
      %v1762 = vadd.f32 %v1569, %v1717
      %v1763 = vadd.f32 %v1570, %v1720
      %v1764 = vadd.f32 %v1571, %v1723
      %v1765 = vadd.f32 %v1572, %v1726
      %v1766 = vadd.f32 %v1573, %v1729
      %v1767 = vadd.f32 %v1574, %v1732
      %v1768 = vadd.f32 %v1575, %v1735
      %v1769 = vld [vmem:[%s1382 + $0x9] sm:$0xff]
      %v1770 = vld [vmem:[%s1382 + $0x11] sm:$0xff]
      %v1771 = vld [vmem:[%s1382 + $0x29] sm:$0xff]
      %v1772 = vld [vmem:[%s1382 + $0x31] sm:$0xff]
      %v1773 = vld [vmem:[%s1382 + $0x49] sm:$0xff]
      %v1774 = vld [vmem:[%s1382 + $0x51] sm:$0xff]
      %v1775 = vld [vmem:[%s1382 + $0x69] sm:$0xff]
      %v1776 = vld [vmem:[%s1382 + $0x71] sm:$0xff]
      %v1777 = vld [vmem:[%s1382 + $0x89] sm:$0xff]
      %v1778 = vld [vmem:[%s1382 + $0x91] sm:$0xff]
      %v1779 = vld [vmem:[%s1382 + $0xa9] sm:$0xff]
      %v1780 = vld [vmem:[%s1382 + $0xb1] sm:$0xff]
      %v1781 = vld [vmem:[%s1382 + $0xc9] sm:$0xff]
      %v1782 = vld [vmem:[%s1382 + $0xd1] sm:$0xff]
      %v1783 = vld [vmem:[%s1382 + $0xe9] sm:$0xff]
      %v1784 = vld [vmem:[%s1382 + $0xf1] sm:$0xff]
      %v1785 = vld [vmem:[%s1382 + $0x109] sm:$0xff]
      %v1786 = vld [vmem:[%s1382 + $0x111] sm:$0xff]
      %v1787 = vld [vmem:[%s1382 + $0x129] sm:$0xff]
      %v1788 = vld [vmem:[%s1382 + $0x131] sm:$0xff]
      %v1789 = vld [vmem:[%s1382 + $0x149] sm:$0xff]
      %v1790 = vld [vmem:[%s1382 + $0x151] sm:$0xff]
      %v1791 = vld [vmem:[%s1382 + $0x169] sm:$0xff]
      %v1792 = vld [vmem:[%s1382 + $0x171] sm:$0xff]
      %v1793 = vld [vmem:[%s1382 + $0x189] sm:$0xff]
      %v1794 = vld [vmem:[%s1382 + $0x191] sm:$0xff]
      %v1795 = vld [vmem:[%s1382 + $0x1a9] sm:$0xff]
      %v1796 = vld [vmem:[%s1382 + $0x1b1] sm:$0xff]
      %v1797 = vld [vmem:[%s1382 + $0x1c9] sm:$0xff]
      %v1798 = vld [vmem:[%s1382 + $0x1d1] sm:$0xff]
      %v1799 = vld [vmem:[%s1382 + $0x1e9] sm:$0xff]
      %v1800 = vld [vmem:[%s1382 + $0x1f1] sm:$0xff]
      %v1801 = vld [vmem:[%s1 + $0x400] sm:$0xff]
      %v1802 = vld [vmem:[%s1 + $0x408] sm:$0xff]
      %v1803 = vld [vmem:[%s1 + $0x410] sm:$0xff]
      %v1804 = vld [vmem:[%s1 + $0x418] sm:$0xff]
      %v1805 = vld [vmem:[%s1 + $0x420] sm:$0xff]
      %v1806 = vld [vmem:[%s1 + $0x428] sm:$0xff]
      %v1807 = vld [vmem:[%s1 + $0x430] sm:$0xff]
      %v1808 = vld [vmem:[%s1 + $0x438] sm:$0xff]
      %v1809 = vld [vmem:[%s1 + $0x440] sm:$0xff]
      %v1810 = vld [vmem:[%s1 + $0x448] sm:$0xff]
      %v1811 = vld [vmem:[%s1 + $0x450] sm:$0xff]
      %v1812 = vld [vmem:[%s1 + $0x458] sm:$0xff]
      %v1813 = vld [vmem:[%s1 + $0x460] sm:$0xff]
      %v1814 = vld [vmem:[%s1 + $0x468] sm:$0xff]
      %v1815 = vld [vmem:[%s1 + $0x470] sm:$0xff]
      %v1816 = vld [vmem:[%s1 + $0x478] sm:$0xff]
      %1817 = vmatpush.msra.mxu0 %v1816
      %1818 = vmatpush.msra.mxu0 %v1815
      %1819 = vmatpush.msra.mxu0 %v1814
      %1820 = vmatpush.msra.mxu0 %v1813
      %1821 = vmatpush.msra.mxu0 %v1812
      %1822 = vmatpush.msra.mxu0 %v1811
      %1823 = vmatpush.msra.mxu0 %v1810
      %1824 = vmatpush.msra.mxu0 %v1809
      %1825 = vmatpush.msra.mxu0 %v1808
      %1826 = vmatpush.msra.mxu0 %v1807
      %1827 = vmatpush.msra.mxu0 %v1806
      %1828 = vmatpush.msra.mxu0 %v1805
      %1829 = vmatpush.msra.mxu0 %v1804
      %1830 = vmatpush.msra.mxu0 %v1803
      %1831 = vmatpush.msra.mxu0 %v1802
      %1832 = vmatpush.msra.mxu0 %v1801
      %1833 = vmatmul.f32.gmra.mxu0 %v1769
      %v1834 = vpop.f32.mrf.mxu0
      %v1835 = vadd.f32 0.0, %v1834
      %1836 = vmatmul.f32.gmra.mxu0 %v1770
      %v1837 = vpop.f32.mrf.mxu0
      %v1838 = vadd.f32 0.0, %v1837
      %1839 = vmatmul.f32.gmra.mxu0 %v1771
      %v1840 = vpop.f32.mrf.mxu0
      %v1841 = vadd.f32 0.0, %v1840
      %1842 = vmatmul.f32.gmra.mxu0 %v1772
      %v1843 = vpop.f32.mrf.mxu0
      %v1844 = vadd.f32 0.0, %v1843
      %1845 = vmatmul.f32.gmra.mxu0 %v1773
      %v1846 = vpop.f32.mrf.mxu0
      %v1847 = vadd.f32 0.0, %v1846
      %1848 = vmatmul.f32.gmra.mxu0 %v1774
      %v1849 = vpop.f32.mrf.mxu0
      %v1850 = vadd.f32 0.0, %v1849
      %1851 = vmatmul.f32.gmra.mxu0 %v1775
      %v1852 = vpop.f32.mrf.mxu0
      %v1853 = vadd.f32 0.0, %v1852
      %1854 = vmatmul.f32.gmra.mxu0 %v1776
      %v1855 = vpop.f32.mrf.mxu0
      %v1856 = vadd.f32 0.0, %v1855
      %1857 = vmatmul.f32.gmra.mxu0 %v1777
      %v1858 = vpop.f32.mrf.mxu0
      %v1859 = vadd.f32 0.0, %v1858
      %1860 = vmatmul.f32.gmra.mxu0 %v1778
      %v1861 = vpop.f32.mrf.mxu0
      %v1862 = vadd.f32 0.0, %v1861
      %1863 = vmatmul.f32.gmra.mxu0 %v1779
      %v1864 = vpop.f32.mrf.mxu0
      %v1865 = vadd.f32 0.0, %v1864
      %1866 = vmatmul.f32.gmra.mxu0 %v1780
      %v1867 = vpop.f32.mrf.mxu0
      %v1868 = vadd.f32 0.0, %v1867
      %1869 = vmatmul.f32.gmra.mxu0 %v1781
      %v1870 = vpop.f32.mrf.mxu0
      %v1871 = vadd.f32 0.0, %v1870
      %1872 = vmatmul.f32.gmra.mxu0 %v1782
      %v1873 = vpop.f32.mrf.mxu0
      %v1874 = vadd.f32 0.0, %v1873
      %1875 = vmatmul.f32.gmra.mxu0 %v1783
      %v1876 = vpop.f32.mrf.mxu0
      %v1877 = vadd.f32 0.0, %v1876
      %1878 = vmatmul.f32.gmra.mxu0 %v1784
      %v1879 = vpop.f32.mrf.mxu0
      %v1880 = vadd.f32 0.0, %v1879
      %1881 = vmatmul.f32.gmra.mxu0 %v1785
      %v1882 = vpop.f32.mrf.mxu0
      %v1883 = vadd.f32 0.0, %v1882
      %1884 = vmatmul.f32.gmra.mxu0 %v1786
      %v1885 = vpop.f32.mrf.mxu0
      %v1886 = vadd.f32 0.0, %v1885
      %1887 = vmatmul.f32.gmra.mxu0 %v1787
      %v1888 = vpop.f32.mrf.mxu0
      %v1889 = vadd.f32 0.0, %v1888
      %1890 = vmatmul.f32.gmra.mxu0 %v1788
      %v1891 = vpop.f32.mrf.mxu0
      %v1892 = vadd.f32 0.0, %v1891
      %1893 = vmatmul.f32.gmra.mxu0 %v1789
      %v1894 = vpop.f32.mrf.mxu0
      %v1895 = vadd.f32 0.0, %v1894
      %1896 = vmatmul.f32.gmra.mxu0 %v1790
      %v1897 = vpop.f32.mrf.mxu0
      %v1898 = vadd.f32 0.0, %v1897
      %1899 = vmatmul.f32.gmra.mxu0 %v1791
      %v1900 = vpop.f32.mrf.mxu0
      %v1901 = vadd.f32 0.0, %v1900
      %1902 = vmatmul.f32.gmra.mxu0 %v1792
      %v1903 = vpop.f32.mrf.mxu0
      %v1904 = vadd.f32 0.0, %v1903
      %1905 = vmatmul.f32.gmra.mxu0 %v1793
      %v1906 = vpop.f32.mrf.mxu0
      %v1907 = vadd.f32 0.0, %v1906
      %1908 = vmatmul.f32.gmra.mxu0 %v1794
      %v1909 = vpop.f32.mrf.mxu0
      %v1910 = vadd.f32 0.0, %v1909
      %1911 = vmatmul.f32.gmra.mxu0 %v1795
      %v1912 = vpop.f32.mrf.mxu0
      %v1913 = vadd.f32 0.0, %v1912
      %1914 = vmatmul.f32.gmra.mxu0 %v1796
      %v1915 = vpop.f32.mrf.mxu0
      %v1916 = vadd.f32 0.0, %v1915
      %1917 = vmatmul.f32.gmra.mxu0 %v1797
      %v1918 = vpop.f32.mrf.mxu0
      %v1919 = vadd.f32 0.0, %v1918
      %1920 = vmatmul.f32.gmra.mxu0 %v1798
      %v1921 = vpop.f32.mrf.mxu0
      %v1922 = vadd.f32 0.0, %v1921
      %1923 = vmatmul.f32.gmra.mxu0 %v1799
      %v1924 = vpop.f32.mrf.mxu0
      %v1925 = vadd.f32 0.0, %v1924
      %1926 = vmatmul.f32.gmra.mxu0 %v1800
      %v1927 = vpop.f32.mrf.mxu0
      %v1928 = vadd.f32 0.0, %v1927
      %1929 = vdwg.mxu0
      %v1930 = vadd.f32 %v1737, %v1835
      %v1931 = vadd.f32 %v1738, %v1838
      %v1932 = vadd.f32 %v1739, %v1841
      %v1933 = vadd.f32 %v1740, %v1844
      %v1934 = vadd.f32 %v1741, %v1847
      %v1935 = vadd.f32 %v1742, %v1850
      %v1936 = vadd.f32 %v1743, %v1853
      %v1937 = vadd.f32 %v1744, %v1856
      %v1938 = vadd.f32 %v1745, %v1859
      %v1939 = vadd.f32 %v1746, %v1862
      %v1940 = vadd.f32 %v1747, %v1865
      %v1941 = vadd.f32 %v1748, %v1868
      %v1942 = vadd.f32 %v1749, %v1871
      %v1943 = vadd.f32 %v1750, %v1874
      %v1944 = vadd.f32 %v1751, %v1877
      %v1945 = vadd.f32 %v1752, %v1880
      %v1946 = vadd.f32 %v1753, %v1883
      %v1947 = vadd.f32 %v1754, %v1886
      %v1948 = vadd.f32 %v1755, %v1889
      %v1949 = vadd.f32 %v1756, %v1892
      %v1950 = vadd.f32 %v1757, %v1895
      %v1951 = vadd.f32 %v1758, %v1898
      %v1952 = vadd.f32 %v1759, %v1901
      %v1953 = vadd.f32 %v1760, %v1904
      %v1954 = vadd.f32 %v1761, %v1907
      %v1955 = vadd.f32 %v1762, %v1910
      %v1956 = vadd.f32 %v1763, %v1913
      %v1957 = vadd.f32 %v1764, %v1916
      %v1958 = vadd.f32 %v1765, %v1919
      %v1959 = vadd.f32 %v1766, %v1922
      %v1960 = vadd.f32 %v1767, %v1925
      %v1961 = vadd.f32 %v1768, %v1928
      %1962 = vmatpush.msra.mxu0 %v1945
      %1963 = vmatpush.msra.mxu0 %v1944
      %1964 = vmatpush.msra.mxu0 %v1943
      %1965 = vmatpush.msra.mxu0 %v1942
      %1966 = vmatpush.msra.mxu0 %v1941
      %1967 = vmatpush.msra.mxu0 %v1940
      %1968 = vmatpush.msra.mxu0 %v1939
      %1969 = vmatpush.msra.mxu0 %v1938
      %1970 = vmatpush.msra.mxu0 %v1937
      %1971 = vmatpush.msra.mxu0 %v1936
      %1972 = vmatpush.msra.mxu0 %v1935
      %1973 = vmatpush.msra.mxu0 %v1934
      %1974 = vmatpush.msra.mxu0 %v1933
      %1975 = vmatpush.msra.mxu0 %v1932
      %1976 = vmatpush.msra.mxu0 %v1931
      %1977 = vmatpush.msra.mxu0 %v1930
      %1978 = vmatmul.f32.gmra.mxu0 1.0
      %v1979 = vpop.f32.mrf.mxu0
      %v1980 = vadd.f32 0.0, %v1979
      %1981 = vdwg.mxu0
      %1982 = vmatpush.msra.mxu0 %v1961
      %1983 = vmatpush.msra.mxu0 %v1960
      %1984 = vmatpush.msra.mxu0 %v1959
      %1985 = vmatpush.msra.mxu0 %v1958
      %1986 = vmatpush.msra.mxu0 %v1957
      %1987 = vmatpush.msra.mxu0 %v1956
      %1988 = vmatpush.msra.mxu0 %v1955
      %1989 = vmatpush.msra.mxu0 %v1954
      %1990 = vmatpush.msra.mxu0 %v1953
      %1991 = vmatpush.msra.mxu0 %v1952
      %1992 = vmatpush.msra.mxu0 %v1951
      %1993 = vmatpush.msra.mxu0 %v1950
      %1994 = vmatpush.msra.mxu0 %v1949
      %1995 = vmatpush.msra.mxu0 %v1948
      %1996 = vmatpush.msra.mxu0 %v1947
      %1997 = vmatpush.msra.mxu0 %v1946
      %1998 = vmatmul.f32.gmra.mxu0 1.0
      %v1999 = vpop.f32.mrf.mxu0
      %v2000 = vadd.f32 %v1980, %v1999
      %2001 = vdwg.mxu0
      %2002 = vst [vmem:[%s181] sm:$0x1] %v2000
      %v2003 = vmul.f32 %v1930, %v1930
      %v2004 = vmul.f32 %v1931, %v1931
      %v2005 = vmul.f32 %v1932, %v1932
      %v2006 = vmul.f32 %v1933, %v1933
      %v2007 = vmul.f32 %v1934, %v1934
      %v2008 = vmul.f32 %v1935, %v1935
      %v2009 = vmul.f32 %v1936, %v1936
      %v2010 = vmul.f32 %v1937, %v1937
      %v2011 = vmul.f32 %v1938, %v1938
      %v2012 = vmul.f32 %v1939, %v1939
      %v2013 = vmul.f32 %v1940, %v1940
      %v2014 = vmul.f32 %v1941, %v1941
      %v2015 = vmul.f32 %v1942, %v1942
      %v2016 = vmul.f32 %v1943, %v1943
      %v2017 = vmul.f32 %v1944, %v1944
      %v2018 = vmul.f32 %v1945, %v1945
      %v2019 = vmul.f32 %v1946, %v1946
      %v2020 = vmul.f32 %v1947, %v1947
      %v2021 = vmul.f32 %v1948, %v1948
      %v2022 = vmul.f32 %v1949, %v1949
      %v2023 = vmul.f32 %v1950, %v1950
      %v2024 = vmul.f32 %v1951, %v1951
      %v2025 = vmul.f32 %v1952, %v1952
      %v2026 = vmul.f32 %v1953, %v1953
      %v2027 = vmul.f32 %v1954, %v1954
      %v2028 = vmul.f32 %v1955, %v1955
      %v2029 = vmul.f32 %v1956, %v1956
      %v2030 = vmul.f32 %v1957, %v1957
      %v2031 = vmul.f32 %v1958, %v1958
      %v2032 = vmul.f32 %v1959, %v1959
      %v2033 = vmul.f32 %v1960, %v1960
      %v2034 = vmul.f32 %v1961, %v1961
      %2035 = vmatpush.msra.mxu0 %v2018
      %2036 = vmatpush.msra.mxu0 %v2017
      %2037 = vmatpush.msra.mxu0 %v2016
      %2038 = vmatpush.msra.mxu0 %v2015
      %2039 = vmatpush.msra.mxu0 %v2014
      %2040 = vmatpush.msra.mxu0 %v2013
      %2041 = vmatpush.msra.mxu0 %v2012
      %2042 = vmatpush.msra.mxu0 %v2011
      %2043 = vmatpush.msra.mxu0 %v2010
      %2044 = vmatpush.msra.mxu0 %v2009
      %2045 = vmatpush.msra.mxu0 %v2008
      %2046 = vmatpush.msra.mxu0 %v2007
      %2047 = vmatpush.msra.mxu0 %v2006
      %2048 = vmatpush.msra.mxu0 %v2005
      %2049 = vmatpush.msra.mxu0 %v2004
      %2050 = vmatpush.msra.mxu0 %v2003
      %2051 = vmatmul.f32.gmra.mxu0 1.0
      %v2052 = vpop.f32.mrf.mxu0
      %v2053 = vadd.f32 0.0, %v2052
      %2054 = vdwg.mxu0
      %2055 = vmatpush.msra.mxu0 %v2034
      %2056 = vmatpush.msra.mxu0 %v2033
      %2057 = vmatpush.msra.mxu0 %v2032
      %2058 = vmatpush.msra.mxu0 %v2031
      %2059 = vmatpush.msra.mxu0 %v2030
      %2060 = vmatpush.msra.mxu0 %v2029
      %2061 = vmatpush.msra.mxu0 %v2028
      %2062 = vmatpush.msra.mxu0 %v2027
      %2063 = vmatpush.msra.mxu0 %v2026
      %2064 = vmatpush.msra.mxu0 %v2025
      %2065 = vmatpush.msra.mxu0 %v2024
      %2066 = vmatpush.msra.mxu0 %v2023
      %2067 = vmatpush.msra.mxu0 %v2022
      %2068 = vmatpush.msra.mxu0 %v2021
      %2069 = vmatpush.msra.mxu0 %v2020
      %2070 = vmatpush.msra.mxu0 %v2019
      %2071 = vmatmul.f32.gmra.mxu0 1.0
      %v2072 = vpop.f32.mrf.mxu0
      %v2073 = vadd.f32 %v2053, %v2072
      %2074 = vdwg.mxu0
      %2075 = vst [vmem:[%s181 + $0x1] sm:$0x1] %v2073
      %2076 = vst [vmem:[%s177] sm:$0xff] %v1930
      %2077 = vst [vmem:[%s177 + $0x8] sm:$0xff] %v1931
      %2078 = vst [vmem:[%s177 + $0x10] sm:$0xff] %v1932
      %2079 = vst [vmem:[%s177 + $0x18] sm:$0xff] %v1933
      %2080 = vst [vmem:[%s177 + $0x20] sm:$0xff] %v1934
      %2081 = vst [vmem:[%s177 + $0x28] sm:$0xff] %v1935
      %2082 = vst [vmem:[%s177 + $0x30] sm:$0xff] %v1936
      %2083 = vst [vmem:[%s177 + $0x38] sm:$0xff] %v1937
      %2084 = vst [vmem:[%s177 + $0x40] sm:$0xff] %v1938
      %2085 = vst [vmem:[%s177 + $0x48] sm:$0xff] %v1939
      %2086 = vst [vmem:[%s177 + $0x50] sm:$0xff] %v1940
      %2087 = vst [vmem:[%s177 + $0x58] sm:$0xff] %v1941
      %2088 = vst [vmem:[%s177 + $0x60] sm:$0xff] %v1942
      %2089 = vst [vmem:[%s177 + $0x68] sm:$0xff] %v1943
      %2090 = vst [vmem:[%s177 + $0x70] sm:$0xff] %v1944
      %2091 = vst [vmem:[%s177 + $0x78] sm:$0xff] %v1945
      %2092 = vst [vmem:[%s177 + $0x80] sm:$0xff] %v1946
      %2093 = vst [vmem:[%s177 + $0x88] sm:$0xff] %v1947
      %2094 = vst [vmem:[%s177 + $0x90] sm:$0xff] %v1948
      %2095 = vst [vmem:[%s177 + $0x98] sm:$0xff] %v1949
      %2096 = vst [vmem:[%s177 + $0xa0] sm:$0xff] %v1950
      %2097 = vst [vmem:[%s177 + $0xa8] sm:$0xff] %v1951
      %2098 = vst [vmem:[%s177 + $0xb0] sm:$0xff] %v1952
      %2099 = vst [vmem:[%s177 + $0xb8] sm:$0xff] %v1953
      %2100 = vst [vmem:[%s177 + $0xc0] sm:$0xff] %v1954
      %2101 = vst [vmem:[%s177 + $0xc8] sm:$0xff] %v1955
      %2102 = vst [vmem:[%s177 + $0xd0] sm:$0xff] %v1956
      %2103 = vst [vmem:[%s177 + $0xd8] sm:$0xff] %v1957
      %2104 = vst [vmem:[%s177 + $0xe0] sm:$0xff] %v1958
      %2105 = vst [vmem:[%s177 + $0xe8] sm:$0xff] %v1959
      %2106 = vst [vmem:[%s177 + $0xf0] sm:$0xff] %v1960
      %2107 = vst [vmem:[%s177 + $0xf8] sm:$0xff] %v1961
      %p2108 = scmp.lt.s32.totalorder %s15, 1
      %s2109 = scalar_select %p2108, %s15, 1
      %s2110 = smul.addr %s2109, 32
      %s2111 = smul.addr %s2110, 8
      %s2112 = scalar_lea.vmem %s2, %s2111
      %p2113 = scmp.lt.s32.totalorder %s15, 1
      %s2114 = scalar_select %p2113, %s15, 1
      %s2115 = smul.addr %s2114, 2
      %s2116 = scalar_lea.vmem %s3, %s2115
      // Predicated region
      $region29: #{residual_forward.3} parent=27 // pred_check
        %p2117 = pneg %p80
      $region30: #{residual_forward.3} parent=27 // pred_check_branch
        %2119 = sbr.rel (%p2117) target = $region32
      $region31: #{residual_forward.3} parent=27 // pred_region
        _
      $region32: #{residual_forward.3} parent=27 // pred_fallthru
        _
      // Predicated region
      $region33: #{residual_forward.3} parent=27 // pred_check
        %p2120 = pneg %p106
      $region34: #{residual_forward.3} parent=27 // pred_check_branch
        %2122 = sbr.rel (%p2120) target = $region36
      $region35: #{residual_forward.3} parent=27 // pred_region
        _
      $region36: #{residual_forward.3} parent=27 // pred_fallthru
        _
    $region28: #{residual_forward.3} parent=5 // pred_fallthru
      _
    %p2123 = scmp.le.s32.totalorder 2, %s10
    // Predicated region
    $region37: #{residual_forward.3} parent=5 // pred_check
      %p2124 = pneg %p2123
    $region38: #{residual_forward.3} parent=5 // pred_check_branch
      %2126 = sbr.rel (%p2124) target = $region40
    $region39: #{residual_forward.3} parent=5 // pred_region
      %s2127 = ssub.s32 %s10, 2
      // Predicated region
      $region41: #{residual_forward.3} parent=39 // pred_check
        %p2128 = pneg %p86
      $region42: #{residual_forward.3} parent=39 // pred_check_branch
        %2130 = sbr.rel (%p2128) target = $region44
      $region43: #{residual_forward.3} parent=39 // pred_region
        %p2131 = scmp.lt.s32.totalorder %s16, 1
        %s2132 = scalar_select %p2131, %s16, 1
        %s2133 = smul.addr %s2132, 32
        %s2134 = smul.addr %s2133, 8
        %s2135 = scalar_lea.vmem %s2, %s2134
      $region44: #{residual_forward.3} parent=39 // pred_fallthru
        _
      // Predicated region
      $region45: #{residual_forward.3} parent=39 // pred_check
        %p2136 = pneg %p112
      $region46: #{residual_forward.3} parent=39 // pred_check_branch
        %2138 = sbr.rel (%p2136) target = $region48
      $region47: #{residual_forward.3} parent=39 // pred_region
        %p2139 = scmp.lt.s32.totalorder %s16, 1
        %s2140 = scalar_select %p2139, %s16, 1
        %s2141 = smul.addr %s2140, 2
        %s2142 = scalar_lea.vmem %s3, %s2141
      $region48: #{residual_forward.3} parent=39 // pred_fallthru
        _
    $region40: #{residual_forward.3} parent=5 // pred_fallthru
      _
  $region6: #{residual_forward.3} parent=0 // loop_footer
    %s14 = sadd.s32 1, %s10
  $region7: #{residual_forward.3} parent=0 // loop_footer_branch
    %9 = sbr.rel target = $region3
  $region8: #{residual_forward.3} parent=0 // loop_exit
    _

// kernel: residual_forward.4
$region0: #{residual_forward.4}
  #allocation0 [shape = 'u32[]', space=smem, size = 0x4, offset = 0x4, fixed_abs, tag = 'smem constant byte address 0x4 - core index']
  #allocation1 [shape = 'u32[72,128]{1,0:T(1,128)}', space=vmem, size = 0x9000, scoped, tag = 'internal scratch']
  #allocation2 [shape = 'f32[18,32,128]{2,1,0:T(8,128)}', space=vmem, size = 0x48000, scoped, tag = 'scratch operand']
  %s0 = inlined_call_operand.vmem [shape: f32[2,16,16,128], index: 0, kind: input, shape index: {}]
  %s1 = inlined_call_operand.hbm [shape: f32[1152,128], index: 1, kind: input, shape index: {}]
  %s2 = inlined_call_operand.vmem [shape: f32[1,128], index: 2, kind: input, shape index: {}]
  %s3 = inlined_call_operand.vmem [shape: f32[1,128], index: 3, kind: input, shape index: {}]
  %s4 = inlined_call_operand.vmem [shape: f32[2,16,16,128], index: 4, kind: output, shape index: {0}]
  %s5 = inlined_call_operand.vmem [shape: f32[2,2,128], index: 5, kind: output, shape index: {1}]
  %6 = xla_tuple %s4, %s5
  %s7 = sld [smem:[#allocation0]]
  $region61: #{residual_forward.4} parent=0
    _
  %s9 = ssub.s32 1, %s7
  %s10 = scalar_select 0, %s9, %s7
  $region1: #{residual_forward.4} parent=0
    #allocation3 [shape = 'u8[589824]{0}', space=vmem, size = 0x90000, scoped, tag = 'input window, operand 1, single buffered']
    #allocation4 [shape = 's32[2]{0}', space=sflag, size = 0x8, scoped, tag = 'scoped memory for residual_forward.4']
    %11 = vsyncpa [#allocation4], 0
    loop: start=0, step=1, limit=4
    $region2: #{residual_forward.4} parent=1 // loop_pre_header
      _
    $region3: #{residual_forward.4} parent=1 // loop_header
      %s13 = sphi 0, %s17
      %p14 = scmp.ge.s32.totalorder %s13, 4
      %s23 = sphi 0, %s25
      %s26 = sphi 0, %s23
      %s27 = sphi 0, %s26
      %s43 = sphi 0, %s27
      %s47 = sphi 0, %s47
      %s49 = sphi 0, %s47
      %s50 = sphi 0, %s49
      %s64 = sphi 0, %s50
      %s68 = sphi 0, %s68
      %s70 = sphi 0, %s68
      %s71 = sphi 0, %s70
      %s85 = sphi 0, %s71
      %s89 = sphi 0, %s89
      %s91 = sphi 0, %s89
      %s92 = sphi 0, %s91
      %s106 = sphi 0, %s92
      %s112 = sphi 0, %s114
      %s115 = sphi 0, %s112
      %s116 = sphi 0, %s115
      %s132 = sphi 0, %s116
      %s138 = sphi 0, %s140
      %s141 = sphi 0, %s138
      %s142 = sphi 0, %s141
      %s158 = sphi 0, %s142
    $region4: #{residual_forward.4} parent=1 // loop_header_branch
      %16 = sbr.rel (%p14) target = $region8
    $region5: #{residual_forward.4} parent=1 // loop_body
      %s18 = ssub.s32 %s13, 1
      %s19 = ssub.s32 %s13, 2
      %s20 = sadd.s32 %s13, 1
      %s21 = ssub.s32 %s13, %s20
      %p22 = scmp.eq.s32.totalorder %s21, 0
      %s24 = sadd.s32 %s23, 1
      %s25 = scalar_select %p22, %s23, %s24
      %p28 = pneg %p22
      %p29 = scmp.eq.s32.totalorder %s13, 1
      %p30 = por %p28, %p29
      %p31 = scmp.ne.s32.totalorder %s23, %s26
      %p32 = scmp.eq.s32.totalorder %s13, 0
      %p33 = por %p31, %p32
      %p34 = scmp.ne.s32.totalorder %s23, %s26
      %p35 = scmp.eq.s32.totalorder %s18, 1
      %p36 = por %p34, %p35
      %p37 = scmp.ne.s32.totalorder %s26, %s27
      %p38 = scmp.eq.s32.totalorder %s18, 0
      %p39 = por %p37, %p38
      %p40 = scmp.ne.s32.totalorder %s26, %s27
      %p41 = scmp.eq.s32.totalorder %s19, 1
      %p42 = por %p40, %p41
      %p44 = scmp.ne.s32.totalorder %s27, %s43
      %p45 = scmp.eq.s32.totalorder %s19, 0
      %p46 = por %p44, %p45
      %s48 = sadd.s32 %s47, 1
      %p51 = scmp.eq.s32.totalorder %s13, 1
      %p52 = scmp.ne.s32.totalorder %s47, %s49
      %p53 = scmp.eq.s32.totalorder %s13, 0
      %p54 = por %p52, %p53
      %p55 = scmp.ne.s32.totalorder %s47, %s49
      %p56 = scmp.eq.s32.totalorder %s18, 1
      %p57 = por %p55, %p56
      %p58 = scmp.ne.s32.totalorder %s49, %s50
      %p59 = scmp.eq.s32.totalorder %s18, 0
      %p60 = por %p58, %p59
      %p61 = scmp.ne.s32.totalorder %s49, %s50
      %p62 = scmp.eq.s32.totalorder %s19, 1
      %p63 = por %p61, %p62
      %p65 = scmp.ne.s32.totalorder %s50, %s64
      %p66 = scmp.eq.s32.totalorder %s19, 0
      %p67 = por %p65, %p66
      %s69 = sadd.s32 %s68, 1
      %p72 = scmp.eq.s32.totalorder %s13, 1
      %p73 = scmp.ne.s32.totalorder %s68, %s70
      %p74 = scmp.eq.s32.totalorder %s13, 0
      %p75 = por %p73, %p74
      %p76 = scmp.ne.s32.totalorder %s68, %s70
      %p77 = scmp.eq.s32.totalorder %s18, 1
      %p78 = por %p76, %p77
      %p79 = scmp.ne.s32.totalorder %s70, %s71
      %p80 = scmp.eq.s32.totalorder %s18, 0
      %p81 = por %p79, %p80
      %p82 = scmp.ne.s32.totalorder %s70, %s71
      %p83 = scmp.eq.s32.totalorder %s19, 1
      %p84 = por %p82, %p83
      %p86 = scmp.ne.s32.totalorder %s71, %s85
      %p87 = scmp.eq.s32.totalorder %s19, 0
      %p88 = por %p86, %p87
      %s90 = sadd.s32 %s89, 1
      %p93 = scmp.eq.s32.totalorder %s13, 1
      %p94 = scmp.ne.s32.totalorder %s89, %s91
      %p95 = scmp.eq.s32.totalorder %s13, 0
      %p96 = por %p94, %p95
      %p97 = scmp.ne.s32.totalorder %s89, %s91
      %p98 = scmp.eq.s32.totalorder %s18, 1
      %p99 = por %p97, %p98
      %p100 = scmp.ne.s32.totalorder %s91, %s92
      %p101 = scmp.eq.s32.totalorder %s18, 0
      %p102 = por %p100, %p101
      %p103 = scmp.ne.s32.totalorder %s91, %s92
      %p104 = scmp.eq.s32.totalorder %s19, 1
      %p105 = por %p103, %p104
      %p107 = scmp.ne.s32.totalorder %s92, %s106
      %p108 = scmp.eq.s32.totalorder %s19, 0
      %p109 = por %p107, %p108
      %s110 = ssub.s32 %s13, %s20
      %p111 = scmp.eq.s32.totalorder %s110, 0
      %s113 = sadd.s32 %s112, 1
      %s114 = scalar_select %p111, %s112, %s113
      %p117 = pneg %p111
      %p118 = scmp.eq.s32.totalorder %s13, 1
      %p119 = por %p117, %p118
      %p120 = scmp.ne.s32.totalorder %s112, %s115
      %p121 = scmp.eq.s32.totalorder %s13, 0
      %p122 = por %p120, %p121
      %p123 = scmp.ne.s32.totalorder %s112, %s115
      %p124 = scmp.eq.s32.totalorder %s18, 1
      %p125 = por %p123, %p124
      %p126 = scmp.ne.s32.totalorder %s115, %s116
      %p127 = scmp.eq.s32.totalorder %s18, 0
      %p128 = por %p126, %p127
      %p129 = scmp.ne.s32.totalorder %s115, %s116
      %p130 = scmp.eq.s32.totalorder %s19, 1
      %p131 = por %p129, %p130
      %p133 = scmp.ne.s32.totalorder %s116, %s132
      %p134 = scmp.eq.s32.totalorder %s19, 0
      %p135 = por %p133, %p134
      %s136 = ssub.s32 %s13, %s20
      %p137 = scmp.eq.s32.totalorder %s136, 0
      %s139 = sadd.s32 %s138, 1
      %s140 = scalar_select %p137, %s138, %s139
      %p143 = pneg %p137
      %p144 = scmp.eq.s32.totalorder %s13, 1
      %p145 = por %p143, %p144
      %p146 = scmp.ne.s32.totalorder %s138, %s141
      %p147 = scmp.eq.s32.totalorder %s13, 0
      %p148 = por %p146, %p147
      %p149 = scmp.ne.s32.totalorder %s138, %s141
      %p150 = scmp.eq.s32.totalorder %s18, 1
      %p151 = por %p149, %p150
      %p152 = scmp.ne.s32.totalorder %s141, %s142
      %p153 = scmp.eq.s32.totalorder %s18, 0
      %p154 = por %p152, %p153
      %p155 = scmp.ne.s32.totalorder %s141, %s142
      %p156 = scmp.eq.s32.totalorder %s19, 1
      %p157 = por %p155, %p156
      %p159 = scmp.ne.s32.totalorder %s142, %s158
      %p160 = scmp.eq.s32.totalorder %s19, 0
      %p161 = por %p159, %p160
      %p162 = scmp.le.s32.totalorder 1, %s13
      %p163 = scmp.lt.s32.totalorder %s13, 3
      %p164 = pnand %p162, %p163
      %p165 = pneg %p164
      // Predicated region
      $region9: #{residual_forward.4} parent=5 // pred_check
        _
      $region10: #{residual_forward.4} parent=5 // pred_check_branch
        %167 = sbr.rel (%p164) target = $region12
      $region11: #{residual_forward.4} parent=5 // pred_region
        %s168 = ssub.s32 %s13, 1
        // Predicated region
        $region13: #{residual_forward.4} parent=11 // pred_check
          %p169 = pneg %p60
        $region14: #{residual_forward.4} parent=11 // pred_check_branch
          %171 = sbr.rel (%p169) target = $region16
        $region15: #{residual_forward.4} parent=11 // pred_region
          %173 = vsyncadd [#allocation4], 0
          %s174 = sshll.u32 %s1, 4
          %s175 = int_to_ptr.hbm [resolvable:$true] %s174
          %s176 = sshll.u32 [#allocation3], 4
          %s177 = int_to_ptr.vmem [resolvable:$true] %s176
          %182 = dma.hbm_to_vmem [thread:$0]  %s175, 18432, %s177, [#allocation4], 128, 128, 8
        $region16: #{residual_forward.4} parent=11 // pred_fallthru
          _
        // Predicated region
        $region17: #{residual_forward.4} parent=11 // pred_check
          %p183 = pneg %p81
        $region18: #{residual_forward.4} parent=11 // pred_check_branch
          %185 = sbr.rel (%p183) target = $region20
        $region19: #{residual_forward.4} parent=11 // pred_region
          _
        $region20: #{residual_forward.4} parent=11 // pred_fallthru
          _
        // Predicated region
        $region21: #{residual_forward.4} parent=11 // pred_check
          %p186 = pneg %p102
        $region22: #{residual_forward.4} parent=11 // pred_check_branch
          %188 = sbr.rel (%p186) target = $region24
        $region23: #{residual_forward.4} parent=11 // pred_region
          _
        $region24: #{residual_forward.4} parent=11 // pred_fallthru
          _
      $region12: #{residual_forward.4} parent=5 // pred_fallthru
        _
      %p189 = scmp.lt.s32.totalorder %s13, 2
      // Predicated region
      $region25: #{residual_forward.4} parent=5 // pred_check
        %p190 = pneg %p189
      $region26: #{residual_forward.4} parent=5 // pred_check_branch
        %192 = sbr.rel (%p190) target = $region28
      $region27: #{residual_forward.4} parent=5 // pred_region
        // Predicated region
        $region29: #{residual_forward.4} parent=27 // pred_check
          %p193 = pneg %p33
        $region30: #{residual_forward.4} parent=27 // pred_check_branch
          %195 = sbr.rel (%p193) target = $region32
        $region31: #{residual_forward.4} parent=27 // pred_region
          %p196 = scmp.lt.s32.totalorder %s13, 1
          %s197 = scalar_select %p196, %s13, 1
          %s198 = smul.addr %s197, 32
          %s199 = smul.addr %s198, 8
          %s200 = scalar_lea.vmem %s0, %s199
        $region32: #{residual_forward.4} parent=27 // pred_fallthru
          _
      $region28: #{residual_forward.4} parent=5 // pred_fallthru
        _
      %p201 = scmp.le.s32.totalorder 1, %s13
      %p202 = scmp.lt.s32.totalorder %s13, 3
      %p203 = pnand %p201, %p202
      %p204 = pneg %p203
      // Predicated region
      $region33: #{residual_forward.4} parent=5 // pred_check
        _
      $region34: #{residual_forward.4} parent=5 // pred_check_branch
        %206 = sbr.rel (%p203) target = $region36
      $region35: #{residual_forward.4} parent=5 // pred_region
        %s207 = ssub.s32 %s13, 1
        // Predicated region
        $region37: #{residual_forward.4} parent=35 // pred_check
          %p208 = pneg %p60
        $region38: #{residual_forward.4} parent=35 // pred_check_branch
          %210 = sbr.rel (%p208) target = $region40
        $region39: #{residual_forward.4} parent=35 // pred_region
          %212 = dma.done [#allocation4], 18432
        $region40: #{residual_forward.4} parent=35 // pred_fallthru
          _
        %p213 = scmp.lt.s32.totalorder %s18, 1
        %s214 = scalar_select %p213, %s18, 1
        %s215 = smul.addr %s214, 32
        %s216 = smul.addr %s215, 8
        %s217 = scalar_lea.vmem %s0, %s216
        %p218 = pneg %p39
        %p219 = pneg %p36
        %p220 = pneg %p60
        %p221 = pneg %p57
        %p222 = pneg %p81
        %p223 = pneg %p78
        %p224 = pneg %p102
        %p225 = pneg %p99
        %p226 = pneg %p128
        %p227 = pneg %p125
        %p228 = scmp.lt.s32.totalorder %s18, 1
        %s229 = scalar_select %p228, %s18, 1
        %s230 = smul.addr %s229, 32
        %s231 = smul.addr %s230, 8
        %s232 = scalar_lea.vmem %s4, %s231
        %p233 = pneg %p154
        %p234 = pneg %p151
        %p235 = scmp.lt.s32.totalorder %s18, 1
        %s236 = scalar_select %p235, %s18, 1
        %s237 = smul.addr %s236, 2
        %s238 = scalar_lea.vmem %s5, %s237
        %p239 = scmp.lt.s32.totalorder %s18, 1
        %s240 = scalar_select %p239, %s18, 1
        %s241 = smul.addr %s240, 32
        %s242 = smul.addr %s241, 8
        %s243 = scalar_lea.vmem %s0, %s242
        %p244 = scmp.lt.s32.totalorder %s18, 1
        %s245 = scalar_select %p244, %s18, 1
        %s246 = smul.addr %s245, 32
        %s247 = smul.addr %s246, 8
        %s248 = scalar_lea.vmem %s4, %s247
        %p249 = scmp.lt.s32.totalorder %s18, 1
        %s250 = scalar_select %p249, %s18, 1
        %s251 = smul.addr %s250, 2
        %s252 = scalar_lea.vmem %s5, %s251
        %v253 = vld [vmem:[%s2] sm:$0x1]
        %v254 = vld [vmem:[%s3] sm:$0x1]
        %v255 = vld [vmem:[%s243] sm:$0xff]
        %v256 = vld [vmem:[%s243 + $0x8] sm:$0xff]
        %v257 = vld [vmem:[%s243 + $0x10] sm:$0xff]
        %v258 = vld [vmem:[%s243 + $0x18] sm:$0xff]
        %v259 = vld [vmem:[%s243 + $0x20] sm:$0xff]
        %v260 = vld [vmem:[%s243 + $0x28] sm:$0xff]
        %v261 = vld [vmem:[%s243 + $0x30] sm:$0xff]
        %v262 = vld [vmem:[%s243 + $0x38] sm:$0xff]
        %v263 = vld [vmem:[%s243 + $0x40] sm:$0xff]
        %v264 = vld [vmem:[%s243 + $0x48] sm:$0xff]
        %v265 = vld [vmem:[%s243 + $0x50] sm:$0xff]
        %v266 = vld [vmem:[%s243 + $0x58] sm:$0xff]
        %v267 = vld [vmem:[%s243 + $0x60] sm:$0xff]
        %v268 = vld [vmem:[%s243 + $0x68] sm:$0xff]
        %v269 = vld [vmem:[%s243 + $0x70] sm:$0xff]
        %v270 = vld [vmem:[%s243 + $0x78] sm:$0xff]
        %v271 = vld [vmem:[%s243 + $0x80] sm:$0xff]
        %v272 = vld [vmem:[%s243 + $0x88] sm:$0xff]
        %v273 = vld [vmem:[%s243 + $0x90] sm:$0xff]
        %v274 = vld [vmem:[%s243 + $0x98] sm:$0xff]
        %v275 = vld [vmem:[%s243 + $0xa0] sm:$0xff]
        %v276 = vld [vmem:[%s243 + $0xa8] sm:$0xff]
        %v277 = vld [vmem:[%s243 + $0xb0] sm:$0xff]
        %v278 = vld [vmem:[%s243 + $0xb8] sm:$0xff]
        %v279 = vld [vmem:[%s243 + $0xc0] sm:$0xff]
        %v280 = vld [vmem:[%s243 + $0xc8] sm:$0xff]
        %v281 = vld [vmem:[%s243 + $0xd0] sm:$0xff]
        %v282 = vld [vmem:[%s243 + $0xd8] sm:$0xff]
        %v283 = vld [vmem:[%s243 + $0xe0] sm:$0xff]
        %v284 = vld [vmem:[%s243 + $0xe8] sm:$0xff]
        %v285 = vld [vmem:[%s243 + $0xf0] sm:$0xff]
        %v286 = vld [vmem:[%s243 + $0xf8] sm:$0xff]
        %v288 = vperm.slane %v253, 0
        %v290 = vmul.f32 %v255, %v288
        %v291 = vmul.f32 %v256, %v288
        %v292 = vmul.f32 %v257, %v288
        %v293 = vmul.f32 %v258, %v288
        %v294 = vmul.f32 %v259, %v288
        %v295 = vmul.f32 %v260, %v288
        %v296 = vmul.f32 %v261, %v288
        %v297 = vmul.f32 %v262, %v288
        %v298 = vmul.f32 %v263, %v288
        %v299 = vmul.f32 %v264, %v288
        %v300 = vmul.f32 %v265, %v288
        %v301 = vmul.f32 %v266, %v288
        %v302 = vmul.f32 %v267, %v288
        %v303 = vmul.f32 %v268, %v288
        %v304 = vmul.f32 %v269, %v288
        %v305 = vmul.f32 %v270, %v288
        %v306 = vmul.f32 %v271, %v288
        %v307 = vmul.f32 %v272, %v288
        %v308 = vmul.f32 %v273, %v288
        %v309 = vmul.f32 %v274, %v288
        %v310 = vmul.f32 %v275, %v288
        %v311 = vmul.f32 %v276, %v288
        %v312 = vmul.f32 %v277, %v288
        %v313 = vmul.f32 %v278, %v288
        %v314 = vmul.f32 %v279, %v288
        %v315 = vmul.f32 %v280, %v288
        %v316 = vmul.f32 %v281, %v288
        %v317 = vmul.f32 %v282, %v288
        %v318 = vmul.f32 %v283, %v288
        %v319 = vmul.f32 %v284, %v288
        %v320 = vmul.f32 %v285, %v288
        %v321 = vmul.f32 %v286, %v288
        %v323 = vperm.slane %v254, 0
        %v325 = vadd.f32 %v290, %v323
        %v326 = vadd.f32 %v291, %v323
        %v327 = vadd.f32 %v292, %v323
        %v328 = vadd.f32 %v293, %v323
        %v329 = vadd.f32 %v294, %v323
        %v330 = vadd.f32 %v295, %v323
        %v331 = vadd.f32 %v296, %v323
        %v332 = vadd.f32 %v297, %v323
        %v333 = vadd.f32 %v298, %v323
        %v334 = vadd.f32 %v299, %v323
        %v335 = vadd.f32 %v300, %v323
        %v336 = vadd.f32 %v301, %v323
        %v337 = vadd.f32 %v302, %v323
        %v338 = vadd.f32 %v303, %v323
        %v339 = vadd.f32 %v304, %v323
        %v340 = vadd.f32 %v305, %v323
        %v341 = vadd.f32 %v306, %v323
        %v342 = vadd.f32 %v307, %v323
        %v343 = vadd.f32 %v308, %v323
        %v344 = vadd.f32 %v309, %v323
        %v345 = vadd.f32 %v310, %v323
        %v346 = vadd.f32 %v311, %v323
        %v347 = vadd.f32 %v312, %v323
        %v348 = vadd.f32 %v313, %v323
        %v349 = vadd.f32 %v314, %v323
        %v350 = vadd.f32 %v315, %v323
        %v351 = vadd.f32 %v316, %v323
        %v352 = vadd.f32 %v317, %v323
        %v353 = vadd.f32 %v318, %v323
        %v354 = vadd.f32 %v319, %v323
        %v355 = vadd.f32 %v320, %v323
        %v356 = vadd.f32 %v321, %v323
        %v357 = vmax.f32 %v325, 0.0
        %v358 = vmax.f32 %v326, 0.0
        %v359 = vmax.f32 %v327, 0.0
        %v360 = vmax.f32 %v328, 0.0
        %v361 = vmax.f32 %v329, 0.0
        %v362 = vmax.f32 %v330, 0.0
        %v363 = vmax.f32 %v331, 0.0
        %v364 = vmax.f32 %v332, 0.0
        %v365 = vmax.f32 %v333, 0.0
        %v366 = vmax.f32 %v334, 0.0
        %v367 = vmax.f32 %v335, 0.0
        %v368 = vmax.f32 %v336, 0.0
        %v369 = vmax.f32 %v337, 0.0
        %v370 = vmax.f32 %v338, 0.0
        %v371 = vmax.f32 %v339, 0.0
        %v372 = vmax.f32 %v340, 0.0
        %v373 = vmax.f32 %v341, 0.0
        %v374 = vmax.f32 %v342, 0.0
        %v375 = vmax.f32 %v343, 0.0
        %v376 = vmax.f32 %v344, 0.0
        %v377 = vmax.f32 %v345, 0.0
        %v378 = vmax.f32 %v346, 0.0
        %v379 = vmax.f32 %v347, 0.0
        %v380 = vmax.f32 %v348, 0.0
        %v381 = vmax.f32 %v349, 0.0
        %v382 = vmax.f32 %v350, 0.0
        %v383 = vmax.f32 %v351, 0.0
        %v384 = vmax.f32 %v352, 0.0
        %v385 = vmax.f32 %v353, 0.0
        %v386 = vmax.f32 %v354, 0.0
        %v387 = vmax.f32 %v355, 0.0
        %v388 = vmax.f32 %v356, 0.0
        %389 = vst [vmem:[#allocation2] sm:$0xff] 0.0
        %390 = vst [vmem:[#allocation2 + $0x8] sm:$0xff] 0.0
        %391 = vst [vmem:[#allocation2 + $0x10] sm:$0xff] 0.0
        %392 = vst [vmem:[#allocation2 + $0x18] sm:$0xff] 0.0
        %s393 = scalar_lea.vmem [#allocation2], 544
        %394 = vst [vmem:[%s393] sm:$0xff] 0.0
        %395 = vst [vmem:[%s393 + $0x8] sm:$0xff] 0.0
        %396 = vst [vmem:[%s393 + $0x10] sm:$0xff] 0.0
        %397 = vst [vmem:[%s393 + $0x18] sm:$0xff] 0.0
        %s398 = scalar_lea.vmem [#allocation2], 32
        %399 = vst [vmem:[%s398 + $0x7] sm:$0x1] 0.0
        %400 = vst [vmem:[%s398 + $0x27] sm:$0x1] 0.0
        %401 = vst [vmem:[%s398 + $0x47] sm:$0x1] 0.0
        %402 = vst [vmem:[%s398 + $0x67] sm:$0x1] 0.0
        %403 = vst [vmem:[%s398 + $0x87] sm:$0x1] 0.0
        %404 = vst [vmem:[%s398 + $0xa7] sm:$0x1] 0.0
        %405 = vst [vmem:[%s398 + $0xc7] sm:$0x1] 0.0
        %406 = vst [vmem:[%s398 + $0xe7] sm:$0x1] 0.0
        %407 = vst [vmem:[%s398 + $0x107] sm:$0x1] 0.0
        %408 = vst [vmem:[%s398 + $0x127] sm:$0x1] 0.0
        %409 = vst [vmem:[%s398 + $0x147] sm:$0x1] 0.0
        %410 = vst [vmem:[%s398 + $0x167] sm:$0x1] 0.0
        %411 = vst [vmem:[%s398 + $0x187] sm:$0x1] 0.0
        %412 = vst [vmem:[%s398 + $0x1a7] sm:$0x1] 0.0
        %413 = vst [vmem:[%s398 + $0x1c7] sm:$0x1] 0.0
        %414 = vst [vmem:[%s398 + $0x1e7] sm:$0x1] 0.0
        %415 = vst [vmem:[%s398 + $0x18] sm:$0x1] 0.0
        %416 = vst [vmem:[%s398 + $0x38] sm:$0x1] 0.0
        %417 = vst [vmem:[%s398 + $0x58] sm:$0x1] 0.0
        %418 = vst [vmem:[%s398 + $0x78] sm:$0x1] 0.0
        %419 = vst [vmem:[%s398 + $0x98] sm:$0x1] 0.0
        %420 = vst [vmem:[%s398 + $0xb8] sm:$0x1] 0.0
        %421 = vst [vmem:[%s398 + $0xd8] sm:$0x1] 0.0
        %422 = vst [vmem:[%s398 + $0xf8] sm:$0x1] 0.0
        %423 = vst [vmem:[%s398 + $0x118] sm:$0x1] 0.0
        %424 = vst [vmem:[%s398 + $0x138] sm:$0x1] 0.0
        %425 = vst [vmem:[%s398 + $0x158] sm:$0x1] 0.0
        %426 = vst [vmem:[%s398 + $0x178] sm:$0x1] 0.0
        %427 = vst [vmem:[%s398 + $0x198] sm:$0x1] 0.0
        %428 = vst [vmem:[%s398 + $0x1b8] sm:$0x1] 0.0
        %429 = vst [vmem:[%s398 + $0x1d8] sm:$0x1] 0.0
        %430 = vst [vmem:[%s398 + $0x1f8] sm:$0x1] 0.0
        %431 = vst [vmem:[%s398 + $0x8] sm:$0xff] %v357
        %432 = vst [vmem:[%s398 + $0x10] sm:$0xff] %v358
        %433 = vst [vmem:[%s398 + $0x28] sm:$0xff] %v359
        %434 = vst [vmem:[%s398 + $0x30] sm:$0xff] %v360
        %435 = vst [vmem:[%s398 + $0x48] sm:$0xff] %v361
        %436 = vst [vmem:[%s398 + $0x50] sm:$0xff] %v362
        %437 = vst [vmem:[%s398 + $0x68] sm:$0xff] %v363
        %438 = vst [vmem:[%s398 + $0x70] sm:$0xff] %v364
        %439 = vst [vmem:[%s398 + $0x88] sm:$0xff] %v365
        %440 = vst [vmem:[%s398 + $0x90] sm:$0xff] %v366
        %441 = vst [vmem:[%s398 + $0xa8] sm:$0xff] %v367
        %442 = vst [vmem:[%s398 + $0xb0] sm:$0xff] %v368
        %443 = vst [vmem:[%s398 + $0xc8] sm:$0xff] %v369
        %444 = vst [vmem:[%s398 + $0xd0] sm:$0xff] %v370
        %445 = vst [vmem:[%s398 + $0xe8] sm:$0xff] %v371
        %446 = vst [vmem:[%s398 + $0xf0] sm:$0xff] %v372
        %447 = vst [vmem:[%s398 + $0x108] sm:$0xff] %v373
        %448 = vst [vmem:[%s398 + $0x110] sm:$0xff] %v374
        %449 = vst [vmem:[%s398 + $0x128] sm:$0xff] %v375
        %450 = vst [vmem:[%s398 + $0x130] sm:$0xff] %v376
        %451 = vst [vmem:[%s398 + $0x148] sm:$0xff] %v377
        %452 = vst [vmem:[%s398 + $0x150] sm:$0xff] %v378
        %453 = vst [vmem:[%s398 + $0x168] sm:$0xff] %v379
        %454 = vst [vmem:[%s398 + $0x170] sm:$0xff] %v380
        %455 = vst [vmem:[%s398 + $0x188] sm:$0xff] %v381
        %456 = vst [vmem:[%s398 + $0x190] sm:$0xff] %v382
        %457 = vst [vmem:[%s398 + $0x1a8] sm:$0xff] %v383
        %458 = vst [vmem:[%s398 + $0x1b0] sm:$0xff] %v384
        %459 = vst [vmem:[%s398 + $0x1c8] sm:$0xff] %v385
        %460 = vst [vmem:[%s398 + $0x1d0] sm:$0xff] %v386
        %461 = vst [vmem:[%s398 + $0x1e8] sm:$0xff] %v387
        %462 = vst [vmem:[%s398 + $0x1f0] sm:$0xff] %v388
        %v463 = vld [vmem:[#allocation2 + $0x7] sm:$0xff]
        %v464 = vld [vmem:[#allocation2 + $0xf] sm:$0xff]
        %v465 = vld [vmem:[#allocation2 + $0x27] sm:$0xff]
        %v466 = vld [vmem:[#allocation2 + $0x2f] sm:$0xff]
        %v467 = vld [vmem:[#allocation2 + $0x47] sm:$0xff]
        %v468 = vld [vmem:[#allocation2 + $0x4f] sm:$0xff]
        %v469 = vld [vmem:[#allocation2 + $0x67] sm:$0xff]
        %v470 = vld [vmem:[#allocation2 + $0x6f] sm:$0xff]
        %v471 = vld [vmem:[#allocation2 + $0x87] sm:$0xff]
        %v472 = vld [vmem:[#allocation2 + $0x8f] sm:$0xff]
        %v473 = vld [vmem:[#allocation2 + $0xa7] sm:$0xff]
        %v474 = vld [vmem:[#allocation2 + $0xaf] sm:$0xff]
        %v475 = vld [vmem:[#allocation2 + $0xc7] sm:$0xff]
        %v476 = vld [vmem:[#allocation2 + $0xcf] sm:$0xff]
        %v477 = vld [vmem:[#allocation2 + $0xe7] sm:$0xff]
        %v478 = vld [vmem:[#allocation2 + $0xef] sm:$0xff]
        %v479 = vld [vmem:[#allocation2 + $0x107] sm:$0xff]
        %v480 = vld [vmem:[#allocation2 + $0x10f] sm:$0xff]
        %v481 = vld [vmem:[#allocation2 + $0x127] sm:$0xff]
        %v482 = vld [vmem:[#allocation2 + $0x12f] sm:$0xff]
        %v483 = vld [vmem:[#allocation2 + $0x147] sm:$0xff]
        %v484 = vld [vmem:[#allocation2 + $0x14f] sm:$0xff]
        %v485 = vld [vmem:[#allocation2 + $0x167] sm:$0xff]
        %v486 = vld [vmem:[#allocation2 + $0x16f] sm:$0xff]
        %v487 = vld [vmem:[#allocation2 + $0x187] sm:$0xff]
        %v488 = vld [vmem:[#allocation2 + $0x18f] sm:$0xff]
        %v489 = vld [vmem:[#allocation2 + $0x1a7] sm:$0xff]
        %v490 = vld [vmem:[#allocation2 + $0x1af] sm:$0xff]
        %v491 = vld [vmem:[#allocation2 + $0x1c7] sm:$0xff]
        %v492 = vld [vmem:[#allocation2 + $0x1cf] sm:$0xff]
        %v493 = vld [vmem:[#allocation2 + $0x1e7] sm:$0xff]
        %v494 = vld [vmem:[#allocation2 + $0x1ef] sm:$0xff]
        %v495 = vld [vmem:[#allocation3] sm:$0xff]
        %v496 = vld [vmem:[#allocation3 + $0x8] sm:$0xff]
        %v497 = vld [vmem:[#allocation3 + $0x10] sm:$0xff]
        %v498 = vld [vmem:[#allocation3 + $0x18] sm:$0xff]
        %v499 = vld [vmem:[#allocation3 + $0x20] sm:$0xff]
        %v500 = vld [vmem:[#allocation3 + $0x28] sm:$0xff]
        %v501 = vld [vmem:[#allocation3 + $0x30] sm:$0xff]
        %v502 = vld [vmem:[#allocation3 + $0x38] sm:$0xff]
        %v503 = vld [vmem:[#allocation3 + $0x40] sm:$0xff]
        %v504 = vld [vmem:[#allocation3 + $0x48] sm:$0xff]
        %v505 = vld [vmem:[#allocation3 + $0x50] sm:$0xff]
        %v506 = vld [vmem:[#allocation3 + $0x58] sm:$0xff]
        %v507 = vld [vmem:[#allocation3 + $0x60] sm:$0xff]
        %v508 = vld [vmem:[#allocation3 + $0x68] sm:$0xff]
        %v509 = vld [vmem:[#allocation3 + $0x70] sm:$0xff]
        %v510 = vld [vmem:[#allocation3 + $0x78] sm:$0xff]
        %v511 = vld [vmem:[#allocation2 + $0x8] sm:$0xff]
        %v512 = vld [vmem:[#allocation2 + $0x10] sm:$0xff]
        %v513 = vld [vmem:[#allocation2 + $0x28] sm:$0xff]
        %v514 = vld [vmem:[#allocation2 + $0x30] sm:$0xff]
        %v515 = vld [vmem:[#allocation2 + $0x48] sm:$0xff]
        %v516 = vld [vmem:[#allocation2 + $0x50] sm:$0xff]
        %v517 = vld [vmem:[#allocation2 + $0x68] sm:$0xff]
        %v518 = vld [vmem:[#allocation2 + $0x70] sm:$0xff]
        %v519 = vld [vmem:[#allocation2 + $0x88] sm:$0xff]
        %v520 = vld [vmem:[#allocation2 + $0x90] sm:$0xff]
        %v521 = vld [vmem:[#allocation2 + $0xa8] sm:$0xff]
        %v522 = vld [vmem:[#allocation2 + $0xb0] sm:$0xff]
        %v523 = vld [vmem:[#allocation2 + $0xc8] sm:$0xff]
        %v524 = vld [vmem:[#allocation2 + $0xd0] sm:$0xff]
        %v525 = vld [vmem:[#allocation2 + $0xe8] sm:$0xff]
        %v526 = vld [vmem:[#allocation2 + $0xf0] sm:$0xff]
        %v527 = vld [vmem:[#allocation2 + $0x108] sm:$0xff]
        %v528 = vld [vmem:[#allocation2 + $0x110] sm:$0xff]
        %v529 = vld [vmem:[#allocation2 + $0x128] sm:$0xff]
        %v530 = vld [vmem:[#allocation2 + $0x130] sm:$0xff]
        %v531 = vld [vmem:[#allocation2 + $0x148] sm:$0xff]
        %v532 = vld [vmem:[#allocation2 + $0x150] sm:$0xff]
        %v533 = vld [vmem:[#allocation2 + $0x168] sm:$0xff]
        %v534 = vld [vmem:[#allocation2 + $0x170] sm:$0xff]
        %v535 = vld [vmem:[#allocation2 + $0x188] sm:$0xff]
        %v536 = vld [vmem:[#allocation2 + $0x190] sm:$0xff]
        %v537 = vld [vmem:[#allocation2 + $0x1a8] sm:$0xff]
        %v538 = vld [vmem:[#allocation2 + $0x1b0] sm:$0xff]
        %v539 = vld [vmem:[#allocation2 + $0x1c8] sm:$0xff]
        %v540 = vld [vmem:[#allocation2 + $0x1d0] sm:$0xff]
        %v541 = vld [vmem:[#allocation2 + $0x1e8] sm:$0xff]
        %v542 = vld [vmem:[#allocation2 + $0x1f0] sm:$0xff]
        %v543 = vld [vmem:[#allocation3 + $0x80] sm:$0xff]
        %v544 = vld [vmem:[#allocation3 + $0x88] sm:$0xff]
        %v545 = vld [vmem:[#allocation3 + $0x90] sm:$0xff]
        %v546 = vld [vmem:[#allocation3 + $0x98] sm:$0xff]
        %v547 = vld [vmem:[#allocation3 + $0xa0] sm:$0xff]
        %v548 = vld [vmem:[#allocation3 + $0xa8] sm:$0xff]
        %v549 = vld [vmem:[#allocation3 + $0xb0] sm:$0xff]
        %v550 = vld [vmem:[#allocation3 + $0xb8] sm:$0xff]
        %v551 = vld [vmem:[#allocation3 + $0xc0] sm:$0xff]
        %v552 = vld [vmem:[#allocation3 + $0xc8] sm:$0xff]
        %v553 = vld [vmem:[#allocation3 + $0xd0] sm:$0xff]
        %v554 = vld [vmem:[#allocation3 + $0xd8] sm:$0xff]
        %v555 = vld [vmem:[#allocation3 + $0xe0] sm:$0xff]
        %v556 = vld [vmem:[#allocation3 + $0xe8] sm:$0xff]
        %v557 = vld [vmem:[#allocation3 + $0xf0] sm:$0xff]
        %v558 = vld [vmem:[#allocation3 + $0xf8] sm:$0xff]
        %559 = vmatpush.msra.mxu0 %v558
        %560 = vmatpush.msra.mxu0 %v557
        %561 = vmatpush.msra.mxu0 %v556
        %562 = vmatpush.msra.mxu0 %v555
        %563 = vmatpush.msra.mxu0 %v554
        %564 = vmatpush.msra.mxu0 %v553
        %565 = vmatpush.msra.mxu0 %v552
        %566 = vmatpush.msra.mxu0 %v551
        %567 = vmatpush.msra.mxu0 %v550
        %568 = vmatpush.msra.mxu0 %v549
        %569 = vmatpush.msra.mxu0 %v548
        %570 = vmatpush.msra.mxu0 %v547
        %571 = vmatpush.msra.mxu0 %v546
        %572 = vmatpush.msra.mxu0 %v545
        %573 = vmatpush.msra.mxu0 %v544
        %574 = vmatpush.msra.mxu0 %v543
        %575 = vmatmul.f32.gmra.mxu0 %v511
        %v576 = vpop.f32.mrf.mxu0
        %v577 = vadd.f32 0.0, %v576
        %578 = vmatmul.f32.gmra.mxu0 %v512
        %v579 = vpop.f32.mrf.mxu0
        %v580 = vadd.f32 0.0, %v579
        %581 = vmatmul.f32.gmra.mxu0 %v513
        %v582 = vpop.f32.mrf.mxu0
        %v583 = vadd.f32 0.0, %v582
        %584 = vmatmul.f32.gmra.mxu0 %v514
        %v585 = vpop.f32.mrf.mxu0
        %v586 = vadd.f32 0.0, %v585
        %587 = vmatmul.f32.gmra.mxu0 %v515
        %v588 = vpop.f32.mrf.mxu0
        %v589 = vadd.f32 0.0, %v588
        %590 = vmatmul.f32.gmra.mxu0 %v516
        %v591 = vpop.f32.mrf.mxu0
        %v592 = vadd.f32 0.0, %v591
        %593 = vmatmul.f32.gmra.mxu0 %v517
        %v594 = vpop.f32.mrf.mxu0
        %v595 = vadd.f32 0.0, %v594
        %596 = vmatmul.f32.gmra.mxu0 %v518
        %v597 = vpop.f32.mrf.mxu0
        %v598 = vadd.f32 0.0, %v597
        %599 = vmatmul.f32.gmra.mxu0 %v519
        %v600 = vpop.f32.mrf.mxu0
        %v601 = vadd.f32 0.0, %v600
        %602 = vmatmul.f32.gmra.mxu0 %v520
        %v603 = vpop.f32.mrf.mxu0
        %v604 = vadd.f32 0.0, %v603
        %605 = vmatmul.f32.gmra.mxu0 %v521
        %v606 = vpop.f32.mrf.mxu0
        %v607 = vadd.f32 0.0, %v606
        %608 = vmatmul.f32.gmra.mxu0 %v522
        %v609 = vpop.f32.mrf.mxu0
        %v610 = vadd.f32 0.0, %v609
        %611 = vmatmul.f32.gmra.mxu0 %v523
        %v612 = vpop.f32.mrf.mxu0
        %v613 = vadd.f32 0.0, %v612
        %614 = vmatmul.f32.gmra.mxu0 %v524
        %v615 = vpop.f32.mrf.mxu0
        %v616 = vadd.f32 0.0, %v615
        %617 = vmatmul.f32.gmra.mxu0 %v525
        %v618 = vpop.f32.mrf.mxu0
        %v619 = vadd.f32 0.0, %v618
        %620 = vmatmul.f32.gmra.mxu0 %v526
        %v621 = vpop.f32.mrf.mxu0
        %v622 = vadd.f32 0.0, %v621
        %623 = vmatmul.f32.gmra.mxu0 %v527
        %v624 = vpop.f32.mrf.mxu0
        %v625 = vadd.f32 0.0, %v624
        %626 = vmatmul.f32.gmra.mxu0 %v528
        %v627 = vpop.f32.mrf.mxu0
        %v628 = vadd.f32 0.0, %v627
        %629 = vmatmul.f32.gmra.mxu0 %v529
        %v630 = vpop.f32.mrf.mxu0
        %v631 = vadd.f32 0.0, %v630
        %632 = vmatmul.f32.gmra.mxu0 %v530
        %v633 = vpop.f32.mrf.mxu0
        %v634 = vadd.f32 0.0, %v633
        %635 = vmatmul.f32.gmra.mxu0 %v531
        %v636 = vpop.f32.mrf.mxu0
        %v637 = vadd.f32 0.0, %v636
        %638 = vmatmul.f32.gmra.mxu0 %v532
        %v639 = vpop.f32.mrf.mxu0
        %v640 = vadd.f32 0.0, %v639
        %641 = vmatmul.f32.gmra.mxu0 %v533
        %v642 = vpop.f32.mrf.mxu0
        %v643 = vadd.f32 0.0, %v642
        %644 = vmatmul.f32.gmra.mxu0 %v534
        %v645 = vpop.f32.mrf.mxu0
        %v646 = vadd.f32 0.0, %v645
        %647 = vmatmul.f32.gmra.mxu0 %v535
        %v648 = vpop.f32.mrf.mxu0
        %v649 = vadd.f32 0.0, %v648
        %650 = vmatmul.f32.gmra.mxu0 %v536
        %v651 = vpop.f32.mrf.mxu0
        %v652 = vadd.f32 0.0, %v651
        %653 = vmatmul.f32.gmra.mxu0 %v537
        %v654 = vpop.f32.mrf.mxu0
        %v655 = vadd.f32 0.0, %v654
        %656 = vmatmul.f32.gmra.mxu0 %v538
        %v657 = vpop.f32.mrf.mxu0
        %v658 = vadd.f32 0.0, %v657
        %659 = vmatmul.f32.gmra.mxu0 %v539
        %v660 = vpop.f32.mrf.mxu0
        %v661 = vadd.f32 0.0, %v660
        %662 = vmatmul.f32.gmra.mxu0 %v540
        %v663 = vpop.f32.mrf.mxu0
        %v664 = vadd.f32 0.0, %v663
        %665 = vmatmul.f32.gmra.mxu0 %v541
        %v666 = vpop.f32.mrf.mxu0
        %v667 = vadd.f32 0.0, %v666
        %668 = vmatmul.f32.gmra.mxu0 %v542
        %v669 = vpop.f32.mrf.mxu0
        %v670 = vadd.f32 0.0, %v669
        %671 = vdwg.mxu0
        %672 = vmatpush.msra.mxu0 %v510
        %673 = vmatpush.msra.mxu0 %v509
        %674 = vmatpush.msra.mxu0 %v508
        %675 = vmatpush.msra.mxu0 %v507
        %676 = vmatpush.msra.mxu0 %v506
        %677 = vmatpush.msra.mxu0 %v505
        %678 = vmatpush.msra.mxu0 %v504
        %679 = vmatpush.msra.mxu0 %v503
        %680 = vmatpush.msra.mxu0 %v502
        %681 = vmatpush.msra.mxu0 %v501
        %682 = vmatpush.msra.mxu0 %v500
        %683 = vmatpush.msra.mxu0 %v499
        %684 = vmatpush.msra.mxu0 %v498
        %685 = vmatpush.msra.mxu0 %v497
        %686 = vmatpush.msra.mxu0 %v496
        %687 = vmatpush.msra.mxu0 %v495
        %688 = vmatmul.f32.gmra.mxu0 %v463
        %v689 = vpop.f32.mrf.mxu0
        %v690 = vadd.f32 %v577, %v689
        %691 = vmatmul.f32.gmra.mxu0 %v464
        %v692 = vpop.f32.mrf.mxu0
        %v693 = vadd.f32 %v580, %v692
        %694 = vmatmul.f32.gmra.mxu0 %v465
        %v695 = vpop.f32.mrf.mxu0
        %v696 = vadd.f32 %v583, %v695
        %697 = vmatmul.f32.gmra.mxu0 %v466
        %v698 = vpop.f32.mrf.mxu0
        %v699 = vadd.f32 %v586, %v698
        %700 = vmatmul.f32.gmra.mxu0 %v467
        %v701 = vpop.f32.mrf.mxu0
        %v702 = vadd.f32 %v589, %v701
        %703 = vmatmul.f32.gmra.mxu0 %v468
        %v704 = vpop.f32.mrf.mxu0
        %v705 = vadd.f32 %v592, %v704
        %706 = vmatmul.f32.gmra.mxu0 %v469
        %v707 = vpop.f32.mrf.mxu0
        %v708 = vadd.f32 %v595, %v707
        %709 = vmatmul.f32.gmra.mxu0 %v470
        %v710 = vpop.f32.mrf.mxu0
        %v711 = vadd.f32 %v598, %v710
        %712 = vmatmul.f32.gmra.mxu0 %v471
        %v713 = vpop.f32.mrf.mxu0
        %v714 = vadd.f32 %v601, %v713
        %715 = vmatmul.f32.gmra.mxu0 %v472
        %v716 = vpop.f32.mrf.mxu0
        %v717 = vadd.f32 %v604, %v716
        %718 = vmatmul.f32.gmra.mxu0 %v473
        %v719 = vpop.f32.mrf.mxu0
        %v720 = vadd.f32 %v607, %v719
        %721 = vmatmul.f32.gmra.mxu0 %v474
        %v722 = vpop.f32.mrf.mxu0
        %v723 = vadd.f32 %v610, %v722
        %724 = vmatmul.f32.gmra.mxu0 %v475
        %v725 = vpop.f32.mrf.mxu0
        %v726 = vadd.f32 %v613, %v725
        %727 = vmatmul.f32.gmra.mxu0 %v476
        %v728 = vpop.f32.mrf.mxu0
        %v729 = vadd.f32 %v616, %v728
        %730 = vmatmul.f32.gmra.mxu0 %v477
        %v731 = vpop.f32.mrf.mxu0
        %v732 = vadd.f32 %v619, %v731
        %733 = vmatmul.f32.gmra.mxu0 %v478
        %v734 = vpop.f32.mrf.mxu0
        %v735 = vadd.f32 %v622, %v734
        %736 = vmatmul.f32.gmra.mxu0 %v479
        %v737 = vpop.f32.mrf.mxu0
        %v738 = vadd.f32 %v625, %v737
        %739 = vmatmul.f32.gmra.mxu0 %v480
        %v740 = vpop.f32.mrf.mxu0
        %v741 = vadd.f32 %v628, %v740
        %742 = vmatmul.f32.gmra.mxu0 %v481
        %v743 = vpop.f32.mrf.mxu0
        %v744 = vadd.f32 %v631, %v743
        %745 = vmatmul.f32.gmra.mxu0 %v482
        %v746 = vpop.f32.mrf.mxu0
        %v747 = vadd.f32 %v634, %v746
        %748 = vmatmul.f32.gmra.mxu0 %v483
        %v749 = vpop.f32.mrf.mxu0
        %v750 = vadd.f32 %v637, %v749
        %751 = vmatmul.f32.gmra.mxu0 %v484
        %v752 = vpop.f32.mrf.mxu0
        %v753 = vadd.f32 %v640, %v752
        %754 = vmatmul.f32.gmra.mxu0 %v485
        %v755 = vpop.f32.mrf.mxu0
        %v756 = vadd.f32 %v643, %v755
        %757 = vmatmul.f32.gmra.mxu0 %v486
        %v758 = vpop.f32.mrf.mxu0
        %v759 = vadd.f32 %v646, %v758
        %760 = vmatmul.f32.gmra.mxu0 %v487
        %v761 = vpop.f32.mrf.mxu0
        %v762 = vadd.f32 %v649, %v761
        %763 = vmatmul.f32.gmra.mxu0 %v488
        %v764 = vpop.f32.mrf.mxu0
        %v765 = vadd.f32 %v652, %v764
        %766 = vmatmul.f32.gmra.mxu0 %v489
        %v767 = vpop.f32.mrf.mxu0
        %v768 = vadd.f32 %v655, %v767
        %769 = vmatmul.f32.gmra.mxu0 %v490
        %v770 = vpop.f32.mrf.mxu0
        %v771 = vadd.f32 %v658, %v770
        %772 = vmatmul.f32.gmra.mxu0 %v491
        %v773 = vpop.f32.mrf.mxu0
        %v774 = vadd.f32 %v661, %v773
        %775 = vmatmul.f32.gmra.mxu0 %v492
        %v776 = vpop.f32.mrf.mxu0
        %v777 = vadd.f32 %v664, %v776
        %778 = vmatmul.f32.gmra.mxu0 %v493
        %v779 = vpop.f32.mrf.mxu0
        %v780 = vadd.f32 %v667, %v779
        %781 = vmatmul.f32.gmra.mxu0 %v494
        %v782 = vpop.f32.mrf.mxu0
        %v783 = vadd.f32 %v670, %v782
        %784 = vdwg.mxu0
        %v785 = vld [vmem:[#allocation2 + $0x9] sm:$0xff]
        %v786 = vld [vmem:[#allocation2 + $0x11] sm:$0xff]
        %v787 = vld [vmem:[#allocation2 + $0x29] sm:$0xff]
        %v788 = vld [vmem:[#allocation2 + $0x31] sm:$0xff]
        %v789 = vld [vmem:[#allocation2 + $0x49] sm:$0xff]
        %v790 = vld [vmem:[#allocation2 + $0x51] sm:$0xff]
        %v791 = vld [vmem:[#allocation2 + $0x69] sm:$0xff]
        %v792 = vld [vmem:[#allocation2 + $0x71] sm:$0xff]
        %v793 = vld [vmem:[#allocation2 + $0x89] sm:$0xff]
        %v794 = vld [vmem:[#allocation2 + $0x91] sm:$0xff]
        %v795 = vld [vmem:[#allocation2 + $0xa9] sm:$0xff]
        %v796 = vld [vmem:[#allocation2 + $0xb1] sm:$0xff]
        %v797 = vld [vmem:[#allocation2 + $0xc9] sm:$0xff]
        %v798 = vld [vmem:[#allocation2 + $0xd1] sm:$0xff]
        %v799 = vld [vmem:[#allocation2 + $0xe9] sm:$0xff]
        %v800 = vld [vmem:[#allocation2 + $0xf1] sm:$0xff]
        %v801 = vld [vmem:[#allocation2 + $0x109] sm:$0xff]
        %v802 = vld [vmem:[#allocation2 + $0x111] sm:$0xff]
        %v803 = vld [vmem:[#allocation2 + $0x129] sm:$0xff]
        %v804 = vld [vmem:[#allocation2 + $0x131] sm:$0xff]
        %v805 = vld [vmem:[#allocation2 + $0x149] sm:$0xff]
        %v806 = vld [vmem:[#allocation2 + $0x151] sm:$0xff]
        %v807 = vld [vmem:[#allocation2 + $0x169] sm:$0xff]
        %v808 = vld [vmem:[#allocation2 + $0x171] sm:$0xff]
        %v809 = vld [vmem:[#allocation2 + $0x189] sm:$0xff]
        %v810 = vld [vmem:[#allocation2 + $0x191] sm:$0xff]
        %v811 = vld [vmem:[#allocation2 + $0x1a9] sm:$0xff]
        %v812 = vld [vmem:[#allocation2 + $0x1b1] sm:$0xff]
        %v813 = vld [vmem:[#allocation2 + $0x1c9] sm:$0xff]
        %v814 = vld [vmem:[#allocation2 + $0x1d1] sm:$0xff]
        %v815 = vld [vmem:[#allocation2 + $0x1e9] sm:$0xff]
        %v816 = vld [vmem:[#allocation2 + $0x1f1] sm:$0xff]
        %v817 = vld [vmem:[#allocation3 + $0x100] sm:$0xff]
        %v818 = vld [vmem:[#allocation3 + $0x108] sm:$0xff]
        %v819 = vld [vmem:[#allocation3 + $0x110] sm:$0xff]
        %v820 = vld [vmem:[#allocation3 + $0x118] sm:$0xff]
        %v821 = vld [vmem:[#allocation3 + $0x120] sm:$0xff]
        %v822 = vld [vmem:[#allocation3 + $0x128] sm:$0xff]
        %v823 = vld [vmem:[#allocation3 + $0x130] sm:$0xff]
        %v824 = vld [vmem:[#allocation3 + $0x138] sm:$0xff]
        %v825 = vld [vmem:[#allocation3 + $0x140] sm:$0xff]
        %v826 = vld [vmem:[#allocation3 + $0x148] sm:$0xff]
        %v827 = vld [vmem:[#allocation3 + $0x150] sm:$0xff]
        %v828 = vld [vmem:[#allocation3 + $0x158] sm:$0xff]
        %v829 = vld [vmem:[#allocation3 + $0x160] sm:$0xff]
        %v830 = vld [vmem:[#allocation3 + $0x168] sm:$0xff]
        %v831 = vld [vmem:[#allocation3 + $0x170] sm:$0xff]
        %v832 = vld [vmem:[#allocation3 + $0x178] sm:$0xff]
        %833 = vmatpush.msra.mxu0 %v832
        %834 = vmatpush.msra.mxu0 %v831
        %835 = vmatpush.msra.mxu0 %v830
        %836 = vmatpush.msra.mxu0 %v829
        %837 = vmatpush.msra.mxu0 %v828
        %838 = vmatpush.msra.mxu0 %v827
        %839 = vmatpush.msra.mxu0 %v826
        %840 = vmatpush.msra.mxu0 %v825
        %841 = vmatpush.msra.mxu0 %v824
        %842 = vmatpush.msra.mxu0 %v823
        %843 = vmatpush.msra.mxu0 %v822
        %844 = vmatpush.msra.mxu0 %v821
        %845 = vmatpush.msra.mxu0 %v820
        %846 = vmatpush.msra.mxu0 %v819
        %847 = vmatpush.msra.mxu0 %v818
        %848 = vmatpush.msra.mxu0 %v817
        %849 = vmatmul.f32.gmra.mxu0 %v785
        %v850 = vpop.f32.mrf.mxu0
        %v851 = vadd.f32 0.0, %v850
        %852 = vmatmul.f32.gmra.mxu0 %v786
        %v853 = vpop.f32.mrf.mxu0
        %v854 = vadd.f32 0.0, %v853
        %855 = vmatmul.f32.gmra.mxu0 %v787
        %v856 = vpop.f32.mrf.mxu0
        %v857 = vadd.f32 0.0, %v856
        %858 = vmatmul.f32.gmra.mxu0 %v788
        %v859 = vpop.f32.mrf.mxu0
        %v860 = vadd.f32 0.0, %v859
        %861 = vmatmul.f32.gmra.mxu0 %v789
        %v862 = vpop.f32.mrf.mxu0
        %v863 = vadd.f32 0.0, %v862
        %864 = vmatmul.f32.gmra.mxu0 %v790
        %v865 = vpop.f32.mrf.mxu0
        %v866 = vadd.f32 0.0, %v865
        %867 = vmatmul.f32.gmra.mxu0 %v791
        %v868 = vpop.f32.mrf.mxu0
        %v869 = vadd.f32 0.0, %v868
        %870 = vmatmul.f32.gmra.mxu0 %v792
        %v871 = vpop.f32.mrf.mxu0
        %v872 = vadd.f32 0.0, %v871
        %873 = vmatmul.f32.gmra.mxu0 %v793
        %v874 = vpop.f32.mrf.mxu0
        %v875 = vadd.f32 0.0, %v874
        %876 = vmatmul.f32.gmra.mxu0 %v794
        %v877 = vpop.f32.mrf.mxu0
        %v878 = vadd.f32 0.0, %v877
        %879 = vmatmul.f32.gmra.mxu0 %v795
        %v880 = vpop.f32.mrf.mxu0
        %v881 = vadd.f32 0.0, %v880
        %882 = vmatmul.f32.gmra.mxu0 %v796
        %v883 = vpop.f32.mrf.mxu0
        %v884 = vadd.f32 0.0, %v883
        %885 = vmatmul.f32.gmra.mxu0 %v797
        %v886 = vpop.f32.mrf.mxu0
        %v887 = vadd.f32 0.0, %v886
        %888 = vmatmul.f32.gmra.mxu0 %v798
        %v889 = vpop.f32.mrf.mxu0
        %v890 = vadd.f32 0.0, %v889
        %891 = vmatmul.f32.gmra.mxu0 %v799
        %v892 = vpop.f32.mrf.mxu0
        %v893 = vadd.f32 0.0, %v892
        %894 = vmatmul.f32.gmra.mxu0 %v800
        %v895 = vpop.f32.mrf.mxu0
        %v896 = vadd.f32 0.0, %v895
        %897 = vmatmul.f32.gmra.mxu0 %v801
        %v898 = vpop.f32.mrf.mxu0
        %v899 = vadd.f32 0.0, %v898
        %900 = vmatmul.f32.gmra.mxu0 %v802
        %v901 = vpop.f32.mrf.mxu0
        %v902 = vadd.f32 0.0, %v901
        %903 = vmatmul.f32.gmra.mxu0 %v803
        %v904 = vpop.f32.mrf.mxu0
        %v905 = vadd.f32 0.0, %v904
        %906 = vmatmul.f32.gmra.mxu0 %v804
        %v907 = vpop.f32.mrf.mxu0
        %v908 = vadd.f32 0.0, %v907
        %909 = vmatmul.f32.gmra.mxu0 %v805
        %v910 = vpop.f32.mrf.mxu0
        %v911 = vadd.f32 0.0, %v910
        %912 = vmatmul.f32.gmra.mxu0 %v806
        %v913 = vpop.f32.mrf.mxu0
        %v914 = vadd.f32 0.0, %v913
        %915 = vmatmul.f32.gmra.mxu0 %v807
        %v916 = vpop.f32.mrf.mxu0
        %v917 = vadd.f32 0.0, %v916
        %918 = vmatmul.f32.gmra.mxu0 %v808
        %v919 = vpop.f32.mrf.mxu0
        %v920 = vadd.f32 0.0, %v919
        %921 = vmatmul.f32.gmra.mxu0 %v809
        %v922 = vpop.f32.mrf.mxu0
        %v923 = vadd.f32 0.0, %v922
        %924 = vmatmul.f32.gmra.mxu0 %v810
        %v925 = vpop.f32.mrf.mxu0
        %v926 = vadd.f32 0.0, %v925
        %927 = vmatmul.f32.gmra.mxu0 %v811
        %v928 = vpop.f32.mrf.mxu0
        %v929 = vadd.f32 0.0, %v928
        %930 = vmatmul.f32.gmra.mxu0 %v812
        %v931 = vpop.f32.mrf.mxu0
        %v932 = vadd.f32 0.0, %v931
        %933 = vmatmul.f32.gmra.mxu0 %v813
        %v934 = vpop.f32.mrf.mxu0
        %v935 = vadd.f32 0.0, %v934
        %936 = vmatmul.f32.gmra.mxu0 %v814
        %v937 = vpop.f32.mrf.mxu0
        %v938 = vadd.f32 0.0, %v937
        %939 = vmatmul.f32.gmra.mxu0 %v815
        %v940 = vpop.f32.mrf.mxu0
        %v941 = vadd.f32 0.0, %v940
        %942 = vmatmul.f32.gmra.mxu0 %v816
        %v943 = vpop.f32.mrf.mxu0
        %v944 = vadd.f32 0.0, %v943
        %945 = vdwg.mxu0
        %v946 = vadd.f32 %v690, %v851
        %v947 = vadd.f32 %v693, %v854
        %v948 = vadd.f32 %v696, %v857
        %v949 = vadd.f32 %v699, %v860
        %v950 = vadd.f32 %v702, %v863
        %v951 = vadd.f32 %v705, %v866
        %v952 = vadd.f32 %v708, %v869
        %v953 = vadd.f32 %v711, %v872
        %v954 = vadd.f32 %v714, %v875
        %v955 = vadd.f32 %v717, %v878
        %v956 = vadd.f32 %v720, %v881
        %v957 = vadd.f32 %v723, %v884
        %v958 = vadd.f32 %v726, %v887
        %v959 = vadd.f32 %v729, %v890
        %v960 = vadd.f32 %v732, %v893
        %v961 = vadd.f32 %v735, %v896
        %v962 = vadd.f32 %v738, %v899
        %v963 = vadd.f32 %v741, %v902
        %v964 = vadd.f32 %v744, %v905
        %v965 = vadd.f32 %v747, %v908
        %v966 = vadd.f32 %v750, %v911
        %v967 = vadd.f32 %v753, %v914
        %v968 = vadd.f32 %v756, %v917
        %v969 = vadd.f32 %v759, %v920
        %v970 = vadd.f32 %v762, %v923
        %v971 = vadd.f32 %v765, %v926
        %v972 = vadd.f32 %v768, %v929
        %v973 = vadd.f32 %v771, %v932
        %v974 = vadd.f32 %v774, %v935
        %v975 = vadd.f32 %v777, %v938
        %v976 = vadd.f32 %v780, %v941
        %v977 = vadd.f32 %v783, %v944
        %v978 = vld [vmem:[%s398 + $0x7] sm:$0xff]
        %v979 = vld [vmem:[%s398 + $0xf] sm:$0xff]
        %v980 = vld [vmem:[%s398 + $0x27] sm:$0xff]
        %v981 = vld [vmem:[%s398 + $0x2f] sm:$0xff]
        %v982 = vld [vmem:[%s398 + $0x47] sm:$0xff]
        %v983 = vld [vmem:[%s398 + $0x4f] sm:$0xff]
        %v984 = vld [vmem:[%s398 + $0x67] sm:$0xff]
        %v985 = vld [vmem:[%s398 + $0x6f] sm:$0xff]
        %v986 = vld [vmem:[%s398 + $0x87] sm:$0xff]
        %v987 = vld [vmem:[%s398 + $0x8f] sm:$0xff]
        %v988 = vld [vmem:[%s398 + $0xa7] sm:$0xff]
        %v989 = vld [vmem:[%s398 + $0xaf] sm:$0xff]
        %v990 = vld [vmem:[%s398 + $0xc7] sm:$0xff]
        %v991 = vld [vmem:[%s398 + $0xcf] sm:$0xff]
        %v992 = vld [vmem:[%s398 + $0xe7] sm:$0xff]
        %v993 = vld [vmem:[%s398 + $0xef] sm:$0xff]
        %v994 = vld [vmem:[%s398 + $0x107] sm:$0xff]
        %v995 = vld [vmem:[%s398 + $0x10f] sm:$0xff]
        %v996 = vld [vmem:[%s398 + $0x127] sm:$0xff]
        %v997 = vld [vmem:[%s398 + $0x12f] sm:$0xff]
        %v998 = vld [vmem:[%s398 + $0x147] sm:$0xff]
        %v999 = vld [vmem:[%s398 + $0x14f] sm:$0xff]
        %v1000 = vld [vmem:[%s398 + $0x167] sm:$0xff]
        %v1001 = vld [vmem:[%s398 + $0x16f] sm:$0xff]
        %v1002 = vld [vmem:[%s398 + $0x187] sm:$0xff]
        %v1003 = vld [vmem:[%s398 + $0x18f] sm:$0xff]
        %v1004 = vld [vmem:[%s398 + $0x1a7] sm:$0xff]
        %v1005 = vld [vmem:[%s398 + $0x1af] sm:$0xff]
        %v1006 = vld [vmem:[%s398 + $0x1c7] sm:$0xff]
        %v1007 = vld [vmem:[%s398 + $0x1cf] sm:$0xff]
        %v1008 = vld [vmem:[%s398 + $0x1e7] sm:$0xff]
        %v1009 = vld [vmem:[%s398 + $0x1ef] sm:$0xff]
        %v1010 = vld [vmem:[#allocation3 + $0x180] sm:$0xff]
        %v1011 = vld [vmem:[#allocation3 + $0x188] sm:$0xff]
        %v1012 = vld [vmem:[#allocation3 + $0x190] sm:$0xff]
        %v1013 = vld [vmem:[#allocation3 + $0x198] sm:$0xff]
        %v1014 = vld [vmem:[#allocation3 + $0x1a0] sm:$0xff]
        %v1015 = vld [vmem:[#allocation3 + $0x1a8] sm:$0xff]
        %v1016 = vld [vmem:[#allocation3 + $0x1b0] sm:$0xff]
        %v1017 = vld [vmem:[#allocation3 + $0x1b8] sm:$0xff]
        %v1018 = vld [vmem:[#allocation3 + $0x1c0] sm:$0xff]
        %v1019 = vld [vmem:[#allocation3 + $0x1c8] sm:$0xff]
        %v1020 = vld [vmem:[#allocation3 + $0x1d0] sm:$0xff]
        %v1021 = vld [vmem:[#allocation3 + $0x1d8] sm:$0xff]
        %v1022 = vld [vmem:[#allocation3 + $0x1e0] sm:$0xff]
        %v1023 = vld [vmem:[#allocation3 + $0x1e8] sm:$0xff]
        %v1024 = vld [vmem:[#allocation3 + $0x1f0] sm:$0xff]
        %v1025 = vld [vmem:[#allocation3 + $0x1f8] sm:$0xff]
        %1026 = vmatpush.msra.mxu0 %v1025
        %1027 = vmatpush.msra.mxu0 %v1024
        %1028 = vmatpush.msra.mxu0 %v1023
        %1029 = vmatpush.msra.mxu0 %v1022
        %1030 = vmatpush.msra.mxu0 %v1021
        %1031 = vmatpush.msra.mxu0 %v1020
        %1032 = vmatpush.msra.mxu0 %v1019
        %1033 = vmatpush.msra.mxu0 %v1018
        %1034 = vmatpush.msra.mxu0 %v1017
        %1035 = vmatpush.msra.mxu0 %v1016
        %1036 = vmatpush.msra.mxu0 %v1015
        %1037 = vmatpush.msra.mxu0 %v1014
        %1038 = vmatpush.msra.mxu0 %v1013
        %1039 = vmatpush.msra.mxu0 %v1012
        %1040 = vmatpush.msra.mxu0 %v1011
        %1041 = vmatpush.msra.mxu0 %v1010
        %1042 = vmatmul.f32.gmra.mxu0 %v978
        %v1043 = vpop.f32.mrf.mxu0
        %v1044 = vadd.f32 0.0, %v1043
        %1045 = vmatmul.f32.gmra.mxu0 %v979
        %v1046 = vpop.f32.mrf.mxu0
        %v1047 = vadd.f32 0.0, %v1046
        %1048 = vmatmul.f32.gmra.mxu0 %v980
        %v1049 = vpop.f32.mrf.mxu0
        %v1050 = vadd.f32 0.0, %v1049
        %1051 = vmatmul.f32.gmra.mxu0 %v981
        %v1052 = vpop.f32.mrf.mxu0
        %v1053 = vadd.f32 0.0, %v1052
        %1054 = vmatmul.f32.gmra.mxu0 %v982
        %v1055 = vpop.f32.mrf.mxu0
        %v1056 = vadd.f32 0.0, %v1055
        %1057 = vmatmul.f32.gmra.mxu0 %v983
        %v1058 = vpop.f32.mrf.mxu0
        %v1059 = vadd.f32 0.0, %v1058
        %1060 = vmatmul.f32.gmra.mxu0 %v984
        %v1061 = vpop.f32.mrf.mxu0
        %v1062 = vadd.f32 0.0, %v1061
        %1063 = vmatmul.f32.gmra.mxu0 %v985
        %v1064 = vpop.f32.mrf.mxu0
        %v1065 = vadd.f32 0.0, %v1064
        %1066 = vmatmul.f32.gmra.mxu0 %v986
        %v1067 = vpop.f32.mrf.mxu0
        %v1068 = vadd.f32 0.0, %v1067
        %1069 = vmatmul.f32.gmra.mxu0 %v987
        %v1070 = vpop.f32.mrf.mxu0
        %v1071 = vadd.f32 0.0, %v1070
        %1072 = vmatmul.f32.gmra.mxu0 %v988
        %v1073 = vpop.f32.mrf.mxu0
        %v1074 = vadd.f32 0.0, %v1073
        %1075 = vmatmul.f32.gmra.mxu0 %v989
        %v1076 = vpop.f32.mrf.mxu0
        %v1077 = vadd.f32 0.0, %v1076
        %1078 = vmatmul.f32.gmra.mxu0 %v990
        %v1079 = vpop.f32.mrf.mxu0
        %v1080 = vadd.f32 0.0, %v1079
        %1081 = vmatmul.f32.gmra.mxu0 %v991
        %v1082 = vpop.f32.mrf.mxu0
        %v1083 = vadd.f32 0.0, %v1082
        %1084 = vmatmul.f32.gmra.mxu0 %v992
        %v1085 = vpop.f32.mrf.mxu0
        %v1086 = vadd.f32 0.0, %v1085
        %1087 = vmatmul.f32.gmra.mxu0 %v993
        %v1088 = vpop.f32.mrf.mxu0
        %v1089 = vadd.f32 0.0, %v1088
        %1090 = vmatmul.f32.gmra.mxu0 %v994
        %v1091 = vpop.f32.mrf.mxu0
        %v1092 = vadd.f32 0.0, %v1091
        %1093 = vmatmul.f32.gmra.mxu0 %v995
        %v1094 = vpop.f32.mrf.mxu0
        %v1095 = vadd.f32 0.0, %v1094
        %1096 = vmatmul.f32.gmra.mxu0 %v996
        %v1097 = vpop.f32.mrf.mxu0
        %v1098 = vadd.f32 0.0, %v1097
        %1099 = vmatmul.f32.gmra.mxu0 %v997
        %v1100 = vpop.f32.mrf.mxu0
        %v1101 = vadd.f32 0.0, %v1100
        %1102 = vmatmul.f32.gmra.mxu0 %v998
        %v1103 = vpop.f32.mrf.mxu0
        %v1104 = vadd.f32 0.0, %v1103
        %1105 = vmatmul.f32.gmra.mxu0 %v999
        %v1106 = vpop.f32.mrf.mxu0
        %v1107 = vadd.f32 0.0, %v1106
        %1108 = vmatmul.f32.gmra.mxu0 %v1000
        %v1109 = vpop.f32.mrf.mxu0
        %v1110 = vadd.f32 0.0, %v1109
        %1111 = vmatmul.f32.gmra.mxu0 %v1001
        %v1112 = vpop.f32.mrf.mxu0
        %v1113 = vadd.f32 0.0, %v1112
        %1114 = vmatmul.f32.gmra.mxu0 %v1002
        %v1115 = vpop.f32.mrf.mxu0
        %v1116 = vadd.f32 0.0, %v1115
        %1117 = vmatmul.f32.gmra.mxu0 %v1003
        %v1118 = vpop.f32.mrf.mxu0
        %v1119 = vadd.f32 0.0, %v1118
        %1120 = vmatmul.f32.gmra.mxu0 %v1004
        %v1121 = vpop.f32.mrf.mxu0
        %v1122 = vadd.f32 0.0, %v1121
        %1123 = vmatmul.f32.gmra.mxu0 %v1005
        %v1124 = vpop.f32.mrf.mxu0
        %v1125 = vadd.f32 0.0, %v1124
        %1126 = vmatmul.f32.gmra.mxu0 %v1006
        %v1127 = vpop.f32.mrf.mxu0
        %v1128 = vadd.f32 0.0, %v1127
        %1129 = vmatmul.f32.gmra.mxu0 %v1007
        %v1130 = vpop.f32.mrf.mxu0
        %v1131 = vadd.f32 0.0, %v1130
        %1132 = vmatmul.f32.gmra.mxu0 %v1008
        %v1133 = vpop.f32.mrf.mxu0
        %v1134 = vadd.f32 0.0, %v1133
        %1135 = vmatmul.f32.gmra.mxu0 %v1009
        %v1136 = vpop.f32.mrf.mxu0
        %v1137 = vadd.f32 0.0, %v1136
        %1138 = vdwg.mxu0
        %v1139 = vadd.f32 %v946, %v1044
        %v1140 = vadd.f32 %v947, %v1047
        %v1141 = vadd.f32 %v948, %v1050
        %v1142 = vadd.f32 %v949, %v1053
        %v1143 = vadd.f32 %v950, %v1056
        %v1144 = vadd.f32 %v951, %v1059
        %v1145 = vadd.f32 %v952, %v1062
        %v1146 = vadd.f32 %v953, %v1065
        %v1147 = vadd.f32 %v954, %v1068
        %v1148 = vadd.f32 %v955, %v1071
        %v1149 = vadd.f32 %v956, %v1074
        %v1150 = vadd.f32 %v957, %v1077
        %v1151 = vadd.f32 %v958, %v1080
        %v1152 = vadd.f32 %v959, %v1083
        %v1153 = vadd.f32 %v960, %v1086
        %v1154 = vadd.f32 %v961, %v1089
        %v1155 = vadd.f32 %v962, %v1092
        %v1156 = vadd.f32 %v963, %v1095
        %v1157 = vadd.f32 %v964, %v1098
        %v1158 = vadd.f32 %v965, %v1101
        %v1159 = vadd.f32 %v966, %v1104
        %v1160 = vadd.f32 %v967, %v1107
        %v1161 = vadd.f32 %v968, %v1110
        %v1162 = vadd.f32 %v969, %v1113
        %v1163 = vadd.f32 %v970, %v1116
        %v1164 = vadd.f32 %v971, %v1119
        %v1165 = vadd.f32 %v972, %v1122
        %v1166 = vadd.f32 %v973, %v1125
        %v1167 = vadd.f32 %v974, %v1128
        %v1168 = vadd.f32 %v975, %v1131
        %v1169 = vadd.f32 %v976, %v1134
        %v1170 = vadd.f32 %v977, %v1137
        %v1171 = vld [vmem:[%s398 + $0x8] sm:$0xff]
        %v1172 = vld [vmem:[%s398 + $0x10] sm:$0xff]
        %v1173 = vld [vmem:[%s398 + $0x28] sm:$0xff]
        %v1174 = vld [vmem:[%s398 + $0x30] sm:$0xff]
        %v1175 = vld [vmem:[%s398 + $0x48] sm:$0xff]
        %v1176 = vld [vmem:[%s398 + $0x50] sm:$0xff]
        %v1177 = vld [vmem:[%s398 + $0x68] sm:$0xff]
        %v1178 = vld [vmem:[%s398 + $0x70] sm:$0xff]
        %v1179 = vld [vmem:[%s398 + $0x88] sm:$0xff]
        %v1180 = vld [vmem:[%s398 + $0x90] sm:$0xff]
        %v1181 = vld [vmem:[%s398 + $0xa8] sm:$0xff]
        %v1182 = vld [vmem:[%s398 + $0xb0] sm:$0xff]
        %v1183 = vld [vmem:[%s398 + $0xc8] sm:$0xff]
        %v1184 = vld [vmem:[%s398 + $0xd0] sm:$0xff]
        %v1185 = vld [vmem:[%s398 + $0xe8] sm:$0xff]
        %v1186 = vld [vmem:[%s398 + $0xf0] sm:$0xff]
        %v1187 = vld [vmem:[%s398 + $0x108] sm:$0xff]
        %v1188 = vld [vmem:[%s398 + $0x110] sm:$0xff]
        %v1189 = vld [vmem:[%s398 + $0x128] sm:$0xff]
        %v1190 = vld [vmem:[%s398 + $0x130] sm:$0xff]
        %v1191 = vld [vmem:[%s398 + $0x148] sm:$0xff]
        %v1192 = vld [vmem:[%s398 + $0x150] sm:$0xff]
        %v1193 = vld [vmem:[%s398 + $0x168] sm:$0xff]
        %v1194 = vld [vmem:[%s398 + $0x170] sm:$0xff]
        %v1195 = vld [vmem:[%s398 + $0x188] sm:$0xff]
        %v1196 = vld [vmem:[%s398 + $0x190] sm:$0xff]
        %v1197 = vld [vmem:[%s398 + $0x1a8] sm:$0xff]
        %v1198 = vld [vmem:[%s398 + $0x1b0] sm:$0xff]
        %v1199 = vld [vmem:[%s398 + $0x1c8] sm:$0xff]
        %v1200 = vld [vmem:[%s398 + $0x1d0] sm:$0xff]
        %v1201 = vld [vmem:[%s398 + $0x1e8] sm:$0xff]
        %v1202 = vld [vmem:[%s398 + $0x1f0] sm:$0xff]
        %v1203 = vld [vmem:[#allocation3 + $0x200] sm:$0xff]
        %v1204 = vld [vmem:[#allocation3 + $0x208] sm:$0xff]
        %v1205 = vld [vmem:[#allocation3 + $0x210] sm:$0xff]
        %v1206 = vld [vmem:[#allocation3 + $0x218] sm:$0xff]
        %v1207 = vld [vmem:[#allocation3 + $0x220] sm:$0xff]
        %v1208 = vld [vmem:[#allocation3 + $0x228] sm:$0xff]
        %v1209 = vld [vmem:[#allocation3 + $0x230] sm:$0xff]
        %v1210 = vld [vmem:[#allocation3 + $0x238] sm:$0xff]
        %v1211 = vld [vmem:[#allocation3 + $0x240] sm:$0xff]
        %v1212 = vld [vmem:[#allocation3 + $0x248] sm:$0xff]
        %v1213 = vld [vmem:[#allocation3 + $0x250] sm:$0xff]
        %v1214 = vld [vmem:[#allocation3 + $0x258] sm:$0xff]
        %v1215 = vld [vmem:[#allocation3 + $0x260] sm:$0xff]
        %v1216 = vld [vmem:[#allocation3 + $0x268] sm:$0xff]
        %v1217 = vld [vmem:[#allocation3 + $0x270] sm:$0xff]
        %v1218 = vld [vmem:[#allocation3 + $0x278] sm:$0xff]
        %1219 = vmatpush.msra.mxu0 %v1218
        %1220 = vmatpush.msra.mxu0 %v1217
        %1221 = vmatpush.msra.mxu0 %v1216
        %1222 = vmatpush.msra.mxu0 %v1215
        %1223 = vmatpush.msra.mxu0 %v1214
        %1224 = vmatpush.msra.mxu0 %v1213
        %1225 = vmatpush.msra.mxu0 %v1212
        %1226 = vmatpush.msra.mxu0 %v1211
        %1227 = vmatpush.msra.mxu0 %v1210
        %1228 = vmatpush.msra.mxu0 %v1209
        %1229 = vmatpush.msra.mxu0 %v1208
        %1230 = vmatpush.msra.mxu0 %v1207
        %1231 = vmatpush.msra.mxu0 %v1206
        %1232 = vmatpush.msra.mxu0 %v1205
        %1233 = vmatpush.msra.mxu0 %v1204
        %1234 = vmatpush.msra.mxu0 %v1203
        %1235 = vmatmul.f32.gmra.mxu0 %v1171
        %v1236 = vpop.f32.mrf.mxu0
        %v1237 = vadd.f32 0.0, %v1236
        %1238 = vmatmul.f32.gmra.mxu0 %v1172
        %v1239 = vpop.f32.mrf.mxu0
        %v1240 = vadd.f32 0.0, %v1239
        %1241 = vmatmul.f32.gmra.mxu0 %v1173
        %v1242 = vpop.f32.mrf.mxu0
        %v1243 = vadd.f32 0.0, %v1242
        %1244 = vmatmul.f32.gmra.mxu0 %v1174
        %v1245 = vpop.f32.mrf.mxu0
        %v1246 = vadd.f32 0.0, %v1245
        %1247 = vmatmul.f32.gmra.mxu0 %v1175
        %v1248 = vpop.f32.mrf.mxu0
        %v1249 = vadd.f32 0.0, %v1248
        %1250 = vmatmul.f32.gmra.mxu0 %v1176
        %v1251 = vpop.f32.mrf.mxu0
        %v1252 = vadd.f32 0.0, %v1251
        %1253 = vmatmul.f32.gmra.mxu0 %v1177
        %v1254 = vpop.f32.mrf.mxu0
        %v1255 = vadd.f32 0.0, %v1254
        %1256 = vmatmul.f32.gmra.mxu0 %v1178
        %v1257 = vpop.f32.mrf.mxu0
        %v1258 = vadd.f32 0.0, %v1257
        %1259 = vmatmul.f32.gmra.mxu0 %v1179
        %v1260 = vpop.f32.mrf.mxu0
        %v1261 = vadd.f32 0.0, %v1260
        %1262 = vmatmul.f32.gmra.mxu0 %v1180
        %v1263 = vpop.f32.mrf.mxu0
        %v1264 = vadd.f32 0.0, %v1263
        %1265 = vmatmul.f32.gmra.mxu0 %v1181
        %v1266 = vpop.f32.mrf.mxu0
        %v1267 = vadd.f32 0.0, %v1266
        %1268 = vmatmul.f32.gmra.mxu0 %v1182
        %v1269 = vpop.f32.mrf.mxu0
        %v1270 = vadd.f32 0.0, %v1269
        %1271 = vmatmul.f32.gmra.mxu0 %v1183
        %v1272 = vpop.f32.mrf.mxu0
        %v1273 = vadd.f32 0.0, %v1272
        %1274 = vmatmul.f32.gmra.mxu0 %v1184
        %v1275 = vpop.f32.mrf.mxu0
        %v1276 = vadd.f32 0.0, %v1275
        %1277 = vmatmul.f32.gmra.mxu0 %v1185
        %v1278 = vpop.f32.mrf.mxu0
        %v1279 = vadd.f32 0.0, %v1278
        %1280 = vmatmul.f32.gmra.mxu0 %v1186
        %v1281 = vpop.f32.mrf.mxu0
        %v1282 = vadd.f32 0.0, %v1281
        %1283 = vmatmul.f32.gmra.mxu0 %v1187
        %v1284 = vpop.f32.mrf.mxu0
        %v1285 = vadd.f32 0.0, %v1284
        %1286 = vmatmul.f32.gmra.mxu0 %v1188
        %v1287 = vpop.f32.mrf.mxu0
        %v1288 = vadd.f32 0.0, %v1287
        %1289 = vmatmul.f32.gmra.mxu0 %v1189
        %v1290 = vpop.f32.mrf.mxu0
        %v1291 = vadd.f32 0.0, %v1290
        %1292 = vmatmul.f32.gmra.mxu0 %v1190
        %v1293 = vpop.f32.mrf.mxu0
        %v1294 = vadd.f32 0.0, %v1293
        %1295 = vmatmul.f32.gmra.mxu0 %v1191
        %v1296 = vpop.f32.mrf.mxu0
        %v1297 = vadd.f32 0.0, %v1296
        %1298 = vmatmul.f32.gmra.mxu0 %v1192
        %v1299 = vpop.f32.mrf.mxu0
        %v1300 = vadd.f32 0.0, %v1299
        %1301 = vmatmul.f32.gmra.mxu0 %v1193
        %v1302 = vpop.f32.mrf.mxu0
        %v1303 = vadd.f32 0.0, %v1302
        %1304 = vmatmul.f32.gmra.mxu0 %v1194
        %v1305 = vpop.f32.mrf.mxu0
        %v1306 = vadd.f32 0.0, %v1305
        %1307 = vmatmul.f32.gmra.mxu0 %v1195
        %v1308 = vpop.f32.mrf.mxu0
        %v1309 = vadd.f32 0.0, %v1308
        %1310 = vmatmul.f32.gmra.mxu0 %v1196
        %v1311 = vpop.f32.mrf.mxu0
        %v1312 = vadd.f32 0.0, %v1311
        %1313 = vmatmul.f32.gmra.mxu0 %v1197
        %v1314 = vpop.f32.mrf.mxu0
        %v1315 = vadd.f32 0.0, %v1314
        %1316 = vmatmul.f32.gmra.mxu0 %v1198
        %v1317 = vpop.f32.mrf.mxu0
        %v1318 = vadd.f32 0.0, %v1317
        %1319 = vmatmul.f32.gmra.mxu0 %v1199
        %v1320 = vpop.f32.mrf.mxu0
        %v1321 = vadd.f32 0.0, %v1320
        %1322 = vmatmul.f32.gmra.mxu0 %v1200
        %v1323 = vpop.f32.mrf.mxu0
        %v1324 = vadd.f32 0.0, %v1323
        %1325 = vmatmul.f32.gmra.mxu0 %v1201
        %v1326 = vpop.f32.mrf.mxu0
        %v1327 = vadd.f32 0.0, %v1326
        %1328 = vmatmul.f32.gmra.mxu0 %v1202
        %v1329 = vpop.f32.mrf.mxu0
        %v1330 = vadd.f32 0.0, %v1329
        %1331 = vdwg.mxu0
        %v1332 = vadd.f32 %v1139, %v1237
        %v1333 = vadd.f32 %v1140, %v1240
        %v1334 = vadd.f32 %v1141, %v1243
        %v1335 = vadd.f32 %v1142, %v1246
        %v1336 = vadd.f32 %v1143, %v1249
        %v1337 = vadd.f32 %v1144, %v1252
        %v1338 = vadd.f32 %v1145, %v1255
        %v1339 = vadd.f32 %v1146, %v1258
        %v1340 = vadd.f32 %v1147, %v1261
        %v1341 = vadd.f32 %v1148, %v1264
        %v1342 = vadd.f32 %v1149, %v1267
        %v1343 = vadd.f32 %v1150, %v1270
        %v1344 = vadd.f32 %v1151, %v1273
        %v1345 = vadd.f32 %v1152, %v1276
        %v1346 = vadd.f32 %v1153, %v1279
        %v1347 = vadd.f32 %v1154, %v1282
        %v1348 = vadd.f32 %v1155, %v1285
        %v1349 = vadd.f32 %v1156, %v1288
        %v1350 = vadd.f32 %v1157, %v1291
        %v1351 = vadd.f32 %v1158, %v1294
        %v1352 = vadd.f32 %v1159, %v1297
        %v1353 = vadd.f32 %v1160, %v1300
        %v1354 = vadd.f32 %v1161, %v1303
        %v1355 = vadd.f32 %v1162, %v1306
        %v1356 = vadd.f32 %v1163, %v1309
        %v1357 = vadd.f32 %v1164, %v1312
        %v1358 = vadd.f32 %v1165, %v1315
        %v1359 = vadd.f32 %v1166, %v1318
        %v1360 = vadd.f32 %v1167, %v1321
        %v1361 = vadd.f32 %v1168, %v1324
        %v1362 = vadd.f32 %v1169, %v1327
        %v1363 = vadd.f32 %v1170, %v1330
        %v1364 = vld [vmem:[%s398 + $0x9] sm:$0xff]
        %v1365 = vld [vmem:[%s398 + $0x11] sm:$0xff]
        %v1366 = vld [vmem:[%s398 + $0x29] sm:$0xff]
        %v1367 = vld [vmem:[%s398 + $0x31] sm:$0xff]
        %v1368 = vld [vmem:[%s398 + $0x49] sm:$0xff]
        %v1369 = vld [vmem:[%s398 + $0x51] sm:$0xff]
        %v1370 = vld [vmem:[%s398 + $0x69] sm:$0xff]
        %v1371 = vld [vmem:[%s398 + $0x71] sm:$0xff]
        %v1372 = vld [vmem:[%s398 + $0x89] sm:$0xff]
        %v1373 = vld [vmem:[%s398 + $0x91] sm:$0xff]
        %v1374 = vld [vmem:[%s398 + $0xa9] sm:$0xff]
        %v1375 = vld [vmem:[%s398 + $0xb1] sm:$0xff]
        %v1376 = vld [vmem:[%s398 + $0xc9] sm:$0xff]
        %v1377 = vld [vmem:[%s398 + $0xd1] sm:$0xff]
        %v1378 = vld [vmem:[%s398 + $0xe9] sm:$0xff]
        %v1379 = vld [vmem:[%s398 + $0xf1] sm:$0xff]
        %v1380 = vld [vmem:[%s398 + $0x109] sm:$0xff]
        %v1381 = vld [vmem:[%s398 + $0x111] sm:$0xff]
        %v1382 = vld [vmem:[%s398 + $0x129] sm:$0xff]
        %v1383 = vld [vmem:[%s398 + $0x131] sm:$0xff]
        %v1384 = vld [vmem:[%s398 + $0x149] sm:$0xff]
        %v1385 = vld [vmem:[%s398 + $0x151] sm:$0xff]
        %v1386 = vld [vmem:[%s398 + $0x169] sm:$0xff]
        %v1387 = vld [vmem:[%s398 + $0x171] sm:$0xff]
        %v1388 = vld [vmem:[%s398 + $0x189] sm:$0xff]
        %v1389 = vld [vmem:[%s398 + $0x191] sm:$0xff]
        %v1390 = vld [vmem:[%s398 + $0x1a9] sm:$0xff]
        %v1391 = vld [vmem:[%s398 + $0x1b1] sm:$0xff]
        %v1392 = vld [vmem:[%s398 + $0x1c9] sm:$0xff]
        %v1393 = vld [vmem:[%s398 + $0x1d1] sm:$0xff]
        %v1394 = vld [vmem:[%s398 + $0x1e9] sm:$0xff]
        %v1395 = vld [vmem:[%s398 + $0x1f1] sm:$0xff]
        %v1396 = vld [vmem:[#allocation3 + $0x280] sm:$0xff]
        %v1397 = vld [vmem:[#allocation3 + $0x288] sm:$0xff]
        %v1398 = vld [vmem:[#allocation3 + $0x290] sm:$0xff]
        %v1399 = vld [vmem:[#allocation3 + $0x298] sm:$0xff]
        %v1400 = vld [vmem:[#allocation3 + $0x2a0] sm:$0xff]
        %v1401 = vld [vmem:[#allocation3 + $0x2a8] sm:$0xff]
        %v1402 = vld [vmem:[#allocation3 + $0x2b0] sm:$0xff]
        %v1403 = vld [vmem:[#allocation3 + $0x2b8] sm:$0xff]
        %v1404 = vld [vmem:[#allocation3 + $0x2c0] sm:$0xff]
        %v1405 = vld [vmem:[#allocation3 + $0x2c8] sm:$0xff]
        %v1406 = vld [vmem:[#allocation3 + $0x2d0] sm:$0xff]
        %v1407 = vld [vmem:[#allocation3 + $0x2d8] sm:$0xff]
        %v1408 = vld [vmem:[#allocation3 + $0x2e0] sm:$0xff]
        %v1409 = vld [vmem:[#allocation3 + $0x2e8] sm:$0xff]
        %v1410 = vld [vmem:[#allocation3 + $0x2f0] sm:$0xff]
        %v1411 = vld [vmem:[#allocation3 + $0x2f8] sm:$0xff]
        %1412 = vmatpush.msra.mxu0 %v1411
        %1413 = vmatpush.msra.mxu0 %v1410
        %1414 = vmatpush.msra.mxu0 %v1409
        %1415 = vmatpush.msra.mxu0 %v1408
        %1416 = vmatpush.msra.mxu0 %v1407
        %1417 = vmatpush.msra.mxu0 %v1406
        %1418 = vmatpush.msra.mxu0 %v1405
        %1419 = vmatpush.msra.mxu0 %v1404
        %1420 = vmatpush.msra.mxu0 %v1403
        %1421 = vmatpush.msra.mxu0 %v1402
        %1422 = vmatpush.msra.mxu0 %v1401
        %1423 = vmatpush.msra.mxu0 %v1400
        %1424 = vmatpush.msra.mxu0 %v1399
        %1425 = vmatpush.msra.mxu0 %v1398
        %1426 = vmatpush.msra.mxu0 %v1397
        %1427 = vmatpush.msra.mxu0 %v1396
        %1428 = vmatmul.f32.gmra.mxu0 %v1364
        %v1429 = vpop.f32.mrf.mxu0
        %v1430 = vadd.f32 0.0, %v1429
        %1431 = vmatmul.f32.gmra.mxu0 %v1365
        %v1432 = vpop.f32.mrf.mxu0
        %v1433 = vadd.f32 0.0, %v1432
        %1434 = vmatmul.f32.gmra.mxu0 %v1366
        %v1435 = vpop.f32.mrf.mxu0
        %v1436 = vadd.f32 0.0, %v1435
        %1437 = vmatmul.f32.gmra.mxu0 %v1367
        %v1438 = vpop.f32.mrf.mxu0
        %v1439 = vadd.f32 0.0, %v1438
        %1440 = vmatmul.f32.gmra.mxu0 %v1368
        %v1441 = vpop.f32.mrf.mxu0
        %v1442 = vadd.f32 0.0, %v1441
        %1443 = vmatmul.f32.gmra.mxu0 %v1369
        %v1444 = vpop.f32.mrf.mxu0
        %v1445 = vadd.f32 0.0, %v1444
        %1446 = vmatmul.f32.gmra.mxu0 %v1370
        %v1447 = vpop.f32.mrf.mxu0
        %v1448 = vadd.f32 0.0, %v1447
        %1449 = vmatmul.f32.gmra.mxu0 %v1371
        %v1450 = vpop.f32.mrf.mxu0
        %v1451 = vadd.f32 0.0, %v1450
        %1452 = vmatmul.f32.gmra.mxu0 %v1372
        %v1453 = vpop.f32.mrf.mxu0
        %v1454 = vadd.f32 0.0, %v1453
        %1455 = vmatmul.f32.gmra.mxu0 %v1373
        %v1456 = vpop.f32.mrf.mxu0
        %v1457 = vadd.f32 0.0, %v1456
        %1458 = vmatmul.f32.gmra.mxu0 %v1374
        %v1459 = vpop.f32.mrf.mxu0
        %v1460 = vadd.f32 0.0, %v1459
        %1461 = vmatmul.f32.gmra.mxu0 %v1375
        %v1462 = vpop.f32.mrf.mxu0
        %v1463 = vadd.f32 0.0, %v1462
        %1464 = vmatmul.f32.gmra.mxu0 %v1376
        %v1465 = vpop.f32.mrf.mxu0
        %v1466 = vadd.f32 0.0, %v1465
        %1467 = vmatmul.f32.gmra.mxu0 %v1377
        %v1468 = vpop.f32.mrf.mxu0
        %v1469 = vadd.f32 0.0, %v1468
        %1470 = vmatmul.f32.gmra.mxu0 %v1378
        %v1471 = vpop.f32.mrf.mxu0
        %v1472 = vadd.f32 0.0, %v1471
        %1473 = vmatmul.f32.gmra.mxu0 %v1379
        %v1474 = vpop.f32.mrf.mxu0
        %v1475 = vadd.f32 0.0, %v1474
        %1476 = vmatmul.f32.gmra.mxu0 %v1380
        %v1477 = vpop.f32.mrf.mxu0
        %v1478 = vadd.f32 0.0, %v1477
        %1479 = vmatmul.f32.gmra.mxu0 %v1381
        %v1480 = vpop.f32.mrf.mxu0
        %v1481 = vadd.f32 0.0, %v1480
        %1482 = vmatmul.f32.gmra.mxu0 %v1382
        %v1483 = vpop.f32.mrf.mxu0
        %v1484 = vadd.f32 0.0, %v1483
        %1485 = vmatmul.f32.gmra.mxu0 %v1383
        %v1486 = vpop.f32.mrf.mxu0
        %v1487 = vadd.f32 0.0, %v1486
        %1488 = vmatmul.f32.gmra.mxu0 %v1384
        %v1489 = vpop.f32.mrf.mxu0
        %v1490 = vadd.f32 0.0, %v1489
        %1491 = vmatmul.f32.gmra.mxu0 %v1385
        %v1492 = vpop.f32.mrf.mxu0
        %v1493 = vadd.f32 0.0, %v1492
        %1494 = vmatmul.f32.gmra.mxu0 %v1386
        %v1495 = vpop.f32.mrf.mxu0
        %v1496 = vadd.f32 0.0, %v1495
        %1497 = vmatmul.f32.gmra.mxu0 %v1387
        %v1498 = vpop.f32.mrf.mxu0
        %v1499 = vadd.f32 0.0, %v1498
        %1500 = vmatmul.f32.gmra.mxu0 %v1388
        %v1501 = vpop.f32.mrf.mxu0
        %v1502 = vadd.f32 0.0, %v1501
        %1503 = vmatmul.f32.gmra.mxu0 %v1389
        %v1504 = vpop.f32.mrf.mxu0
        %v1505 = vadd.f32 0.0, %v1504
        %1506 = vmatmul.f32.gmra.mxu0 %v1390
        %v1507 = vpop.f32.mrf.mxu0
        %v1508 = vadd.f32 0.0, %v1507
        %1509 = vmatmul.f32.gmra.mxu0 %v1391
        %v1510 = vpop.f32.mrf.mxu0
        %v1511 = vadd.f32 0.0, %v1510
        %1512 = vmatmul.f32.gmra.mxu0 %v1392
        %v1513 = vpop.f32.mrf.mxu0
        %v1514 = vadd.f32 0.0, %v1513
        %1515 = vmatmul.f32.gmra.mxu0 %v1393
        %v1516 = vpop.f32.mrf.mxu0
        %v1517 = vadd.f32 0.0, %v1516
        %1518 = vmatmul.f32.gmra.mxu0 %v1394
        %v1519 = vpop.f32.mrf.mxu0
        %v1520 = vadd.f32 0.0, %v1519
        %1521 = vmatmul.f32.gmra.mxu0 %v1395
        %v1522 = vpop.f32.mrf.mxu0
        %v1523 = vadd.f32 0.0, %v1522
        %1524 = vdwg.mxu0
        %v1525 = vadd.f32 %v1332, %v1430
        %v1526 = vadd.f32 %v1333, %v1433
        %v1527 = vadd.f32 %v1334, %v1436
        %v1528 = vadd.f32 %v1335, %v1439
        %v1529 = vadd.f32 %v1336, %v1442
        %v1530 = vadd.f32 %v1337, %v1445
        %v1531 = vadd.f32 %v1338, %v1448
        %v1532 = vadd.f32 %v1339, %v1451
        %v1533 = vadd.f32 %v1340, %v1454
        %v1534 = vadd.f32 %v1341, %v1457
        %v1535 = vadd.f32 %v1342, %v1460
        %v1536 = vadd.f32 %v1343, %v1463
        %v1537 = vadd.f32 %v1344, %v1466
        %v1538 = vadd.f32 %v1345, %v1469
        %v1539 = vadd.f32 %v1346, %v1472
        %v1540 = vadd.f32 %v1347, %v1475
        %v1541 = vadd.f32 %v1348, %v1478
        %v1542 = vadd.f32 %v1349, %v1481
        %v1543 = vadd.f32 %v1350, %v1484
        %v1544 = vadd.f32 %v1351, %v1487
        %v1545 = vadd.f32 %v1352, %v1490
        %v1546 = vadd.f32 %v1353, %v1493
        %v1547 = vadd.f32 %v1354, %v1496
        %v1548 = vadd.f32 %v1355, %v1499
        %v1549 = vadd.f32 %v1356, %v1502
        %v1550 = vadd.f32 %v1357, %v1505
        %v1551 = vadd.f32 %v1358, %v1508
        %v1552 = vadd.f32 %v1359, %v1511
        %v1553 = vadd.f32 %v1360, %v1514
        %v1554 = vadd.f32 %v1361, %v1517
        %v1555 = vadd.f32 %v1362, %v1520
        %v1556 = vadd.f32 %v1363, %v1523
        %s1557 = scalar_lea.vmem [#allocation2], 64
        %v1558 = vld [vmem:[%s1557 + $0x7] sm:$0xff]
        %v1559 = vld [vmem:[%s1557 + $0xf] sm:$0xff]
        %v1560 = vld [vmem:[%s1557 + $0x27] sm:$0xff]
        %v1561 = vld [vmem:[%s1557 + $0x2f] sm:$0xff]
        %v1562 = vld [vmem:[%s1557 + $0x47] sm:$0xff]
        %v1563 = vld [vmem:[%s1557 + $0x4f] sm:$0xff]
        %v1564 = vld [vmem:[%s1557 + $0x67] sm:$0xff]
        %v1565 = vld [vmem:[%s1557 + $0x6f] sm:$0xff]
        %v1566 = vld [vmem:[%s1557 + $0x87] sm:$0xff]
        %v1567 = vld [vmem:[%s1557 + $0x8f] sm:$0xff]
        %v1568 = vld [vmem:[%s1557 + $0xa7] sm:$0xff]
        %v1569 = vld [vmem:[%s1557 + $0xaf] sm:$0xff]
        %v1570 = vld [vmem:[%s1557 + $0xc7] sm:$0xff]
        %v1571 = vld [vmem:[%s1557 + $0xcf] sm:$0xff]
        %v1572 = vld [vmem:[%s1557 + $0xe7] sm:$0xff]
        %v1573 = vld [vmem:[%s1557 + $0xef] sm:$0xff]
        %v1574 = vld [vmem:[%s1557 + $0x107] sm:$0xff]
        %v1575 = vld [vmem:[%s1557 + $0x10f] sm:$0xff]
        %v1576 = vld [vmem:[%s1557 + $0x127] sm:$0xff]
        %v1577 = vld [vmem:[%s1557 + $0x12f] sm:$0xff]
        %v1578 = vld [vmem:[%s1557 + $0x147] sm:$0xff]
        %v1579 = vld [vmem:[%s1557 + $0x14f] sm:$0xff]
        %v1580 = vld [vmem:[%s1557 + $0x167] sm:$0xff]
        %v1581 = vld [vmem:[%s1557 + $0x16f] sm:$0xff]
        %v1582 = vld [vmem:[%s1557 + $0x187] sm:$0xff]
        %v1583 = vld [vmem:[%s1557 + $0x18f] sm:$0xff]
        %v1584 = vld [vmem:[%s1557 + $0x1a7] sm:$0xff]
        %v1585 = vld [vmem:[%s1557 + $0x1af] sm:$0xff]
        %v1586 = vld [vmem:[%s1557 + $0x1c7] sm:$0xff]
        %v1587 = vld [vmem:[%s1557 + $0x1cf] sm:$0xff]
        %v1588 = vld [vmem:[%s1557 + $0x1e7] sm:$0xff]
        %v1589 = vld [vmem:[%s1557 + $0x1ef] sm:$0xff]
        %v1590 = vld [vmem:[#allocation3 + $0x300] sm:$0xff]
        %v1591 = vld [vmem:[#allocation3 + $0x308] sm:$0xff]
        %v1592 = vld [vmem:[#allocation3 + $0x310] sm:$0xff]
        %v1593 = vld [vmem:[#allocation3 + $0x318] sm:$0xff]
        %v1594 = vld [vmem:[#allocation3 + $0x320] sm:$0xff]
        %v1595 = vld [vmem:[#allocation3 + $0x328] sm:$0xff]
        %v1596 = vld [vmem:[#allocation3 + $0x330] sm:$0xff]
        %v1597 = vld [vmem:[#allocation3 + $0x338] sm:$0xff]
        %v1598 = vld [vmem:[#allocation3 + $0x340] sm:$0xff]
        %v1599 = vld [vmem:[#allocation3 + $0x348] sm:$0xff]
        %v1600 = vld [vmem:[#allocation3 + $0x350] sm:$0xff]
        %v1601 = vld [vmem:[#allocation3 + $0x358] sm:$0xff]
        %v1602 = vld [vmem:[#allocation3 + $0x360] sm:$0xff]
        %v1603 = vld [vmem:[#allocation3 + $0x368] sm:$0xff]
        %v1604 = vld [vmem:[#allocation3 + $0x370] sm:$0xff]
        %v1605 = vld [vmem:[#allocation3 + $0x378] sm:$0xff]
        %1606 = vmatpush.msra.mxu0 %v1605
        %1607 = vmatpush.msra.mxu0 %v1604
        %1608 = vmatpush.msra.mxu0 %v1603
        %1609 = vmatpush.msra.mxu0 %v1602
        %1610 = vmatpush.msra.mxu0 %v1601
        %1611 = vmatpush.msra.mxu0 %v1600
        %1612 = vmatpush.msra.mxu0 %v1599
        %1613 = vmatpush.msra.mxu0 %v1598
        %1614 = vmatpush.msra.mxu0 %v1597
        %1615 = vmatpush.msra.mxu0 %v1596
        %1616 = vmatpush.msra.mxu0 %v1595
        %1617 = vmatpush.msra.mxu0 %v1594
        %1618 = vmatpush.msra.mxu0 %v1593
        %1619 = vmatpush.msra.mxu0 %v1592
        %1620 = vmatpush.msra.mxu0 %v1591
        %1621 = vmatpush.msra.mxu0 %v1590
        %1622 = vmatmul.f32.gmra.mxu0 %v1558
        %v1623 = vpop.f32.mrf.mxu0
        %v1624 = vadd.f32 0.0, %v1623
        %1625 = vmatmul.f32.gmra.mxu0 %v1559
        %v1626 = vpop.f32.mrf.mxu0
        %v1627 = vadd.f32 0.0, %v1626
        %1628 = vmatmul.f32.gmra.mxu0 %v1560
        %v1629 = vpop.f32.mrf.mxu0
        %v1630 = vadd.f32 0.0, %v1629
        %1631 = vmatmul.f32.gmra.mxu0 %v1561
        %v1632 = vpop.f32.mrf.mxu0
        %v1633 = vadd.f32 0.0, %v1632
        %1634 = vmatmul.f32.gmra.mxu0 %v1562
        %v1635 = vpop.f32.mrf.mxu0
        %v1636 = vadd.f32 0.0, %v1635
        %1637 = vmatmul.f32.gmra.mxu0 %v1563
        %v1638 = vpop.f32.mrf.mxu0
        %v1639 = vadd.f32 0.0, %v1638
        %1640 = vmatmul.f32.gmra.mxu0 %v1564
        %v1641 = vpop.f32.mrf.mxu0
        %v1642 = vadd.f32 0.0, %v1641
        %1643 = vmatmul.f32.gmra.mxu0 %v1565
        %v1644 = vpop.f32.mrf.mxu0
        %v1645 = vadd.f32 0.0, %v1644
        %1646 = vmatmul.f32.gmra.mxu0 %v1566
        %v1647 = vpop.f32.mrf.mxu0
        %v1648 = vadd.f32 0.0, %v1647
        %1649 = vmatmul.f32.gmra.mxu0 %v1567
        %v1650 = vpop.f32.mrf.mxu0
        %v1651 = vadd.f32 0.0, %v1650
        %1652 = vmatmul.f32.gmra.mxu0 %v1568
        %v1653 = vpop.f32.mrf.mxu0
        %v1654 = vadd.f32 0.0, %v1653
        %1655 = vmatmul.f32.gmra.mxu0 %v1569
        %v1656 = vpop.f32.mrf.mxu0
        %v1657 = vadd.f32 0.0, %v1656
        %1658 = vmatmul.f32.gmra.mxu0 %v1570
        %v1659 = vpop.f32.mrf.mxu0
        %v1660 = vadd.f32 0.0, %v1659
        %1661 = vmatmul.f32.gmra.mxu0 %v1571
        %v1662 = vpop.f32.mrf.mxu0
        %v1663 = vadd.f32 0.0, %v1662
        %1664 = vmatmul.f32.gmra.mxu0 %v1572
        %v1665 = vpop.f32.mrf.mxu0
        %v1666 = vadd.f32 0.0, %v1665
        %1667 = vmatmul.f32.gmra.mxu0 %v1573
        %v1668 = vpop.f32.mrf.mxu0
        %v1669 = vadd.f32 0.0, %v1668
        %1670 = vmatmul.f32.gmra.mxu0 %v1574
        %v1671 = vpop.f32.mrf.mxu0
        %v1672 = vadd.f32 0.0, %v1671
        %1673 = vmatmul.f32.gmra.mxu0 %v1575
        %v1674 = vpop.f32.mrf.mxu0
        %v1675 = vadd.f32 0.0, %v1674
        %1676 = vmatmul.f32.gmra.mxu0 %v1576
        %v1677 = vpop.f32.mrf.mxu0
        %v1678 = vadd.f32 0.0, %v1677
        %1679 = vmatmul.f32.gmra.mxu0 %v1577
        %v1680 = vpop.f32.mrf.mxu0
        %v1681 = vadd.f32 0.0, %v1680
        %1682 = vmatmul.f32.gmra.mxu0 %v1578
        %v1683 = vpop.f32.mrf.mxu0
        %v1684 = vadd.f32 0.0, %v1683
        %1685 = vmatmul.f32.gmra.mxu0 %v1579
        %v1686 = vpop.f32.mrf.mxu0
        %v1687 = vadd.f32 0.0, %v1686
        %1688 = vmatmul.f32.gmra.mxu0 %v1580
        %v1689 = vpop.f32.mrf.mxu0
        %v1690 = vadd.f32 0.0, %v1689
        %1691 = vmatmul.f32.gmra.mxu0 %v1581
        %v1692 = vpop.f32.mrf.mxu0
        %v1693 = vadd.f32 0.0, %v1692
        %1694 = vmatmul.f32.gmra.mxu0 %v1582
        %v1695 = vpop.f32.mrf.mxu0
        %v1696 = vadd.f32 0.0, %v1695
        %1697 = vmatmul.f32.gmra.mxu0 %v1583
        %v1698 = vpop.f32.mrf.mxu0
        %v1699 = vadd.f32 0.0, %v1698
        %1700 = vmatmul.f32.gmra.mxu0 %v1584
        %v1701 = vpop.f32.mrf.mxu0
        %v1702 = vadd.f32 0.0, %v1701
        %1703 = vmatmul.f32.gmra.mxu0 %v1585
        %v1704 = vpop.f32.mrf.mxu0
        %v1705 = vadd.f32 0.0, %v1704
        %1706 = vmatmul.f32.gmra.mxu0 %v1586
        %v1707 = vpop.f32.mrf.mxu0
        %v1708 = vadd.f32 0.0, %v1707
        %1709 = vmatmul.f32.gmra.mxu0 %v1587
        %v1710 = vpop.f32.mrf.mxu0
        %v1711 = vadd.f32 0.0, %v1710
        %1712 = vmatmul.f32.gmra.mxu0 %v1588
        %v1713 = vpop.f32.mrf.mxu0
        %v1714 = vadd.f32 0.0, %v1713
        %1715 = vmatmul.f32.gmra.mxu0 %v1589
        %v1716 = vpop.f32.mrf.mxu0
        %v1717 = vadd.f32 0.0, %v1716
        %1718 = vdwg.mxu0
        %v1719 = vadd.f32 %v1525, %v1624
        %v1720 = vadd.f32 %v1526, %v1627
        %v1721 = vadd.f32 %v1527, %v1630
        %v1722 = vadd.f32 %v1528, %v1633
        %v1723 = vadd.f32 %v1529, %v1636
        %v1724 = vadd.f32 %v1530, %v1639
        %v1725 = vadd.f32 %v1531, %v1642
        %v1726 = vadd.f32 %v1532, %v1645
        %v1727 = vadd.f32 %v1533, %v1648
        %v1728 = vadd.f32 %v1534, %v1651
        %v1729 = vadd.f32 %v1535, %v1654
        %v1730 = vadd.f32 %v1536, %v1657
        %v1731 = vadd.f32 %v1537, %v1660
        %v1732 = vadd.f32 %v1538, %v1663
        %v1733 = vadd.f32 %v1539, %v1666
        %v1734 = vadd.f32 %v1540, %v1669
        %v1735 = vadd.f32 %v1541, %v1672
        %v1736 = vadd.f32 %v1542, %v1675
        %v1737 = vadd.f32 %v1543, %v1678
        %v1738 = vadd.f32 %v1544, %v1681
        %v1739 = vadd.f32 %v1545, %v1684
        %v1740 = vadd.f32 %v1546, %v1687
        %v1741 = vadd.f32 %v1547, %v1690
        %v1742 = vadd.f32 %v1548, %v1693
        %v1743 = vadd.f32 %v1549, %v1696
        %v1744 = vadd.f32 %v1550, %v1699
        %v1745 = vadd.f32 %v1551, %v1702
        %v1746 = vadd.f32 %v1552, %v1705
        %v1747 = vadd.f32 %v1553, %v1708
        %v1748 = vadd.f32 %v1554, %v1711
        %v1749 = vadd.f32 %v1555, %v1714
        %v1750 = vadd.f32 %v1556, %v1717
        %v1751 = vld [vmem:[%s1557 + $0x8] sm:$0xff]
        %v1752 = vld [vmem:[%s1557 + $0x10] sm:$0xff]
        %v1753 = vld [vmem:[%s1557 + $0x28] sm:$0xff]
        %v1754 = vld [vmem:[%s1557 + $0x30] sm:$0xff]
        %v1755 = vld [vmem:[%s1557 + $0x48] sm:$0xff]
        %v1756 = vld [vmem:[%s1557 + $0x50] sm:$0xff]
        %v1757 = vld [vmem:[%s1557 + $0x68] sm:$0xff]
        %v1758 = vld [vmem:[%s1557 + $0x70] sm:$0xff]
        %v1759 = vld [vmem:[%s1557 + $0x88] sm:$0xff]
        %v1760 = vld [vmem:[%s1557 + $0x90] sm:$0xff]
        %v1761 = vld [vmem:[%s1557 + $0xa8] sm:$0xff]
        %v1762 = vld [vmem:[%s1557 + $0xb0] sm:$0xff]
        %v1763 = vld [vmem:[%s1557 + $0xc8] sm:$0xff]
        %v1764 = vld [vmem:[%s1557 + $0xd0] sm:$0xff]
        %v1765 = vld [vmem:[%s1557 + $0xe8] sm:$0xff]
        %v1766 = vld [vmem:[%s1557 + $0xf0] sm:$0xff]
        %v1767 = vld [vmem:[%s1557 + $0x108] sm:$0xff]
        %v1768 = vld [vmem:[%s1557 + $0x110] sm:$0xff]
        %v1769 = vld [vmem:[%s1557 + $0x128] sm:$0xff]
        %v1770 = vld [vmem:[%s1557 + $0x130] sm:$0xff]
        %v1771 = vld [vmem:[%s1557 + $0x148] sm:$0xff]
        %v1772 = vld [vmem:[%s1557 + $0x150] sm:$0xff]
        %v1773 = vld [vmem:[%s1557 + $0x168] sm:$0xff]
        %v1774 = vld [vmem:[%s1557 + $0x170] sm:$0xff]
        %v1775 = vld [vmem:[%s1557 + $0x188] sm:$0xff]
        %v1776 = vld [vmem:[%s1557 + $0x190] sm:$0xff]
        %v1777 = vld [vmem:[%s1557 + $0x1a8] sm:$0xff]
        %v1778 = vld [vmem:[%s1557 + $0x1b0] sm:$0xff]
        %v1779 = vld [vmem:[%s1557 + $0x1c8] sm:$0xff]
        %v1780 = vld [vmem:[%s1557 + $0x1d0] sm:$0xff]
        %v1781 = vld [vmem:[%s1557 + $0x1e8] sm:$0xff]
        %v1782 = vld [vmem:[%s1557 + $0x1f0] sm:$0xff]
        %v1783 = vld [vmem:[#allocation3 + $0x380] sm:$0xff]
        %v1784 = vld [vmem:[#allocation3 + $0x388] sm:$0xff]
        %v1785 = vld [vmem:[#allocation3 + $0x390] sm:$0xff]
        %v1786 = vld [vmem:[#allocation3 + $0x398] sm:$0xff]
        %v1787 = vld [vmem:[#allocation3 + $0x3a0] sm:$0xff]
        %v1788 = vld [vmem:[#allocation3 + $0x3a8] sm:$0xff]
        %v1789 = vld [vmem:[#allocation3 + $0x3b0] sm:$0xff]
        %v1790 = vld [vmem:[#allocation3 + $0x3b8] sm:$0xff]
        %v1791 = vld [vmem:[#allocation3 + $0x3c0] sm:$0xff]
        %v1792 = vld [vmem:[#allocation3 + $0x3c8] sm:$0xff]
        %v1793 = vld [vmem:[#allocation3 + $0x3d0] sm:$0xff]
        %v1794 = vld [vmem:[#allocation3 + $0x3d8] sm:$0xff]
        %v1795 = vld [vmem:[#allocation3 + $0x3e0] sm:$0xff]
        %v1796 = vld [vmem:[#allocation3 + $0x3e8] sm:$0xff]
        %v1797 = vld [vmem:[#allocation3 + $0x3f0] sm:$0xff]
        %v1798 = vld [vmem:[#allocation3 + $0x3f8] sm:$0xff]
        %1799 = vmatpush.msra.mxu0 %v1798
        %1800 = vmatpush.msra.mxu0 %v1797
        %1801 = vmatpush.msra.mxu0 %v1796
        %1802 = vmatpush.msra.mxu0 %v1795
        %1803 = vmatpush.msra.mxu0 %v1794
        %1804 = vmatpush.msra.mxu0 %v1793
        %1805 = vmatpush.msra.mxu0 %v1792
        %1806 = vmatpush.msra.mxu0 %v1791
        %1807 = vmatpush.msra.mxu0 %v1790
        %1808 = vmatpush.msra.mxu0 %v1789
        %1809 = vmatpush.msra.mxu0 %v1788
        %1810 = vmatpush.msra.mxu0 %v1787
        %1811 = vmatpush.msra.mxu0 %v1786
        %1812 = vmatpush.msra.mxu0 %v1785
        %1813 = vmatpush.msra.mxu0 %v1784
        %1814 = vmatpush.msra.mxu0 %v1783
        %1815 = vmatmul.f32.gmra.mxu0 %v1751
        %v1816 = vpop.f32.mrf.mxu0
        %v1817 = vadd.f32 0.0, %v1816
        %1818 = vmatmul.f32.gmra.mxu0 %v1752
        %v1819 = vpop.f32.mrf.mxu0
        %v1820 = vadd.f32 0.0, %v1819
        %1821 = vmatmul.f32.gmra.mxu0 %v1753
        %v1822 = vpop.f32.mrf.mxu0
        %v1823 = vadd.f32 0.0, %v1822
        %1824 = vmatmul.f32.gmra.mxu0 %v1754
        %v1825 = vpop.f32.mrf.mxu0
        %v1826 = vadd.f32 0.0, %v1825
        %1827 = vmatmul.f32.gmra.mxu0 %v1755
        %v1828 = vpop.f32.mrf.mxu0
        %v1829 = vadd.f32 0.0, %v1828
        %1830 = vmatmul.f32.gmra.mxu0 %v1756
        %v1831 = vpop.f32.mrf.mxu0
        %v1832 = vadd.f32 0.0, %v1831
        %1833 = vmatmul.f32.gmra.mxu0 %v1757
        %v1834 = vpop.f32.mrf.mxu0
        %v1835 = vadd.f32 0.0, %v1834
        %1836 = vmatmul.f32.gmra.mxu0 %v1758
        %v1837 = vpop.f32.mrf.mxu0
        %v1838 = vadd.f32 0.0, %v1837
        %1839 = vmatmul.f32.gmra.mxu0 %v1759
        %v1840 = vpop.f32.mrf.mxu0
        %v1841 = vadd.f32 0.0, %v1840
        %1842 = vmatmul.f32.gmra.mxu0 %v1760
        %v1843 = vpop.f32.mrf.mxu0
        %v1844 = vadd.f32 0.0, %v1843
        %1845 = vmatmul.f32.gmra.mxu0 %v1761
        %v1846 = vpop.f32.mrf.mxu0
        %v1847 = vadd.f32 0.0, %v1846
        %1848 = vmatmul.f32.gmra.mxu0 %v1762
        %v1849 = vpop.f32.mrf.mxu0
        %v1850 = vadd.f32 0.0, %v1849
        %1851 = vmatmul.f32.gmra.mxu0 %v1763
        %v1852 = vpop.f32.mrf.mxu0
        %v1853 = vadd.f32 0.0, %v1852
        %1854 = vmatmul.f32.gmra.mxu0 %v1764
        %v1855 = vpop.f32.mrf.mxu0
        %v1856 = vadd.f32 0.0, %v1855
        %1857 = vmatmul.f32.gmra.mxu0 %v1765
        %v1858 = vpop.f32.mrf.mxu0
        %v1859 = vadd.f32 0.0, %v1858
        %1860 = vmatmul.f32.gmra.mxu0 %v1766
        %v1861 = vpop.f32.mrf.mxu0
        %v1862 = vadd.f32 0.0, %v1861
        %1863 = vmatmul.f32.gmra.mxu0 %v1767
        %v1864 = vpop.f32.mrf.mxu0
        %v1865 = vadd.f32 0.0, %v1864
        %1866 = vmatmul.f32.gmra.mxu0 %v1768
        %v1867 = vpop.f32.mrf.mxu0
        %v1868 = vadd.f32 0.0, %v1867
        %1869 = vmatmul.f32.gmra.mxu0 %v1769
        %v1870 = vpop.f32.mrf.mxu0
        %v1871 = vadd.f32 0.0, %v1870
        %1872 = vmatmul.f32.gmra.mxu0 %v1770
        %v1873 = vpop.f32.mrf.mxu0
        %v1874 = vadd.f32 0.0, %v1873
        %1875 = vmatmul.f32.gmra.mxu0 %v1771
        %v1876 = vpop.f32.mrf.mxu0
        %v1877 = vadd.f32 0.0, %v1876
        %1878 = vmatmul.f32.gmra.mxu0 %v1772
        %v1879 = vpop.f32.mrf.mxu0
        %v1880 = vadd.f32 0.0, %v1879
        %1881 = vmatmul.f32.gmra.mxu0 %v1773
        %v1882 = vpop.f32.mrf.mxu0
        %v1883 = vadd.f32 0.0, %v1882
        %1884 = vmatmul.f32.gmra.mxu0 %v1774
        %v1885 = vpop.f32.mrf.mxu0
        %v1886 = vadd.f32 0.0, %v1885
        %1887 = vmatmul.f32.gmra.mxu0 %v1775
        %v1888 = vpop.f32.mrf.mxu0
        %v1889 = vadd.f32 0.0, %v1888
        %1890 = vmatmul.f32.gmra.mxu0 %v1776
        %v1891 = vpop.f32.mrf.mxu0
        %v1892 = vadd.f32 0.0, %v1891
        %1893 = vmatmul.f32.gmra.mxu0 %v1777
        %v1894 = vpop.f32.mrf.mxu0
        %v1895 = vadd.f32 0.0, %v1894
        %1896 = vmatmul.f32.gmra.mxu0 %v1778
        %v1897 = vpop.f32.mrf.mxu0
        %v1898 = vadd.f32 0.0, %v1897
        %1899 = vmatmul.f32.gmra.mxu0 %v1779
        %v1900 = vpop.f32.mrf.mxu0
        %v1901 = vadd.f32 0.0, %v1900
        %1902 = vmatmul.f32.gmra.mxu0 %v1780
        %v1903 = vpop.f32.mrf.mxu0
        %v1904 = vadd.f32 0.0, %v1903
        %1905 = vmatmul.f32.gmra.mxu0 %v1781
        %v1906 = vpop.f32.mrf.mxu0
        %v1907 = vadd.f32 0.0, %v1906
        %1908 = vmatmul.f32.gmra.mxu0 %v1782
        %v1909 = vpop.f32.mrf.mxu0
        %v1910 = vadd.f32 0.0, %v1909
        %1911 = vdwg.mxu0
        %v1912 = vadd.f32 %v1719, %v1817
        %v1913 = vadd.f32 %v1720, %v1820
        %v1914 = vadd.f32 %v1721, %v1823
        %v1915 = vadd.f32 %v1722, %v1826
        %v1916 = vadd.f32 %v1723, %v1829
        %v1917 = vadd.f32 %v1724, %v1832
        %v1918 = vadd.f32 %v1725, %v1835
        %v1919 = vadd.f32 %v1726, %v1838
        %v1920 = vadd.f32 %v1727, %v1841
        %v1921 = vadd.f32 %v1728, %v1844
        %v1922 = vadd.f32 %v1729, %v1847
        %v1923 = vadd.f32 %v1730, %v1850
        %v1924 = vadd.f32 %v1731, %v1853
        %v1925 = vadd.f32 %v1732, %v1856
        %v1926 = vadd.f32 %v1733, %v1859
        %v1927 = vadd.f32 %v1734, %v1862
        %v1928 = vadd.f32 %v1735, %v1865
        %v1929 = vadd.f32 %v1736, %v1868
        %v1930 = vadd.f32 %v1737, %v1871
        %v1931 = vadd.f32 %v1738, %v1874
        %v1932 = vadd.f32 %v1739, %v1877
        %v1933 = vadd.f32 %v1740, %v1880
        %v1934 = vadd.f32 %v1741, %v1883
        %v1935 = vadd.f32 %v1742, %v1886
        %v1936 = vadd.f32 %v1743, %v1889
        %v1937 = vadd.f32 %v1744, %v1892
        %v1938 = vadd.f32 %v1745, %v1895
        %v1939 = vadd.f32 %v1746, %v1898
        %v1940 = vadd.f32 %v1747, %v1901
        %v1941 = vadd.f32 %v1748, %v1904
        %v1942 = vadd.f32 %v1749, %v1907
        %v1943 = vadd.f32 %v1750, %v1910
        %v1944 = vld [vmem:[%s1557 + $0x9] sm:$0xff]
        %v1945 = vld [vmem:[%s1557 + $0x11] sm:$0xff]
        %v1946 = vld [vmem:[%s1557 + $0x29] sm:$0xff]
        %v1947 = vld [vmem:[%s1557 + $0x31] sm:$0xff]
        %v1948 = vld [vmem:[%s1557 + $0x49] sm:$0xff]
        %v1949 = vld [vmem:[%s1557 + $0x51] sm:$0xff]
        %v1950 = vld [vmem:[%s1557 + $0x69] sm:$0xff]
        %v1951 = vld [vmem:[%s1557 + $0x71] sm:$0xff]
        %v1952 = vld [vmem:[%s1557 + $0x89] sm:$0xff]
        %v1953 = vld [vmem:[%s1557 + $0x91] sm:$0xff]
        %v1954 = vld [vmem:[%s1557 + $0xa9] sm:$0xff]
        %v1955 = vld [vmem:[%s1557 + $0xb1] sm:$0xff]
        %v1956 = vld [vmem:[%s1557 + $0xc9] sm:$0xff]
        %v1957 = vld [vmem:[%s1557 + $0xd1] sm:$0xff]
        %v1958 = vld [vmem:[%s1557 + $0xe9] sm:$0xff]
        %v1959 = vld [vmem:[%s1557 + $0xf1] sm:$0xff]
        %v1960 = vld [vmem:[%s1557 + $0x109] sm:$0xff]
        %v1961 = vld [vmem:[%s1557 + $0x111] sm:$0xff]
        %v1962 = vld [vmem:[%s1557 + $0x129] sm:$0xff]
        %v1963 = vld [vmem:[%s1557 + $0x131] sm:$0xff]
        %v1964 = vld [vmem:[%s1557 + $0x149] sm:$0xff]
        %v1965 = vld [vmem:[%s1557 + $0x151] sm:$0xff]
        %v1966 = vld [vmem:[%s1557 + $0x169] sm:$0xff]
        %v1967 = vld [vmem:[%s1557 + $0x171] sm:$0xff]
        %v1968 = vld [vmem:[%s1557 + $0x189] sm:$0xff]
        %v1969 = vld [vmem:[%s1557 + $0x191] sm:$0xff]
        %v1970 = vld [vmem:[%s1557 + $0x1a9] sm:$0xff]
        %v1971 = vld [vmem:[%s1557 + $0x1b1] sm:$0xff]
        %v1972 = vld [vmem:[%s1557 + $0x1c9] sm:$0xff]
        %v1973 = vld [vmem:[%s1557 + $0x1d1] sm:$0xff]
        %v1974 = vld [vmem:[%s1557 + $0x1e9] sm:$0xff]
        %v1975 = vld [vmem:[%s1557 + $0x1f1] sm:$0xff]
        %v1976 = vld [vmem:[#allocation3 + $0x400] sm:$0xff]
        %v1977 = vld [vmem:[#allocation3 + $0x408] sm:$0xff]
        %v1978 = vld [vmem:[#allocation3 + $0x410] sm:$0xff]
        %v1979 = vld [vmem:[#allocation3 + $0x418] sm:$0xff]
        %v1980 = vld [vmem:[#allocation3 + $0x420] sm:$0xff]
        %v1981 = vld [vmem:[#allocation3 + $0x428] sm:$0xff]
        %v1982 = vld [vmem:[#allocation3 + $0x430] sm:$0xff]
        %v1983 = vld [vmem:[#allocation3 + $0x438] sm:$0xff]
        %v1984 = vld [vmem:[#allocation3 + $0x440] sm:$0xff]
        %v1985 = vld [vmem:[#allocation3 + $0x448] sm:$0xff]
        %v1986 = vld [vmem:[#allocation3 + $0x450] sm:$0xff]
        %v1987 = vld [vmem:[#allocation3 + $0x458] sm:$0xff]
        %v1988 = vld [vmem:[#allocation3 + $0x460] sm:$0xff]
        %v1989 = vld [vmem:[#allocation3 + $0x468] sm:$0xff]
        %v1990 = vld [vmem:[#allocation3 + $0x470] sm:$0xff]
        %v1991 = vld [vmem:[#allocation3 + $0x478] sm:$0xff]
        %1992 = vmatpush.msra.mxu0 %v1991
        %1993 = vmatpush.msra.mxu0 %v1990
        %1994 = vmatpush.msra.mxu0 %v1989
        %1995 = vmatpush.msra.mxu0 %v1988
        %1996 = vmatpush.msra.mxu0 %v1987
        %1997 = vmatpush.msra.mxu0 %v1986
        %1998 = vmatpush.msra.mxu0 %v1985
        %1999 = vmatpush.msra.mxu0 %v1984
        %2000 = vmatpush.msra.mxu0 %v1983
        %2001 = vmatpush.msra.mxu0 %v1982
        %2002 = vmatpush.msra.mxu0 %v1981
        %2003 = vmatpush.msra.mxu0 %v1980
        %2004 = vmatpush.msra.mxu0 %v1979
        %2005 = vmatpush.msra.mxu0 %v1978
        %2006 = vmatpush.msra.mxu0 %v1977
        %2007 = vmatpush.msra.mxu0 %v1976
        %2008 = vmatmul.f32.gmra.mxu0 %v1944
        %v2009 = vpop.f32.mrf.mxu0
        %v2010 = vadd.f32 0.0, %v2009
        %2011 = vmatmul.f32.gmra.mxu0 %v1945
        %v2012 = vpop.f32.mrf.mxu0
        %v2013 = vadd.f32 0.0, %v2012
        %2014 = vmatmul.f32.gmra.mxu0 %v1946
        %v2015 = vpop.f32.mrf.mxu0
        %v2016 = vadd.f32 0.0, %v2015
        %2017 = vmatmul.f32.gmra.mxu0 %v1947
        %v2018 = vpop.f32.mrf.mxu0
        %v2019 = vadd.f32 0.0, %v2018
        %2020 = vmatmul.f32.gmra.mxu0 %v1948
        %v2021 = vpop.f32.mrf.mxu0
        %v2022 = vadd.f32 0.0, %v2021
        %2023 = vmatmul.f32.gmra.mxu0 %v1949
        %v2024 = vpop.f32.mrf.mxu0
        %v2025 = vadd.f32 0.0, %v2024
        %2026 = vmatmul.f32.gmra.mxu0 %v1950
        %v2027 = vpop.f32.mrf.mxu0
        %v2028 = vadd.f32 0.0, %v2027
        %2029 = vmatmul.f32.gmra.mxu0 %v1951
        %v2030 = vpop.f32.mrf.mxu0
        %v2031 = vadd.f32 0.0, %v2030
        %2032 = vmatmul.f32.gmra.mxu0 %v1952
        %v2033 = vpop.f32.mrf.mxu0
        %v2034 = vadd.f32 0.0, %v2033
        %2035 = vmatmul.f32.gmra.mxu0 %v1953
        %v2036 = vpop.f32.mrf.mxu0
        %v2037 = vadd.f32 0.0, %v2036
        %2038 = vmatmul.f32.gmra.mxu0 %v1954
        %v2039 = vpop.f32.mrf.mxu0
        %v2040 = vadd.f32 0.0, %v2039
        %2041 = vmatmul.f32.gmra.mxu0 %v1955
        %v2042 = vpop.f32.mrf.mxu0
        %v2043 = vadd.f32 0.0, %v2042
        %2044 = vmatmul.f32.gmra.mxu0 %v1956
        %v2045 = vpop.f32.mrf.mxu0
        %v2046 = vadd.f32 0.0, %v2045
        %2047 = vmatmul.f32.gmra.mxu0 %v1957
        %v2048 = vpop.f32.mrf.mxu0
        %v2049 = vadd.f32 0.0, %v2048
        %2050 = vmatmul.f32.gmra.mxu0 %v1958
        %v2051 = vpop.f32.mrf.mxu0
        %v2052 = vadd.f32 0.0, %v2051
        %2053 = vmatmul.f32.gmra.mxu0 %v1959
        %v2054 = vpop.f32.mrf.mxu0
        %v2055 = vadd.f32 0.0, %v2054
        %2056 = vmatmul.f32.gmra.mxu0 %v1960
        %v2057 = vpop.f32.mrf.mxu0
        %v2058 = vadd.f32 0.0, %v2057
        %2059 = vmatmul.f32.gmra.mxu0 %v1961
        %v2060 = vpop.f32.mrf.mxu0
        %v2061 = vadd.f32 0.0, %v2060
        %2062 = vmatmul.f32.gmra.mxu0 %v1962
        %v2063 = vpop.f32.mrf.mxu0
        %v2064 = vadd.f32 0.0, %v2063
        %2065 = vmatmul.f32.gmra.mxu0 %v1963
        %v2066 = vpop.f32.mrf.mxu0
        %v2067 = vadd.f32 0.0, %v2066
        %2068 = vmatmul.f32.gmra.mxu0 %v1964
        %v2069 = vpop.f32.mrf.mxu0
        %v2070 = vadd.f32 0.0, %v2069
        %2071 = vmatmul.f32.gmra.mxu0 %v1965
        %v2072 = vpop.f32.mrf.mxu0
        %v2073 = vadd.f32 0.0, %v2072
        %2074 = vmatmul.f32.gmra.mxu0 %v1966
        %v2075 = vpop.f32.mrf.mxu0
        %v2076 = vadd.f32 0.0, %v2075
        %2077 = vmatmul.f32.gmra.mxu0 %v1967
        %v2078 = vpop.f32.mrf.mxu0
        %v2079 = vadd.f32 0.0, %v2078
        %2080 = vmatmul.f32.gmra.mxu0 %v1968
        %v2081 = vpop.f32.mrf.mxu0
        %v2082 = vadd.f32 0.0, %v2081
        %2083 = vmatmul.f32.gmra.mxu0 %v1969
        %v2084 = vpop.f32.mrf.mxu0
        %v2085 = vadd.f32 0.0, %v2084
        %2086 = vmatmul.f32.gmra.mxu0 %v1970
        %v2087 = vpop.f32.mrf.mxu0
        %v2088 = vadd.f32 0.0, %v2087
        %2089 = vmatmul.f32.gmra.mxu0 %v1971
        %v2090 = vpop.f32.mrf.mxu0
        %v2091 = vadd.f32 0.0, %v2090
        %2092 = vmatmul.f32.gmra.mxu0 %v1972
        %v2093 = vpop.f32.mrf.mxu0
        %v2094 = vadd.f32 0.0, %v2093
        %2095 = vmatmul.f32.gmra.mxu0 %v1973
        %v2096 = vpop.f32.mrf.mxu0
        %v2097 = vadd.f32 0.0, %v2096
        %2098 = vmatmul.f32.gmra.mxu0 %v1974
        %v2099 = vpop.f32.mrf.mxu0
        %v2100 = vadd.f32 0.0, %v2099
        %2101 = vmatmul.f32.gmra.mxu0 %v1975
        %v2102 = vpop.f32.mrf.mxu0
        %v2103 = vadd.f32 0.0, %v2102
        %2104 = vdwg.mxu0
        %v2105 = vadd.f32 %v1912, %v2010
        %v2106 = vadd.f32 %v1913, %v2013
        %v2107 = vadd.f32 %v1914, %v2016
        %v2108 = vadd.f32 %v1915, %v2019
        %v2109 = vadd.f32 %v1916, %v2022
        %v2110 = vadd.f32 %v1917, %v2025
        %v2111 = vadd.f32 %v1918, %v2028
        %v2112 = vadd.f32 %v1919, %v2031
        %v2113 = vadd.f32 %v1920, %v2034
        %v2114 = vadd.f32 %v1921, %v2037
        %v2115 = vadd.f32 %v1922, %v2040
        %v2116 = vadd.f32 %v1923, %v2043
        %v2117 = vadd.f32 %v1924, %v2046
        %v2118 = vadd.f32 %v1925, %v2049
        %v2119 = vadd.f32 %v1926, %v2052
        %v2120 = vadd.f32 %v1927, %v2055
        %v2121 = vadd.f32 %v1928, %v2058
        %v2122 = vadd.f32 %v1929, %v2061
        %v2123 = vadd.f32 %v1930, %v2064
        %v2124 = vadd.f32 %v1931, %v2067
        %v2125 = vadd.f32 %v1932, %v2070
        %v2126 = vadd.f32 %v1933, %v2073
        %v2127 = vadd.f32 %v1934, %v2076
        %v2128 = vadd.f32 %v1935, %v2079
        %v2129 = vadd.f32 %v1936, %v2082
        %v2130 = vadd.f32 %v1937, %v2085
        %v2131 = vadd.f32 %v1938, %v2088
        %v2132 = vadd.f32 %v1939, %v2091
        %v2133 = vadd.f32 %v1940, %v2094
        %v2134 = vadd.f32 %v1941, %v2097
        %v2135 = vadd.f32 %v1942, %v2100
        %v2136 = vadd.f32 %v1943, %v2103
        %2137 = vmatpush.msra.mxu0 %v2120
        %2138 = vmatpush.msra.mxu0 %v2119
        %2139 = vmatpush.msra.mxu0 %v2118
        %2140 = vmatpush.msra.mxu0 %v2117
        %2141 = vmatpush.msra.mxu0 %v2116
        %2142 = vmatpush.msra.mxu0 %v2115
        %2143 = vmatpush.msra.mxu0 %v2114
        %2144 = vmatpush.msra.mxu0 %v2113
        %2145 = vmatpush.msra.mxu0 %v2112
        %2146 = vmatpush.msra.mxu0 %v2111
        %2147 = vmatpush.msra.mxu0 %v2110
        %2148 = vmatpush.msra.mxu0 %v2109
        %2149 = vmatpush.msra.mxu0 %v2108
        %2150 = vmatpush.msra.mxu0 %v2107
        %2151 = vmatpush.msra.mxu0 %v2106
        %2152 = vmatpush.msra.mxu0 %v2105
        %2153 = vmatmul.f32.gmra.mxu0 1.0
        %v2154 = vpop.f32.mrf.mxu0
        %v2155 = vadd.f32 0.0, %v2154
        %2156 = vdwg.mxu0
        %2157 = vmatpush.msra.mxu0 %v2136
        %2158 = vmatpush.msra.mxu0 %v2135
        %2159 = vmatpush.msra.mxu0 %v2134
        %2160 = vmatpush.msra.mxu0 %v2133
        %2161 = vmatpush.msra.mxu0 %v2132
        %2162 = vmatpush.msra.mxu0 %v2131
        %2163 = vmatpush.msra.mxu0 %v2130
        %2164 = vmatpush.msra.mxu0 %v2129
        %2165 = vmatpush.msra.mxu0 %v2128
        %2166 = vmatpush.msra.mxu0 %v2127
        %2167 = vmatpush.msra.mxu0 %v2126
        %2168 = vmatpush.msra.mxu0 %v2125
        %2169 = vmatpush.msra.mxu0 %v2124
        %2170 = vmatpush.msra.mxu0 %v2123
        %2171 = vmatpush.msra.mxu0 %v2122
        %2172 = vmatpush.msra.mxu0 %v2121
        %2173 = vmatmul.f32.gmra.mxu0 1.0
        %v2174 = vpop.f32.mrf.mxu0
        %v2175 = vadd.f32 %v2155, %v2174
        %2176 = vdwg.mxu0
        %2177 = vst [vmem:[%s252] sm:$0x1] %v2175
        %v2178 = vmul.f32 %v2105, %v2105
        %v2179 = vmul.f32 %v2106, %v2106
        %v2180 = vmul.f32 %v2107, %v2107
        %v2181 = vmul.f32 %v2108, %v2108
        %v2182 = vmul.f32 %v2109, %v2109
        %v2183 = vmul.f32 %v2110, %v2110
        %v2184 = vmul.f32 %v2111, %v2111
        %v2185 = vmul.f32 %v2112, %v2112
        %v2186 = vmul.f32 %v2113, %v2113
        %v2187 = vmul.f32 %v2114, %v2114
        %v2188 = vmul.f32 %v2115, %v2115
        %v2189 = vmul.f32 %v2116, %v2116
        %v2190 = vmul.f32 %v2117, %v2117
        %v2191 = vmul.f32 %v2118, %v2118
        %v2192 = vmul.f32 %v2119, %v2119
        %v2193 = vmul.f32 %v2120, %v2120
        %v2194 = vmul.f32 %v2121, %v2121
        %v2195 = vmul.f32 %v2122, %v2122
        %v2196 = vmul.f32 %v2123, %v2123
        %v2197 = vmul.f32 %v2124, %v2124
        %v2198 = vmul.f32 %v2125, %v2125
        %v2199 = vmul.f32 %v2126, %v2126
        %v2200 = vmul.f32 %v2127, %v2127
        %v2201 = vmul.f32 %v2128, %v2128
        %v2202 = vmul.f32 %v2129, %v2129
        %v2203 = vmul.f32 %v2130, %v2130
        %v2204 = vmul.f32 %v2131, %v2131
        %v2205 = vmul.f32 %v2132, %v2132
        %v2206 = vmul.f32 %v2133, %v2133
        %v2207 = vmul.f32 %v2134, %v2134
        %v2208 = vmul.f32 %v2135, %v2135
        %v2209 = vmul.f32 %v2136, %v2136
        %2210 = vmatpush.msra.mxu0 %v2193
        %2211 = vmatpush.msra.mxu0 %v2192
        %2212 = vmatpush.msra.mxu0 %v2191
        %2213 = vmatpush.msra.mxu0 %v2190
        %2214 = vmatpush.msra.mxu0 %v2189
        %2215 = vmatpush.msra.mxu0 %v2188
        %2216 = vmatpush.msra.mxu0 %v2187
        %2217 = vmatpush.msra.mxu0 %v2186
        %2218 = vmatpush.msra.mxu0 %v2185
        %2219 = vmatpush.msra.mxu0 %v2184
        %2220 = vmatpush.msra.mxu0 %v2183
        %2221 = vmatpush.msra.mxu0 %v2182
        %2222 = vmatpush.msra.mxu0 %v2181
        %2223 = vmatpush.msra.mxu0 %v2180
        %2224 = vmatpush.msra.mxu0 %v2179
        %2225 = vmatpush.msra.mxu0 %v2178
        %2226 = vmatmul.f32.gmra.mxu0 1.0
        %v2227 = vpop.f32.mrf.mxu0
        %v2228 = vadd.f32 0.0, %v2227
        %2229 = vdwg.mxu0
        %2230 = vmatpush.msra.mxu0 %v2209
        %2231 = vmatpush.msra.mxu0 %v2208
        %2232 = vmatpush.msra.mxu0 %v2207
        %2233 = vmatpush.msra.mxu0 %v2206
        %2234 = vmatpush.msra.mxu0 %v2205
        %2235 = vmatpush.msra.mxu0 %v2204
        %2236 = vmatpush.msra.mxu0 %v2203
        %2237 = vmatpush.msra.mxu0 %v2202
        %2238 = vmatpush.msra.mxu0 %v2201
        %2239 = vmatpush.msra.mxu0 %v2200
        %2240 = vmatpush.msra.mxu0 %v2199
        %2241 = vmatpush.msra.mxu0 %v2198
        %2242 = vmatpush.msra.mxu0 %v2197
        %2243 = vmatpush.msra.mxu0 %v2196
        %2244 = vmatpush.msra.mxu0 %v2195
        %2245 = vmatpush.msra.mxu0 %v2194
        %2246 = vmatmul.f32.gmra.mxu0 1.0
        %v2247 = vpop.f32.mrf.mxu0
        %v2248 = vadd.f32 %v2228, %v2247
        %2249 = vdwg.mxu0
        %2250 = vst [vmem:[%s252 + $0x1] sm:$0x1] %v2248
        %2251 = vst [vmem:[%s248] sm:$0xff] %v2105
        %2252 = vst [vmem:[%s248 + $0x8] sm:$0xff] %v2106
        %2253 = vst [vmem:[%s248 + $0x10] sm:$0xff] %v2107
        %2254 = vst [vmem:[%s248 + $0x18] sm:$0xff] %v2108
        %2255 = vst [vmem:[%s248 + $0x20] sm:$0xff] %v2109
        %2256 = vst [vmem:[%s248 + $0x28] sm:$0xff] %v2110
        %2257 = vst [vmem:[%s248 + $0x30] sm:$0xff] %v2111
        %2258 = vst [vmem:[%s248 + $0x38] sm:$0xff] %v2112
        %2259 = vst [vmem:[%s248 + $0x40] sm:$0xff] %v2113
        %2260 = vst [vmem:[%s248 + $0x48] sm:$0xff] %v2114
        %2261 = vst [vmem:[%s248 + $0x50] sm:$0xff] %v2115
        %2262 = vst [vmem:[%s248 + $0x58] sm:$0xff] %v2116
        %2263 = vst [vmem:[%s248 + $0x60] sm:$0xff] %v2117
        %2264 = vst [vmem:[%s248 + $0x68] sm:$0xff] %v2118
        %2265 = vst [vmem:[%s248 + $0x70] sm:$0xff] %v2119
        %2266 = vst [vmem:[%s248 + $0x78] sm:$0xff] %v2120
        %2267 = vst [vmem:[%s248 + $0x80] sm:$0xff] %v2121
        %2268 = vst [vmem:[%s248 + $0x88] sm:$0xff] %v2122
        %2269 = vst [vmem:[%s248 + $0x90] sm:$0xff] %v2123
        %2270 = vst [vmem:[%s248 + $0x98] sm:$0xff] %v2124
        %2271 = vst [vmem:[%s248 + $0xa0] sm:$0xff] %v2125
        %2272 = vst [vmem:[%s248 + $0xa8] sm:$0xff] %v2126
        %2273 = vst [vmem:[%s248 + $0xb0] sm:$0xff] %v2127
        %2274 = vst [vmem:[%s248 + $0xb8] sm:$0xff] %v2128
        %2275 = vst [vmem:[%s248 + $0xc0] sm:$0xff] %v2129
        %2276 = vst [vmem:[%s248 + $0xc8] sm:$0xff] %v2130
        %2277 = vst [vmem:[%s248 + $0xd0] sm:$0xff] %v2131
        %2278 = vst [vmem:[%s248 + $0xd8] sm:$0xff] %v2132
        %2279 = vst [vmem:[%s248 + $0xe0] sm:$0xff] %v2133
        %2280 = vst [vmem:[%s248 + $0xe8] sm:$0xff] %v2134
        %2281 = vst [vmem:[%s248 + $0xf0] sm:$0xff] %v2135
        %2282 = vst [vmem:[%s248 + $0xf8] sm:$0xff] %v2136
        %p2283 = scmp.lt.s32.totalorder %s18, 1
        %s2284 = scalar_select %p2283, %s18, 1
        %s2285 = smul.addr %s2284, 32
        %s2286 = smul.addr %s2285, 8
        %s2287 = scalar_lea.vmem %s4, %s2286
        %p2288 = scmp.lt.s32.totalorder %s18, 1
        %s2289 = scalar_select %p2288, %s18, 1
        %s2290 = smul.addr %s2289, 2
        %s2291 = scalar_lea.vmem %s5, %s2290
        // Predicated region
        $region41: #{residual_forward.4} parent=35 // pred_check
          %p2292 = pneg %p125
        $region42: #{residual_forward.4} parent=35 // pred_check_branch
          %2294 = sbr.rel (%p2292) target = $region44
        $region43: #{residual_forward.4} parent=35 // pred_region
          _
        $region44: #{residual_forward.4} parent=35 // pred_fallthru
          _
        // Predicated region
        $region45: #{residual_forward.4} parent=35 // pred_check
          %p2295 = pneg %p151
        $region46: #{residual_forward.4} parent=35 // pred_check_branch
          %2297 = sbr.rel (%p2295) target = $region48
        $region47: #{residual_forward.4} parent=35 // pred_region
          _
        $region48: #{residual_forward.4} parent=35 // pred_fallthru
          _
      $region36: #{residual_forward.4} parent=5 // pred_fallthru
        _
      %p2298 = scmp.le.s32.totalorder 2, %s13
      // Predicated region
      $region49: #{residual_forward.4} parent=5 // pred_check
        %p2299 = pneg %p2298
      $region50: #{residual_forward.4} parent=5 // pred_check_branch
        %2301 = sbr.rel (%p2299) target = $region52
      $region51: #{residual_forward.4} parent=5 // pred_region
        %s2302 = ssub.s32 %s13, 2
        // Predicated region
        $region53: #{residual_forward.4} parent=51 // pred_check
          %p2303 = pneg %p131
        $region54: #{residual_forward.4} parent=51 // pred_check_branch
          %2305 = sbr.rel (%p2303) target = $region56
        $region55: #{residual_forward.4} parent=51 // pred_region
          %p2306 = scmp.lt.s32.totalorder %s19, 1
          %s2307 = scalar_select %p2306, %s19, 1
          %s2308 = smul.addr %s2307, 32
          %s2309 = smul.addr %s2308, 8
          %s2310 = scalar_lea.vmem %s4, %s2309
        $region56: #{residual_forward.4} parent=51 // pred_fallthru
          _
        // Predicated region
        $region57: #{residual_forward.4} parent=51 // pred_check
          %p2311 = pneg %p157
        $region58: #{residual_forward.4} parent=51 // pred_check_branch
          %2313 = sbr.rel (%p2311) target = $region60
        $region59: #{residual_forward.4} parent=51 // pred_region
          %p2314 = scmp.lt.s32.totalorder %s19, 1
          %s2315 = scalar_select %p2314, %s19, 1
          %s2316 = smul.addr %s2315, 2
          %s2317 = scalar_lea.vmem %s5, %s2316
        $region60: #{residual_forward.4} parent=51 // pred_fallthru
          _
      $region52: #{residual_forward.4} parent=5 // pred_fallthru
        _
    $region6: #{residual_forward.4} parent=1 // loop_footer
      %s17 = sadd.s32 1, %s13
    $region7: #{residual_forward.4} parent=1 // loop_footer_branch
      %12 = sbr.rel target = $region3
    $region8: #{residual_forward.4} parent=1 // loop_exit
      _
    %2318 = vsyncpa [#allocation4], 1
    %s2319 = scalar_lea.sflag [#allocation4], 1
    %2320 = vsyncpa %s2319, 1

</llo_original>
